<compile_context>
chip_gen: v7x
topology: tpu7x:2x2x1
jax: 0.10.0
libtpu: 0.0.40
codegen_flags: <defaults>
</compile_context>

<pallas_src>
import jax
import jax.numpy as jnp
from jax import lax
from jax.experimental import pallas as pl
from jax.experimental.pallas import tpu as pltpu


# ----------------------------------------------------------------------------
# Fused kernel: layer0 (bi) -> layer1 (bi) -> attention -> FC, all in VMEM.
# ----------------------------------------------------------------------------
def _fused_kernel(x_ref, xr_ref,
                  wihF0_ref, wihR0_ref, whh0_ref, b0_ref,
                  wihF1_ref, wihR1_ref, whh1_ref, b1_ref,
                  aw1_ref, ab1_ref, aw2_ref, fcw_ref, fcb_ref,
                  out_ref, xg_scr, hA_scr, hB_scr):
    T, B, Din = x_ref.shape          # time-major input
    H2 = hA_scr.shape[2]             # 2H (fwd|rev concatenated hidden)
    G8 = xg_scr.shape[2]             # 8H (4 gates x 2 directions)
    H = H2 // 2
    G = H2                           # per-gate slice width (128 lanes)

    # Lane mask over the 2H hidden axis selecting the reverse-direction half.
    # Only used in bulk (whole-tensor) selects OUTSIDE the serial loops.
    rev_half = lax.broadcasted_iota(jnp.int32, (T, B, H2), 2) >= H

    unroll = True if T <= 16 else 4

    def run_layer(whh_bf16):
        """One fused bidirectional LSTM layer: reads xg_scr (loop order),
        writes hA_scr (loop order) and hB_scr (reversed loop order)."""
        def step(t, carry):
            h, c = carry                                   # (B, 2H) f32 each
            # Single gate-preactivation read per step + bf16 MXU recurrent dot.
            gates = xg_scr[t] + jnp.dot(h.astype(jnp.bfloat16), whh_bf16,
                                        preferred_element_type=jnp.float32)
            i = jax.nn.sigmoid(gates[:, 0 * G:1 * G])      # 128-lane aligned slices
            f = jax.nn.sigmoid(gates[:, 1 * G:2 * G])
            g = jnp.tanh(gates[:, 2 * G:3 * G])
            o = jax.nn.sigmoid(gates[:, 3 * G:4 * G])
            c_new = f * c + i * g
            h_new = o * jnp.tanh(c_new)
            # Two full-lane UNMASKED stores (h_new is one (8,128) vreg); both are
            # off the serial dependency chain.  hA holds loop order, hB holds the
            # reversed loop order -> downstream bulk selects recover proper /
            # reversed time without any in-kernel flip.
            hA_scr[t] = h_new
            hB_scr[T - 1 - t] = h_new
            return (h_new, c_new)

        h0 = jnp.zeros((B, H2), jnp.float32)
        c0 = jnp.zeros((B, H2), jnp.float32)
        lax.fori_loop(0, T, step, (h0, c0), unroll=unroll)

    # ---------------- layer 0: input projection, already in loop order -------
    x = x_ref[...].astype(jnp.float32).reshape(T * B, Din)
    xr = xr_ref[...].astype(jnp.float32).reshape(T * B, Din)
    xg0 = (jnp.dot(x, wihF0_ref[...], preferred_element_type=jnp.float32)
           + jnp.dot(xr, wihR0_ref[...], preferred_element_type=jnp.float32)
           + b0_ref[...])                                             # (T*B, 8H)
    xg_scr[...] = xg0.reshape(T, B, G8)
    run_layer(whh0_ref[...])

    # Proper-time and time-reversed views of layer-0 output (bulk selects):
    #   hA[t] = [hf(t) | hr(T-1-t)],  hB[t] = [hf(T-1-t) | hr(t)]
    hp0 = jnp.where(rev_half, hB_scr[...], hA_scr[...])               # (T,B,2H) proper
    hr0 = jnp.where(rev_half, hA_scr[...], hB_scr[...])               # (T,B,2H) reversed

    # ---------------- layer 1: projection in loop order ----------------------
    xg1 = (jnp.dot(hp0.reshape(T * B, H2), wihF1_ref[...],
                   preferred_element_type=jnp.float32)
           + jnp.dot(hr0.reshape(T * B, H2), wihR1_ref[...],
                     preferred_element_type=jnp.float32)
           + b1_ref[...])                                             # (T*B, 8H)
    xg_scr[...] = xg1.reshape(T, B, G8)
    run_layer(whh1_ref[...])                                          # overwrites hA/hB

    # ---------------- attention + FC head ------------------------------------
    hp1 = jnp.where(rev_half, hB_scr[...], hA_scr[...])               # (T,B,2H) proper
    hid = jnp.tanh(jnp.dot(hp1.reshape(T * B, H2), aw1_ref[...],
                           preferred_element_type=jnp.float32) + ab1_ref[...])
    scores = jnp.sum(hid.reshape(T, B, -1) * aw2_ref[...].reshape(1, 1, -1),
                     axis=-1, keepdims=True)                          # (T, B, 1)
    scores = scores - jnp.max(scores, axis=0, keepdims=True)
    e = jnp.exp(scores)
    attn = e / jnp.sum(e, axis=0, keepdims=True)                      # (T, B, 1)
    context = jnp.sum(attn * hp1, axis=0)                             # (B, 2H)

    # TODO(synk): Dropout(0.3) before the FC head is identity (eval/inference mode).
    out = jnp.dot(context, fcw_ref[...],
                  preferred_element_type=jnp.float32) + fcb_ref[...]  # (B, out_dim)
    out_ref[...] = out.astype(out_ref.dtype)


def _fused_forward(xt, xt_rev, f):
    T, B, _ = xt.shape
    H2, G8 = f["whh0"].shape
    out_dim = f["fcw"].shape[1]
    return pl.pallas_call(
        _fused_kernel,
        out_shape=jax.ShapeDtypeStruct((B, out_dim), jnp.float32),
        in_specs=[pl.BlockSpec(memory_space=pltpu.MemorySpace.VMEM)] * 15,
        out_specs=pl.BlockSpec(memory_space=pltpu.MemorySpace.VMEM),
        scratch_shapes=[
            pltpu.VMEM((T, B, G8), jnp.float32),   # loop-order gate pre-activations
            pltpu.VMEM((T, B, H2), jnp.float32),   # hA: hidden states, loop order
            pltpu.VMEM((T, B, H2), jnp.float32),   # hB: hidden states, reversed order
        ],
        compiler_params=pltpu.CompilerParams(vmem_limit_bytes=32 * 1024 * 1024),
    )(xt, xt_rev,
      f["wihF0"], f["wihR0"], f["whh0"], f["b0"],
      f["wihF1"], f["wihR1"], f["whh1"], f["b1"],
      f["aw1"], f["ab1"], f["aw2"], f["fcw"], f["fcb"])


# ----------------------------------------------------------------------------
# One-time weight re-layout (plain JAX glue, trivially small):
#   interleave fwd/rev gate columns, split W_ih into fwd-only / rev-only column
#   matrices, build the block-diagonal W_hh and cast it to bf16.
# ----------------------------------------------------------------------------
def _interleave_gate_cols(wf, wr):
    # wf, wr: (In, 4H) with PyTorch gate order [i,f,g,o] along columns.
    # -> (In, 8H) with layout [i_f,i_r | f_f,f_r | g_f,g_r | o_f,o_r]
    in_dim, four_h = wf.shape
    H = four_h // 4
    return jnp.concatenate([wf.reshape(in_dim, 4, H),
                            wr.reshape(in_dim, 4, H)], axis=-1).reshape(in_dim, 8 * H)


def _prepare_fused_params(p):
    H = p["whh_l0"].shape[0]
    zh = jnp.zeros((H, 4 * H), jnp.float32)

    def layer(wih_f, whh_f, b_f, wih_r, whh_r, b_r):
        zi = jnp.zeros_like(wih_f)
        wihF = _interleave_gate_cols(wih_f, zi)                       # rev cols zeroed
        wihR = _interleave_gate_cols(zi, wih_r)                       # fwd cols zeroed
        whh = jnp.concatenate([_interleave_gate_cols(whh_f, zh),      # fwd rows -> fwd cols
                               _interleave_gate_cols(zh, whh_r)],     # rev rows -> rev cols
                              axis=0).astype(jnp.bfloat16)            # (2H, 8H) block-diag
        b = _interleave_gate_cols(b_f, b_r)                           # (1, 8H)
        return wihF, wihR, whh, b

    wihF0, wihR0, whh0, b0 = layer(p["wih_l0"], p["whh_l0"], p["b_l0"],
                                   p["wih_l0r"], p["whh_l0r"], p["b_l0r"])
    wihF1, wihR1, whh1, b1 = layer(p["wih_l1"], p["whh_l1"], p["b_l1"],
                                   p["wih_l1r"], p["whh_l1r"], p["b_l1r"])
    return dict(wihF0=wihF0, wihR0=wihR0, whh0=whh0, b0=b0,
                wihF1=wihF1, wihR1=wihR1, whh1=whh1, b1=b1,
                aw1=p["attn_w1"], ab1=p["attn_b1"], aw2=p["attn_w2"].T,  # (1, A)
                fcw=p["fc_w"], fcb=p["fc_b"])


def stock_lstm_attention(x, p):
    """x: (B, T, input_dim) batch-first, matching the PyTorch module."""
    fused = _prepare_fused_params(p)
    xt = jnp.transpose(x, (1, 0, 2))        # time-major
    xt_rev = xt[::-1]                       # time-reversed copy (cheap JAX-level flip)
    return _fused_forward(xt, xt_rev, fused)


# ----------------------------------------------------------------------------
# Pure-JAX reference (same math, original PyTorch-style weight layout, f32).
# ----------------------------------------------------------------------------
def _ref_lstm_layer(x, wih, whh, b):
    B, T, _ = x.shape
    H = whh.shape[0]

    def step(carry, xt):
        h, c = carry
        g = xt @ wih + h @ whh + b[0]
        i = jax.nn.sigmoid(g[:, :H])
        f = jax.nn.sigmoid(g[:, H:2 * H])
        gg = jnp.tanh(g[:, 2 * H:3 * H])
        o = jax.nn.sigmoid(g[:, 3 * H:])
        c = f * c + i * gg
        h = o * jnp.tanh(c)
        return (h, c), h

    xs = jnp.swapaxes(x, 0, 1)
    _, hs = lax.scan(step, (jnp.zeros((B, H)), jnp.zeros((B, H))), xs)
    return jnp.swapaxes(hs, 0, 1)


def _ref_forward(x, p):
    hf0 = _ref_lstm_layer(x, p["wih_l0"], p["whh_l0"], p["b_l0"])
    hb0 = jnp.flip(_ref_lstm_layer(jnp.flip(x, 1), p["wih_l0r"], p["whh_l0r"], p["b_l0r"]), 1)
    h0 = jnp.concatenate([hf0, hb0], axis=-1)
    hf1 = _ref_lstm_layer(h0, p["wih_l1"], p["whh_l1"], p["b_l1"])
    hb1 = jnp.flip(_ref_lstm_layer(jnp.flip(h0, 1), p["wih_l1r"], p["whh_l1r"], p["b_l1r"]), 1)
    lstm_out = jnp.concatenate([hf1, hb1], axis=-1)

    hid = jnp.tanh(lstm_out @ p["attn_w1"] + p["attn_b1"][0])
    scores = (hid @ p["attn_w2"])[..., 0]
    attn = jax.nn.softmax(scores, axis=1)
    ctx = jnp.einsum("bt,btd->bd", attn, lstm_out)
    return ctx @ p["fc_w"] + p["fc_b"]


# ----------------------------------------------------------------------------
# Deterministic parameter init (shapes follow the PyTorch module __init__;
# weights stored as [in, out], gate order [i, f, g, o], b = b_ih + b_hh).
# ----------------------------------------------------------------------------
def init_params(key, input_dim=7, hidden_dim=64, attn_dim=64, output_dim=1):
    H = hidden_dim
    k = 1.0 / float(H) ** 0.5

    def u(kk, shape):
        return jax.random.uniform(kk, shape, jnp.float32, -k, k)

    ks = jax.random.split(key, 17)
    return {
        "wih_l0":  u(ks[0],  (input_dim, 4 * H)),
        "whh_l0":  u(ks[1],  (H, 4 * H)),
        "b_l0":    u(ks[2],  (1, 4 * H)),
        "wih_l0r": u(ks[3],  (input_dim, 4 * H)),
        "whh_l0r": u(ks[4],  (H, 4 * H)),
        "b_l0r":   u(ks[5],  (1, 4 * H)),
        "wih_l1":  u(ks[6],  (2 * H, 4 * H)),
        "whh_l1":  u(ks[7],  (H, 4 * H)),
        "b_l1":    u(ks[8],  (1, 4 * H)),
        "wih_l1r": u(ks[9],  (2 * H, 4 * H)),
        "whh_l1r": u(ks[10], (H, 4 * H)),
        "b_l1r":   u(ks[11], (1, 4 * H)),
        "attn_w1": u(ks[12], (2 * H, attn_dim)),
        "attn_b1": u(ks[13], (1, attn_dim)),
        "attn_w2": u(ks[14], (attn_dim, 1)),
        "fc_w":    u(ks[15], (2 * H, output_dim)),
        "fc_b":    u(ks[16], (1, output_dim)),
    }


if __name__ == "__main__":
    key = jax.random.PRNGKey(0)
    pkey, xkey = jax.random.split(key)

    B, T, D_IN, H = 2, 8, 7, 64
    params = init_params(pkey, input_dim=D_IN, hidden_dim=H)
    x = jax.random.normal(xkey, (B, T, D_IN), jnp.float32)   # (batch, seq, features)

    fwd = jax.jit(stock_lstm_attention)
    out = jax.block_until_ready(fwd(x, params))
    ref = jax.block_until_ready(_ref_forward(x, params))

    assert out.shape == (B, 1), out.shape
    # Tolerance reflects the bf16 recurrent matmul (weights + h operands in bf16,
    # f32 accumulate/carries); everything else is f32.
    assert jnp.allclose(out, ref, rtol=3e-2, atol=1e-2), (out, ref)
    print("KERNEL_OK")
</pallas_src>

<mosaic_0001>
module attributes {stable_mosaic.version = 11 : i64} {
  func.func @_fused_kernel(%arg0: memref<8x2x7xf32, #tpu.memory_space<vmem>>, %arg1: memref<8x2x7xf32, #tpu.memory_space<vmem>>, %arg2: memref<7x512xf32, #tpu.memory_space<vmem>>, %arg3: memref<7x512xf32, #tpu.memory_space<vmem>>, %arg4: memref<128x512xbf16, #tpu.memory_space<vmem>>, %arg5: memref<1x512xf32, #tpu.memory_space<vmem>>, %arg6: memref<128x512xf32, #tpu.memory_space<vmem>>, %arg7: memref<128x512xf32, #tpu.memory_space<vmem>>, %arg8: memref<128x512xbf16, #tpu.memory_space<vmem>>, %arg9: memref<1x512xf32, #tpu.memory_space<vmem>>, %arg10: memref<128x64xf32, #tpu.memory_space<vmem>>, %arg11: memref<1x64xf32, #tpu.memory_space<vmem>>, %arg12: memref<1x64xf32, #tpu.memory_space<vmem>>, %arg13: memref<128x1xf32, #tpu.memory_space<vmem>>, %arg14: memref<1x1xf32, #tpu.memory_space<vmem>>, %arg15: memref<2x1xf32, #tpu.memory_space<vmem>>, %arg16: memref<8x2x512xf32, #tpu.memory_space<vmem>>, %arg17: memref<8x2x128xf32, #tpu.memory_space<vmem>>, %arg18: memref<8x2x128xf32, #tpu.memory_space<vmem>>) attributes {dimension_semantics = [], scalar_prefetch = 0 : i64, scratch_operands = 3 : i64, tpu.core_type = #tpu.core_type<tc>} {
    %0 = tpu.iota {dimensions = array<i32: 2>} : vector<8x2x128xi32>
    %c64_i32 = arith.constant 64 : i32
    %1 = vector.broadcast %c64_i32 : i32 to vector<8x2x128xi32>
    %2 = arith.cmpi sge, %0, %1 : vector<8x2x128xi32>
    %c0 = arith.constant 0 : index
    %c0_0 = arith.constant 0 : index
    %c0_1 = arith.constant 0 : index
    %3 = vector.load %arg0[%c0, %c0_0, %c0_1] : memref<8x2x7xf32, #tpu.memory_space<vmem>>, vector<8x2x7xf32>
    %4 = vector.shape_cast %3 : vector<8x2x7xf32> to vector<16x7xf32>
    %c0_2 = arith.constant 0 : index
    %c0_3 = arith.constant 0 : index
    %c0_4 = arith.constant 0 : index
    %5 = vector.load %arg1[%c0_2, %c0_3, %c0_4] : memref<8x2x7xf32, #tpu.memory_space<vmem>>, vector<8x2x7xf32>
    %6 = vector.shape_cast %5 : vector<8x2x7xf32> to vector<16x7xf32>
    %c0_5 = arith.constant 0 : index
    %c0_6 = arith.constant 0 : index
    %7 = vector.load %arg2[%c0_5, %c0_6] : memref<7x512xf32, #tpu.memory_space<vmem>>, vector<7x512xf32>
    %cst = arith.constant dense<0.000000e+00> : vector<16x512xf32>
    %8 = tpu.matmul %4, %7, %cst {dimension_numbers = #tpu.dot_dimension_numbers<[1], [0], [0], [1], [0, 0, 1, 1], [], []>} : vector<16x7xf32>, vector<7x512xf32>, vector<16x512xf32> -> vector<16x512xf32>
    %c0_7 = arith.constant 0 : index
    %c0_8 = arith.constant 0 : index
    %9 = vector.load %arg3[%c0_7, %c0_8] : memref<7x512xf32, #tpu.memory_space<vmem>>, vector<7x512xf32>
    %cst_9 = arith.constant dense<0.000000e+00> : vector<16x512xf32>
    %10 = tpu.matmul %6, %9, %cst_9 {dimension_numbers = #tpu.dot_dimension_numbers<[1], [0], [0], [1], [0, 0, 1, 1], [], []>} : vector<16x7xf32>, vector<7x512xf32>, vector<16x512xf32> -> vector<16x512xf32>
    %11 = arith.addf %8, %10 : vector<16x512xf32>
    %c0_10 = arith.constant 0 : index
    %c0_11 = arith.constant 0 : index
    %12 = vector.load %arg5[%c0_10, %c0_11] : memref<1x512xf32, #tpu.memory_space<vmem>>, vector<1x512xf32>
    %13 = vector.broadcast %12 : vector<1x512xf32> to vector<16x512xf32>
    %14 = arith.addf %11, %13 : vector<16x512xf32>
    %15 = vector.shape_cast %14 : vector<16x512xf32> to vector<8x2x512xf32>
    %c0_12 = arith.constant 0 : index
    %c0_13 = arith.constant 0 : index
    %c0_14 = arith.constant 0 : index
    %16 = vector.load %arg16[%c0_12, %c0_13, %c0_14] : memref<8x2x512xf32, #tpu.memory_space<vmem>>, vector<8x2x512xf32>
    tpu.vector_store %arg16[%c0_12, %c0_13, %c0_14], %15 {strides = array<i32>} : memref<8x2x512xf32, #tpu.memory_space<vmem>>, vector<8x2x512xf32>,
    %c0_15 = arith.constant 0 : index
    %c0_16 = arith.constant 0 : index
    %17 = vector.load %arg4[%c0_15, %c0_16] : memref<128x512xbf16, #tpu.memory_space<vmem>>, vector<128x512xbf16>
    %cst_17 = arith.constant 0.000000e+00 : f32
    %18 = vector.broadcast %cst_17 : f32 to vector<2x128xf32>
    %cst_18 = arith.constant 0.000000e+00 : f32
    %19 = vector.broadcast %cst_18 : f32 to vector<2x128xf32>
    %c0_i32 = arith.constant 0 : i32
    %20 = arith.index_cast %c0_i32 : i32 to index
    %c0_19 = arith.constant 0 : index
    %c0_20 = arith.constant 0 : index
    %21 = vector.load %arg16[%20, %c0_19, %c0_20] : memref<8x2x512xf32, #tpu.memory_space<vmem>>, vector<1x2x512xf32>
    %22 = vector.shape_cast %21 : vector<1x2x512xf32> to vector<2x512xf32>
    %23 = arith.truncf %18 : vector<2x128xf32> to vector<2x128xbf16>
    %cst_21 = arith.constant dense<0.000000e+00> : vector<2x512xf32>
    %24 = tpu.matmul %23, %17, %cst_21 {dimension_numbers = #tpu.dot_dimension_numbers<[1], [0], [0], [1], [0, 0, 1, 1], [], []>} : vector<2x128xbf16>, vector<128x512xbf16>, vector<2x512xf32> -> vector<2x512xf32>
    %25 = arith.addf %22, %24 : vector<2x512xf32>
    %26 = vector.extract_strided_slice %25 {offsets = [0, 0], sizes = [2, 128], strides = [1, 1]} : vector<2x512xf32> to vector<2x128xf32>
    %27 = arith.negf %26 : vector<2x128xf32>
    %28 = math.exp %27 : vector<2x128xf32>
    %cst_22 = arith.constant 1.000000e+00 : f32
    %29 = vector.broadcast %cst_22 : f32 to vector<2x128xf32>
    %30 = arith.addf %29, %28 : vector<2x128xf32>
    %31 = arith.divf %29, %30 : vector<2x128xf32>
    %32 = vector.extract_strided_slice %25 {offsets = [0, 128], sizes = [2, 128], strides = [1, 1]} : vector<2x512xf32> to vector<2x128xf32>
    %33 = arith.negf %32 : vector<2x128xf32>
    %34 = math.exp %33 : vector<2x128xf32>
    %cst_23 = arith.constant 1.000000e+00 : f32
    %35 = vector.broadcast %cst_23 : f32 to vector<2x128xf32>
    %36 = arith.addf %35, %34 : vector<2x128xf32>
    %37 = arith.divf %35, %36 : vector<2x128xf32>
    %38 = vector.extract_strided_slice %25 {offsets = [0, 256], sizes = [2, 128], strides = [1, 1]} : vector<2x512xf32> to vector<2x128xf32>
    %39 = math.tanh %38 : vector<2x128xf32>
    %40 = vector.extract_strided_slice %25 {offsets = [0, 384], sizes = [2, 128], strides = [1, 1]} : vector<2x512xf32> to vector<2x128xf32>
    %41 = arith.negf %40 : vector<2x128xf32>
    %42 = math.exp %41 : vector<2x128xf32>
    %cst_24 = arith.constant 1.000000e+00 : f32
    %43 = vector.broadcast %cst_24 : f32 to vector<2x128xf32>
    %44 = arith.addf %43, %42 : vector<2x128xf32>
    %45 = arith.divf %43, %44 : vector<2x128xf32>
    %46 = arith.mulf %37, %19 : vector<2x128xf32>
    %47 = arith.mulf %31, %39 : vector<2x128xf32>
    %48 = arith.addf %46, %47 : vector<2x128xf32>
    %49 = math.tanh %48 : vector<2x128xf32>
    %50 = arith.mulf %45, %49 : vector<2x128xf32>
    %51 = arith.index_cast %c0_i32 : i32 to index
    %c0_25 = arith.constant 0 : index
    %c0_26 = arith.constant 0 : index
    %52 = vector.load %arg17[%51, %c0_25, %c0_26] : memref<8x2x128xf32, #tpu.memory_space<vmem>>, vector<1x2x128xf32>
    %53 = vector.shape_cast %52 : vector<1x2x128xf32> to vector<2x128xf32>
    %54 = vector.shape_cast %50 : vector<2x128xf32> to vector<1x2x128xf32>
    tpu.vector_store %arg17[%51, %c0_25, %c0_26], %54 {strides = array<i32>} : memref<8x2x128xf32, #tpu.memory_space<vmem>>, vector<1x2x128xf32>,
    %c7_i32 = arith.constant 7 : i32
    %55 = arith.subi %c7_i32, %c0_i32 : i32
    %56 = arith.index_cast %55 : i32 to index
    %c0_27 = arith.constant 0 : index
    %c0_28 = arith.constant 0 : index
    %57 = vector.load %arg18[%56, %c0_27, %c0_28] : memref<8x2x128xf32, #tpu.memory_space<vmem>>, vector<1x2x128xf32>
    %58 = vector.shape_cast %57 : vector<1x2x128xf32> to vector<2x128xf32>
    %59 = vector.shape_cast %50 : vector<2x128xf32> to vector<1x2x128xf32>
    tpu.vector_store %arg18[%56, %c0_27, %c0_28], %59 {strides = array<i32>} : memref<8x2x128xf32, #tpu.memory_space<vmem>>, vector<1x2x128xf32>,
    %c1_i32 = arith.constant 1 : i32
    %60 = arith.index_cast %c1_i32 : i32 to index
    %c0_29 = arith.constant 0 : index
    %c0_30 = arith.constant 0 : index
    %61 = vector.load %arg16[%60, %c0_29, %c0_30] : memref<8x2x512xf32, #tpu.memory_space<vmem>>, vector<1x2x512xf32>
    %62 = vector.shape_cast %61 : vector<1x2x512xf32> to vector<2x512xf32>
    %63 = arith.truncf %50 : vector<2x128xf32> to vector<2x128xbf16>
    %cst_31 = arith.constant dense<0.000000e+00> : vector<2x512xf32>
    %64 = tpu.matmul %63, %17, %cst_31 {dimension_numbers = #tpu.dot_dimension_numbers<[1], [0], [0], [1], [0, 0, 1, 1], [], []>} : vector<2x128xbf16>, vector<128x512xbf16>, vector<2x512xf32> -> vector<2x512xf32>
    %65 = arith.addf %62, %64 : vector<2x512xf32>
    %66 = vector.extract_strided_slice %65 {offsets = [0, 0], sizes = [2, 128], strides = [1, 1]} : vector<2x512xf32> to vector<2x128xf32>
    %67 = arith.negf %66 : vector<2x128xf32>
    %68 = math.exp %67 : vector<2x128xf32>
    %cst_32 = arith.constant 1.000000e+00 : f32
    %69 = vector.broadcast %cst_32 : f32 to vector<2x128xf32>
    %70 = arith.addf %69, %68 : vector<2x128xf32>
    %71 = arith.divf %69, %70 : vector<2x128xf32>
    %72 = vector.extract_strided_slice %65 {offsets = [0, 128], sizes = [2, 128], strides = [1, 1]} : vector<2x512xf32> to vector<2x128xf32>
    %73 = arith.negf %72 : vector<2x128xf32>
    %74 = math.exp %73 : vector<2x128xf32>
    %cst_33 = arith.constant 1.000000e+00 : f32
    %75 = vector.broadcast %cst_33 : f32 to vector<2x128xf32>
    %76 = arith.addf %75, %74 : vector<2x128xf32>
    %77 = arith.divf %75, %76 : vector<2x128xf32>
    %78 = vector.extract_strided_slice %65 {offsets = [0, 256], sizes = [2, 128], strides = [1, 1]} : vector<2x512xf32> to vector<2x128xf32>
    %79 = math.tanh %78 : vector<2x128xf32>
    %80 = vector.extract_strided_slice %65 {offsets = [0, 384], sizes = [2, 128], strides = [1, 1]} : vector<2x512xf32> to vector<2x128xf32>
    %81 = arith.negf %80 : vector<2x128xf32>
    %82 = math.exp %81 : vector<2x128xf32>
    %cst_34 = arith.constant 1.000000e+00 : f32
    %83 = vector.broadcast %cst_34 : f32 to vector<2x128xf32>
    %84 = arith.addf %83, %82 : vector<2x128xf32>
    %85 = arith.divf %83, %84 : vector<2x128xf32>
    %86 = arith.mulf %77, %48 : vector<2x128xf32>
    %87 = arith.mulf %71, %79 : vector<2x128xf32>
    %88 = arith.addf %86, %87 : vector<2x128xf32>
    %89 = math.tanh %88 : vector<2x128xf32>
    %90 = arith.mulf %85, %89 : vector<2x128xf32>
    %91 = arith.index_cast %c1_i32 : i32 to index
    %c0_35 = arith.constant 0 : index
    %c0_36 = arith.constant 0 : index
    %92 = vector.load %arg17[%91, %c0_35, %c0_36] : memref<8x2x128xf32, #tpu.memory_space<vmem>>, vector<1x2x128xf32>
    %93 = vector.shape_cast %92 : vector<1x2x128xf32> to vector<2x128xf32>
    %94 = vector.shape_cast %90 : vector<2x128xf32> to vector<1x2x128xf32>
    tpu.vector_store %arg17[%91, %c0_35, %c0_36], %94 {strides = array<i32>} : memref<8x2x128xf32, #tpu.memory_space<vmem>>, vector<1x2x128xf32>,
    %c7_i32_37 = arith.constant 7 : i32
    %95 = arith.subi %c7_i32_37, %c1_i32 : i32
    %96 = arith.index_cast %95 : i32 to index
    %c0_38 = arith.constant 0 : index
    %c0_39 = arith.constant 0 : index
    %97 = vector.load %arg18[%96, %c0_38, %c0_39] : memref<8x2x128xf32, #tpu.memory_space<vmem>>, vector<1x2x128xf32>
    %98 = vector.shape_cast %97 : vector<1x2x128xf32> to vector<2x128xf32>
    %99 = vector.shape_cast %90 : vector<2x128xf32> to vector<1x2x128xf32>
    tpu.vector_store %arg18[%96, %c0_38, %c0_39], %99 {strides = array<i32>} : memref<8x2x128xf32, #tpu.memory_space<vmem>>, vector<1x2x128xf32>,
    %c2_i32 = arith.constant 2 : i32
    %100 = arith.index_cast %c2_i32 : i32 to index
    %c0_40 = arith.constant 0 : index
    %c0_41 = arith.constant 0 : index
    %101 = vector.load %arg16[%100, %c0_40, %c0_41] : memref<8x2x512xf32, #tpu.memory_space<vmem>>, vector<1x2x512xf32>
    %102 = vector.shape_cast %101 : vector<1x2x512xf32> to vector<2x512xf32>
    %103 = arith.truncf %90 : vector<2x128xf32> to vector<2x128xbf16>
    %cst_42 = arith.constant dense<0.000000e+00> : vector<2x512xf32>
    %104 = tpu.matmul %103, %17, %cst_42 {dimension_numbers = #tpu.dot_dimension_numbers<[1], [0], [0], [1], [0, 0, 1, 1], [], []>} : vector<2x128xbf16>, vector<128x512xbf16>, vector<2x512xf32> -> vector<2x512xf32>
    %105 = arith.addf %102, %104 : vector<2x512xf32>
    %106 = vector.extract_strided_slice %105 {offsets = [0, 0], sizes = [2, 128], strides = [1, 1]} : vector<2x512xf32> to vector<2x128xf32>
    %107 = arith.negf %106 : vector<2x128xf32>
    %108 = math.exp %107 : vector<2x128xf32>
    %cst_43 = arith.constant 1.000000e+00 : f32
    %109 = vector.broadcast %cst_43 : f32 to vector<2x128xf32>
    %110 = arith.addf %109, %108 : vector<2x128xf32>
    %111 = arith.divf %109, %110 : vector<2x128xf32>
    %112 = vector.extract_strided_slice %105 {offsets = [0, 128], sizes = [2, 128], strides = [1, 1]} : vector<2x512xf32> to vector<2x128xf32>
    %113 = arith.negf %112 : vector<2x128xf32>
    %114 = math.exp %113 : vector<2x128xf32>
    %cst_44 = arith.constant 1.000000e+00 : f32
    %115 = vector.broadcast %cst_44 : f32 to vector<2x128xf32>
    %116 = arith.addf %115, %114 : vector<2x128xf32>
    %117 = arith.divf %115, %116 : vector<2x128xf32>
    %118 = vector.extract_strided_slice %105 {offsets = [0, 256], sizes = [2, 128], strides = [1, 1]} : vector<2x512xf32> to vector<2x128xf32>
    %119 = math.tanh %118 : vector<2x128xf32>
    %120 = vector.extract_strided_slice %105 {offsets = [0, 384], sizes = [2, 128], strides = [1, 1]} : vector<2x512xf32> to vector<2x128xf32>
    %121 = arith.negf %120 : vector<2x128xf32>
    %122 = math.exp %121 : vector<2x128xf32>
    %cst_45 = arith.constant 1.000000e+00 : f32
    %123 = vector.broadcast %cst_45 : f32 to vector<2x128xf32>
    %124 = arith.addf %123, %122 : vector<2x128xf32>
    %125 = arith.divf %123, %124 : vector<2x128xf32>
    %126 = arith.mulf %117, %88 : vector<2x128xf32>
    %127 = arith.mulf %111, %119 : vector<2x128xf32>
    %128 = arith.addf %126, %127 : vector<2x128xf32>
    %129 = math.tanh %128 : vector<2x128xf32>
    %130 = arith.mulf %125, %129 : vector<2x128xf32>
    %131 = arith.index_cast %c2_i32 : i32 to index
    %c0_46 = arith.constant 0 : index
    %c0_47 = arith.constant 0 : index
    %132 = vector.load %arg17[%131, %c0_46, %c0_47] : memref<8x2x128xf32, #tpu.memory_space<vmem>>, vector<1x2x128xf32>
    %133 = vector.shape_cast %132 : vector<1x2x128xf32> to vector<2x128xf32>
    %134 = vector.shape_cast %130 : vector<2x128xf32> to vector<1x2x128xf32>
    tpu.vector_store %arg17[%131, %c0_46, %c0_47], %134 {strides = array<i32>} : memref<8x2x128xf32, #tpu.memory_space<vmem>>, vector<1x2x128xf32>,
    %c7_i32_48 = arith.constant 7 : i32
    %135 = arith.subi %c7_i32_48, %c2_i32 : i32
    %136 = arith.index_cast %135 : i32 to index
    %c0_49 = arith.constant 0 : index
    %c0_50 = arith.constant 0 : index
    %137 = vector.load %arg18[%136, %c0_49, %c0_50] : memref<8x2x128xf32, #tpu.memory_space<vmem>>, vector<1x2x128xf32>
    %138 = vector.shape_cast %137 : vector<1x2x128xf32> to vector<2x128xf32>
    %139 = vector.shape_cast %130 : vector<2x128xf32> to vector<1x2x128xf32>
    tpu.vector_store %arg18[%136, %c0_49, %c0_50], %139 {strides = array<i32>} : memref<8x2x128xf32, #tpu.memory_space<vmem>>, vector<1x2x128xf32>,
    %c3_i32 = arith.constant 3 : i32
    %140 = arith.index_cast %c3_i32 : i32 to index
    %c0_51 = arith.constant 0 : index
    %c0_52 = arith.constant 0 : index
    %141 = vector.load %arg16[%140, %c0_51, %c0_52] : memref<8x2x512xf32, #tpu.memory_space<vmem>>, vector<1x2x512xf32>
    %142 = vector.shape_cast %141 : vector<1x2x512xf32> to vector<2x512xf32>
    %143 = arith.truncf %130 : vector<2x128xf32> to vector<2x128xbf16>
    %cst_53 = arith.constant dense<0.000000e+00> : vector<2x512xf32>
    %144 = tpu.matmul %143, %17, %cst_53 {dimension_numbers = #tpu.dot_dimension_numbers<[1], [0], [0], [1], [0, 0, 1, 1], [], []>} : vector<2x128xbf16>, vector<128x512xbf16>, vector<2x512xf32> -> vector<2x512xf32>
    %145 = arith.addf %142, %144 : vector<2x512xf32>
    %146 = vector.extract_strided_slice %145 {offsets = [0, 0], sizes = [2, 128], strides = [1, 1]} : vector<2x512xf32> to vector<2x128xf32>
    %147 = arith.negf %146 : vector<2x128xf32>
    %148 = math.exp %147 : vector<2x128xf32>
    %cst_54 = arith.constant 1.000000e+00 : f32
    %149 = vector.broadcast %cst_54 : f32 to vector<2x128xf32>
    %150 = arith.addf %149, %148 : vector<2x128xf32>
    %151 = arith.divf %149, %150 : vector<2x128xf32>
    %152 = vector.extract_strided_slice %145 {offsets = [0, 128], sizes = [2, 128], strides = [1, 1]} : vector<2x512xf32> to vector<2x128xf32>
    %153 = arith.negf %152 : vector<2x128xf32>
    %154 = math.exp %153 : vector<2x128xf32>
    %cst_55 = arith.constant 1.000000e+00 : f32
    %155 = vector.broadcast %cst_55 : f32 to vector<2x128xf32>
    %156 = arith.addf %155, %154 : vector<2x128xf32>
    %157 = arith.divf %155, %156 : vector<2x128xf32>
    %158 = vector.extract_strided_slice %145 {offsets = [0, 256], sizes = [2, 128], strides = [1, 1]} : vector<2x512xf32> to vector<2x128xf32>
    %159 = math.tanh %158 : vector<2x128xf32>
    %160 = vector.extract_strided_slice %145 {offsets = [0, 384], sizes = [2, 128], strides = [1, 1]} : vector<2x512xf32> to vector<2x128xf32>
    %161 = arith.negf %160 : vector<2x128xf32>
    %162 = math.exp %161 : vector<2x128xf32>
    %cst_56 = arith.constant 1.000000e+00 : f32
    %163 = vector.broadcast %cst_56 : f32 to vector<2x128xf32>
    %164 = arith.addf %163, %162 : vector<2x128xf32>
    %165 = arith.divf %163, %164 : vector<2x128xf32>
    %166 = arith.mulf %157, %128 : vector<2x128xf32>
    %167 = arith.mulf %151, %159 : vector<2x128xf32>
    %168 = arith.addf %166, %167 : vector<2x128xf32>
    %169 = math.tanh %168 : vector<2x128xf32>
    %170 = arith.mulf %165, %169 : vector<2x128xf32>
    %171 = arith.index_cast %c3_i32 : i32 to index
    %c0_57 = arith.constant 0 : index
    %c0_58 = arith.constant 0 : index
    %172 = vector.load %arg17[%171, %c0_57, %c0_58] : memref<8x2x128xf32, #tpu.memory_space<vmem>>, vector<1x2x128xf32>
    %173 = vector.shape_cast %172 : vector<1x2x128xf32> to vector<2x128xf32>
    %174 = vector.shape_cast %170 : vector<2x128xf32> to vector<1x2x128xf32>
    tpu.vector_store %arg17[%171, %c0_57, %c0_58], %174 {strides = array<i32>} : memref<8x2x128xf32, #tpu.memory_space<vmem>>, vector<1x2x128xf32>,
    %c7_i32_59 = arith.constant 7 : i32
    %175 = arith.subi %c7_i32_59, %c3_i32 : i32
    %176 = arith.index_cast %175 : i32 to index
    %c0_60 = arith.constant 0 : index
    %c0_61 = arith.constant 0 : index
    %177 = vector.load %arg18[%176, %c0_60, %c0_61] : memref<8x2x128xf32, #tpu.memory_space<vmem>>, vector<1x2x128xf32>
    %178 = vector.shape_cast %177 : vector<1x2x128xf32> to vector<2x128xf32>
    %179 = vector.shape_cast %170 : vector<2x128xf32> to vector<1x2x128xf32>
    tpu.vector_store %arg18[%176, %c0_60, %c0_61], %179 {strides = array<i32>} : memref<8x2x128xf32, #tpu.memory_space<vmem>>, vector<1x2x128xf32>,
    %c4_i32 = arith.constant 4 : i32
    %180 = arith.index_cast %c4_i32 : i32 to index
    %c0_62 = arith.constant 0 : index
    %c0_63 = arith.constant 0 : index
    %181 = vector.load %arg16[%180, %c0_62, %c0_63] : memref<8x2x512xf32, #tpu.memory_space<vmem>>, vector<1x2x512xf32>
    %182 = vector.shape_cast %181 : vector<1x2x512xf32> to vector<2x512xf32>
    %183 = arith.truncf %170 : vector<2x128xf32> to vector<2x128xbf16>
    %cst_64 = arith.constant dense<0.000000e+00> : vector<2x512xf32>
    %184 = tpu.matmul %183, %17, %cst_64 {dimension_numbers = #tpu.dot_dimension_numbers<[1], [0], [0], [1], [0, 0, 1, 1], [], []>} : vector<2x128xbf16>, vector<128x512xbf16>, vector<2x512xf32> -> vector<2x512xf32>
    %185 = arith.addf %182, %184 : vector<2x512xf32>
    %186 = vector.extract_strided_slice %185 {offsets = [0, 0], sizes = [2, 128], strides = [1, 1]} : vector<2x512xf32> to vector<2x128xf32>
    %187 = arith.negf %186 : vector<2x128xf32>
    %188 = math.exp %187 : vector<2x128xf32>
    %cst_65 = arith.constant 1.000000e+00 : f32
    %189 = vector.broadcast %cst_65 : f32 to vector<2x128xf32>
    %190 = arith.addf %189, %188 : vector<2x128xf32>
    %191 = arith.divf %189, %190 : vector<2x128xf32>
    %192 = vector.extract_strided_slice %185 {offsets = [0, 128], sizes = [2, 128], strides = [1, 1]} : vector<2x512xf32> to vector<2x128xf32>
    %193 = arith.negf %192 : vector<2x128xf32>
    %194 = math.exp %193 : vector<2x128xf32>
    %cst_66 = arith.constant 1.000000e+00 : f32
    %195 = vector.broadcast %cst_66 : f32 to vector<2x128xf32>
    %196 = arith.addf %195, %194 : vector<2x128xf32>
    %197 = arith.divf %195, %196 : vector<2x128xf32>
    %198 = vector.extract_strided_slice %185 {offsets = [0, 256], sizes = [2, 128], strides = [1, 1]} : vector<2x512xf32> to vector<2x128xf32>
    %199 = math.tanh %198 : vector<2x128xf32>
    %200 = vector.extract_strided_slice %185 {offsets = [0, 384], sizes = [2, 128], strides = [1, 1]} : vector<2x512xf32> to vector<2x128xf32>
    %201 = arith.negf %200 : vector<2x128xf32>
    %202 = math.exp %201 : vector<2x128xf32>
    %cst_67 = arith.constant 1.000000e+00 : f32
    %203 = vector.broadcast %cst_67 : f32 to vector<2x128xf32>
    %204 = arith.addf %203, %202 : vector<2x128xf32>
    %205 = arith.divf %203, %204 : vector<2x128xf32>
    %206 = arith.mulf %197, %168 : vector<2x128xf32>
    %207 = arith.mulf %191, %199 : vector<2x128xf32>
    %208 = arith.addf %206, %207 : vector<2x128xf32>
    %209 = math.tanh %208 : vector<2x128xf32>
    %210 = arith.mulf %205, %209 : vector<2x128xf32>
    %211 = arith.index_cast %c4_i32 : i32 to index
    %c0_68 = arith.constant 0 : index
    %c0_69 = arith.constant 0 : index
    %212 = vector.load %arg17[%211, %c0_68, %c0_69] : memref<8x2x128xf32, #tpu.memory_space<vmem>>, vector<1x2x128xf32>
    %213 = vector.shape_cast %212 : vector<1x2x128xf32> to vector<2x128xf32>
    %214 = vector.shape_cast %210 : vector<2x128xf32> to vector<1x2x128xf32>
    tpu.vector_store %arg17[%211, %c0_68, %c0_69], %214 {strides = array<i32>} : memref<8x2x128xf32, #tpu.memory_space<vmem>>, vector<1x2x128xf32>,
    %c7_i32_70 = arith.constant 7 : i32
    %215 = arith.subi %c7_i32_70, %c4_i32 : i32
    %216 = arith.index_cast %215 : i32 to index
    %c0_71 = arith.constant 0 : index
    %c0_72 = arith.constant 0 : index
    %217 = vector.load %arg18[%216, %c0_71, %c0_72] : memref<8x2x128xf32, #tpu.memory_space<vmem>>, vector<1x2x128xf32>
    %218 = vector.shape_cast %217 : vector<1x2x128xf32> to vector<2x128xf32>
    %219 = vector.shape_cast %210 : vector<2x128xf32> to vector<1x2x128xf32>
    tpu.vector_store %arg18[%216, %c0_71, %c0_72], %219 {strides = array<i32>} : memref<8x2x128xf32, #tpu.memory_space<vmem>>, vector<1x2x128xf32>,
    %c5_i32 = arith.constant 5 : i32
    %220 = arith.index_cast %c5_i32 : i32 to index
    %c0_73 = arith.constant 0 : index
    %c0_74 = arith.constant 0 : index
    %221 = vector.load %arg16[%220, %c0_73, %c0_74] : memref<8x2x512xf32, #tpu.memory_space<vmem>>, vector<1x2x512xf32>
    %222 = vector.shape_cast %221 : vector<1x2x512xf32> to vector<2x512xf32>
    %223 = arith.truncf %210 : vector<2x128xf32> to vector<2x128xbf16>
    %cst_75 = arith.constant dense<0.000000e+00> : vector<2x512xf32>
    %224 = tpu.matmul %223, %17, %cst_75 {dimension_numbers = #tpu.dot_dimension_numbers<[1], [0], [0], [1], [0, 0, 1, 1], [], []>} : vector<2x128xbf16>, vector<128x512xbf16>, vector<2x512xf32> -> vector<2x512xf32>
    %225 = arith.addf %222, %224 : vector<2x512xf32>
    %226 = vector.extract_strided_slice %225 {offsets = [0, 0], sizes = [2, 128], strides = [1, 1]} : vector<2x512xf32> to vector<2x128xf32>
    %227 = arith.negf %226 : vector<2x128xf32>
    %228 = math.exp %227 : vector<2x128xf32>
    %cst_76 = arith.constant 1.000000e+00 : f32
    %229 = vector.broadcast %cst_76 : f32 to vector<2x128xf32>
    %230 = arith.addf %229, %228 : vector<2x128xf32>
    %231 = arith.divf %229, %230 : vector<2x128xf32>
    %232 = vector.extract_strided_slice %225 {offsets = [0, 128], sizes = [2, 128], strides = [1, 1]} : vector<2x512xf32> to vector<2x128xf32>
    %233 = arith.negf %232 : vector<2x128xf32>
    %234 = math.exp %233 : vector<2x128xf32>
    %cst_77 = arith.constant 1.000000e+00 : f32
    %235 = vector.broadcast %cst_77 : f32 to vector<2x128xf32>
    %236 = arith.addf %235, %234 : vector<2x128xf32>
    %237 = arith.divf %235, %236 : vector<2x128xf32>
    %238 = vector.extract_strided_slice %225 {offsets = [0, 256], sizes = [2, 128], strides = [1, 1]} : vector<2x512xf32> to vector<2x128xf32>
    %239 = math.tanh %238 : vector<2x128xf32>
    %240 = vector.extract_strided_slice %225 {offsets = [0, 384], sizes = [2, 128], strides = [1, 1]} : vector<2x512xf32> to vector<2x128xf32>
    %241 = arith.negf %240 : vector<2x128xf32>
    %242 = math.exp %241 : vector<2x128xf32>
    %cst_78 = arith.constant 1.000000e+00 : f32
    %243 = vector.broadcast %cst_78 : f32 to vector<2x128xf32>
    %244 = arith.addf %243, %242 : vector<2x128xf32>
    %245 = arith.divf %243, %244 : vector<2x128xf32>
    %246 = arith.mulf %237, %208 : vector<2x128xf32>
    %247 = arith.mulf %231, %239 : vector<2x128xf32>
    %248 = arith.addf %246, %247 : vector<2x128xf32>
    %249 = math.tanh %248 : vector<2x128xf32>
    %250 = arith.mulf %245, %249 : vector<2x128xf32>
    %251 = arith.index_cast %c5_i32 : i32 to index
    %c0_79 = arith.constant 0 : index
    %c0_80 = arith.constant 0 : index
    %252 = vector.load %arg17[%251, %c0_79, %c0_80] : memref<8x2x128xf32, #tpu.memory_space<vmem>>, vector<1x2x128xf32>
    %253 = vector.shape_cast %252 : vector<1x2x128xf32> to vector<2x128xf32>
    %254 = vector.shape_cast %250 : vector<2x128xf32> to vector<1x2x128xf32>
    tpu.vector_store %arg17[%251, %c0_79, %c0_80], %254 {strides = array<i32>} : memref<8x2x128xf32, #tpu.memory_space<vmem>>, vector<1x2x128xf32>,
    %c7_i32_81 = arith.constant 7 : i32
    %255 = arith.subi %c7_i32_81, %c5_i32 : i32
    %256 = arith.index_cast %255 : i32 to index
    %c0_82 = arith.constant 0 : index
    %c0_83 = arith.constant 0 : index
    %257 = vector.load %arg18[%256, %c0_82, %c0_83] : memref<8x2x128xf32, #tpu.memory_space<vmem>>, vector<1x2x128xf32>
    %258 = vector.shape_cast %257 : vector<1x2x128xf32> to vector<2x128xf32>
    %259 = vector.shape_cast %250 : vector<2x128xf32> to vector<1x2x128xf32>
    tpu.vector_store %arg18[%256, %c0_82, %c0_83], %259 {strides = array<i32>} : memref<8x2x128xf32, #tpu.memory_space<vmem>>, vector<1x2x128xf32>,
    %c6_i32 = arith.constant 6 : i32
    %260 = arith.index_cast %c6_i32 : i32 to index
    %c0_84 = arith.constant 0 : index
    %c0_85 = arith.constant 0 : index
    %261 = vector.load %arg16[%260, %c0_84, %c0_85] : memref<8x2x512xf32, #tpu.memory_space<vmem>>, vector<1x2x512xf32>
    %262 = vector.shape_cast %261 : vector<1x2x512xf32> to vector<2x512xf32>
    %263 = arith.truncf %250 : vector<2x128xf32> to vector<2x128xbf16>
    %cst_86 = arith.constant dense<0.000000e+00> : vector<2x512xf32>
    %264 = tpu.matmul %263, %17, %cst_86 {dimension_numbers = #tpu.dot_dimension_numbers<[1], [0], [0], [1], [0, 0, 1, 1], [], []>} : vector<2x128xbf16>, vector<128x512xbf16>, vector<2x512xf32> -> vector<2x512xf32>
    %265 = arith.addf %262, %264 : vector<2x512xf32>
    %266 = vector.extract_strided_slice %265 {offsets = [0, 0], sizes = [2, 128], strides = [1, 1]} : vector<2x512xf32> to vector<2x128xf32>
    %267 = arith.negf %266 : vector<2x128xf32>
    %268 = math.exp %267 : vector<2x128xf32>
    %cst_87 = arith.constant 1.000000e+00 : f32
    %269 = vector.broadcast %cst_87 : f32 to vector<2x128xf32>
    %270 = arith.addf %269, %268 : vector<2x128xf32>
    %271 = arith.divf %269, %270 : vector<2x128xf32>
    %272 = vector.extract_strided_slice %265 {offsets = [0, 128], sizes = [2, 128], strides = [1, 1]} : vector<2x512xf32> to vector<2x128xf32>
    %273 = arith.negf %272 : vector<2x128xf32>
    %274 = math.exp %273 : vector<2x128xf32>
    %cst_88 = arith.constant 1.000000e+00 : f32
    %275 = vector.broadcast %cst_88 : f32 to vector<2x128xf32>
    %276 = arith.addf %275, %274 : vector<2x128xf32>
    %277 = arith.divf %275, %276 : vector<2x128xf32>
    %278 = vector.extract_strided_slice %265 {offsets = [0, 256], sizes = [2, 128], strides = [1, 1]} : vector<2x512xf32> to vector<2x128xf32>
    %279 = math.tanh %278 : vector<2x128xf32>
    %280 = vector.extract_strided_slice %265 {offsets = [0, 384], sizes = [2, 128], strides = [1, 1]} : vector<2x512xf32> to vector<2x128xf32>
    %281 = arith.negf %280 : vector<2x128xf32>
    %282 = math.exp %281 : vector<2x128xf32>
    %cst_89 = arith.constant 1.000000e+00 : f32
    %283 = vector.broadcast %cst_89 : f32 to vector<2x128xf32>
    %284 = arith.addf %283, %282 : vector<2x128xf32>
    %285 = arith.divf %283, %284 : vector<2x128xf32>
    %286 = arith.mulf %277, %248 : vector<2x128xf32>
    %287 = arith.mulf %271, %279 : vector<2x128xf32>
    %288 = arith.addf %286, %287 : vector<2x128xf32>
    %289 = math.tanh %288 : vector<2x128xf32>
    %290 = arith.mulf %285, %289 : vector<2x128xf32>
    %291 = arith.index_cast %c6_i32 : i32 to index
    %c0_90 = arith.constant 0 : index
    %c0_91 = arith.constant 0 : index
    %292 = vector.load %arg17[%291, %c0_90, %c0_91] : memref<8x2x128xf32, #tpu.memory_space<vmem>>, vector<1x2x128xf32>
    %293 = vector.shape_cast %292 : vector<1x2x128xf32> to vector<2x128xf32>
    %294 = vector.shape_cast %290 : vector<2x128xf32> to vector<1x2x128xf32>
    tpu.vector_store %arg17[%291, %c0_90, %c0_91], %294 {strides = array<i32>} : memref<8x2x128xf32, #tpu.memory_space<vmem>>, vector<1x2x128xf32>,
    %c7_i32_92 = arith.constant 7 : i32
    %295 = arith.subi %c7_i32_92, %c6_i32 : i32
    %296 = arith.index_cast %295 : i32 to index
    %c0_93 = arith.constant 0 : index
    %c0_94 = arith.constant 0 : index
    %297 = vector.load %arg18[%296, %c0_93, %c0_94] : memref<8x2x128xf32, #tpu.memory_space<vmem>>, vector<1x2x128xf32>
    %298 = vector.shape_cast %297 : vector<1x2x128xf32> to vector<2x128xf32>
    %299 = vector.shape_cast %290 : vector<2x128xf32> to vector<1x2x128xf32>
    tpu.vector_store %arg18[%296, %c0_93, %c0_94], %299 {strides = array<i32>} : memref<8x2x128xf32, #tpu.memory_space<vmem>>, vector<1x2x128xf32>,
    %c7_i32_95 = arith.constant 7 : i32
    %300 = arith.index_cast %c7_i32_95 : i32 to index
    %c0_96 = arith.constant 0 : index
    %c0_97 = arith.constant 0 : index
    %301 = vector.load %arg16[%300, %c0_96, %c0_97] : memref<8x2x512xf32, #tpu.memory_space<vmem>>, vector<1x2x512xf32>
    %302 = vector.shape_cast %301 : vector<1x2x512xf32> to vector<2x512xf32>
    %303 = arith.truncf %290 : vector<2x128xf32> to vector<2x128xbf16>
    %cst_98 = arith.constant dense<0.000000e+00> : vector<2x512xf32>
    %304 = tpu.matmul %303, %17, %cst_98 {dimension_numbers = #tpu.dot_dimension_numbers<[1], [0], [0], [1], [0, 0, 1, 1], [], []>} : vector<2x128xbf16>, vector<128x512xbf16>, vector<2x512xf32> -> vector<2x512xf32>
    %305 = arith.addf %302, %304 : vector<2x512xf32>
    %306 = vector.extract_strided_slice %305 {offsets = [0, 0], sizes = [2, 128], strides = [1, 1]} : vector<2x512xf32> to vector<2x128xf32>
    %307 = arith.negf %306 : vector<2x128xf32>
    %308 = math.exp %307 : vector<2x128xf32>
    %cst_99 = arith.constant 1.000000e+00 : f32
    %309 = vector.broadcast %cst_99 : f32 to vector<2x128xf32>
    %310 = arith.addf %309, %308 : vector<2x128xf32>
    %311 = arith.divf %309, %310 : vector<2x128xf32>
    %312 = vector.extract_strided_slice %305 {offsets = [0, 128], sizes = [2, 128], strides = [1, 1]} : vector<2x512xf32> to vector<2x128xf32>
    %313 = arith.negf %312 : vector<2x128xf32>
    %314 = math.exp %313 : vector<2x128xf32>
    %cst_100 = arith.constant 1.000000e+00 : f32
    %315 = vector.broadcast %cst_100 : f32 to vector<2x128xf32>
    %316 = arith.addf %315, %314 : vector<2x128xf32>
    %317 = arith.divf %315, %316 : vector<2x128xf32>
    %318 = vector.extract_strided_slice %305 {offsets = [0, 256], sizes = [2, 128], strides = [1, 1]} : vector<2x512xf32> to vector<2x128xf32>
    %319 = math.tanh %318 : vector<2x128xf32>
    %320 = vector.extract_strided_slice %305 {offsets = [0, 384], sizes = [2, 128], strides = [1, 1]} : vector<2x512xf32> to vector<2x128xf32>
    %321 = arith.negf %320 : vector<2x128xf32>
    %322 = math.exp %321 : vector<2x128xf32>
    %cst_101 = arith.constant 1.000000e+00 : f32
    %323 = vector.broadcast %cst_101 : f32 to vector<2x128xf32>
    %324 = arith.addf %323, %322 : vector<2x128xf32>
    %325 = arith.divf %323, %324 : vector<2x128xf32>
    %326 = arith.mulf %317, %288 : vector<2x128xf32>
    %327 = arith.mulf %311, %319 : vector<2x128xf32>
    %328 = arith.addf %326, %327 : vector<2x128xf32>
    %329 = math.tanh %328 : vector<2x128xf32>
    %330 = arith.mulf %325, %329 : vector<2x128xf32>
    %331 = arith.index_cast %c7_i32_95 : i32 to index
    %c0_102 = arith.constant 0 : index
    %c0_103 = arith.constant 0 : index
    %332 = vector.load %arg17[%331, %c0_102, %c0_103] : memref<8x2x128xf32, #tpu.memory_space<vmem>>, vector<1x2x128xf32>
    %333 = vector.shape_cast %332 : vector<1x2x128xf32> to vector<2x128xf32>
    %334 = vector.shape_cast %330 : vector<2x128xf32> to vector<1x2x128xf32>
    tpu.vector_store %arg17[%331, %c0_102, %c0_103], %334 {strides = array<i32>} : memref<8x2x128xf32, #tpu.memory_space<vmem>>, vector<1x2x128xf32>,
    %c7_i32_104 = arith.constant 7 : i32
    %335 = arith.subi %c7_i32_104, %c7_i32_95 : i32
    %336 = arith.index_cast %335 : i32 to index
    %c0_105 = arith.constant 0 : index
    %c0_106 = arith.constant 0 : index
    %337 = vector.load %arg18[%336, %c0_105, %c0_106] : memref<8x2x128xf32, #tpu.memory_space<vmem>>, vector<1x2x128xf32>
    %338 = vector.shape_cast %337 : vector<1x2x128xf32> to vector<2x128xf32>
    %339 = vector.shape_cast %330 : vector<2x128xf32> to vector<1x2x128xf32>
    tpu.vector_store %arg18[%336, %c0_105, %c0_106], %339 {strides = array<i32>} : memref<8x2x128xf32, #tpu.memory_space<vmem>>, vector<1x2x128xf32>,
    %c8_i32 = arith.constant 8 : i32
    %c0_107 = arith.constant 0 : index
    %c0_108 = arith.constant 0 : index
    %c0_109 = arith.constant 0 : index
    %340 = vector.load %arg18[%c0_107, %c0_108, %c0_109] : memref<8x2x128xf32, #tpu.memory_space<vmem>>, vector<8x2x128xf32>
    %c0_110 = arith.constant 0 : index
    %c0_111 = arith.constant 0 : index
    %c0_112 = arith.constant 0 : index
    %341 = vector.load %arg17[%c0_110, %c0_111, %c0_112] : memref<8x2x128xf32, #tpu.memory_space<vmem>>, vector<8x2x128xf32>
    %342 = arith.select %2, %340, %341 : vector<8x2x128xi1>, vector<8x2x128xf32>
    %c0_113 = arith.constant 0 : index
    %c0_114 = arith.constant 0 : index
    %c0_115 = arith.constant 0 : index
    %343 = vector.load %arg17[%c0_113, %c0_114, %c0_115] : memref<8x2x128xf32, #tpu.memory_space<vmem>>, vector<8x2x128xf32>
    %c0_116 = arith.constant 0 : index
    %c0_117 = arith.constant 0 : index
    %c0_118 = arith.constant 0 : index
    %344 = vector.load %arg18[%c0_116, %c0_117, %c0_118] : memref<8x2x128xf32, #tpu.memory_space<vmem>>, vector<8x2x128xf32>
    %345 = arith.select %2, %343, %344 : vector<8x2x128xi1>, vector<8x2x128xf32>
    %346 = vector.shape_cast %342 : vector<8x2x128xf32> to vector<16x128xf32>
    %c0_119 = arith.constant 0 : index
    %c0_120 = arith.constant 0 : index
    %347 = vector.load %arg6[%c0_119, %c0_120] : memref<128x512xf32, #tpu.memory_space<vmem>>, vector<128x512xf32>
    %cst_121 = arith.constant dense<0.000000e+00> : vector<16x512xf32>
    %348 = tpu.matmul %346, %347, %cst_121 {dimension_numbers = #tpu.dot_dimension_numbers<[1], [0], [0], [1], [0, 0, 1, 1], [], []>} : vector<16x128xf32>, vector<128x512xf32>, vector<16x512xf32> -> vector<16x512xf32>
    %349 = vector.shape_cast %345 : vector<8x2x128xf32> to vector<16x128xf32>
    %c0_122 = arith.constant 0 : index
    %c0_123 = arith.constant 0 : index
    %350 = vector.load %arg7[%c0_122, %c0_123] : memref<128x512xf32, #tpu.memory_space<vmem>>, vector<128x512xf32>
    %cst_124 = arith.constant dense<0.000000e+00> : vector<16x512xf32>
    %351 = tpu.matmul %349, %350, %cst_124 {dimension_numbers = #tpu.dot_dimension_numbers<[1], [0], [0], [1], [0, 0, 1, 1], [], []>} : vector<16x128xf32>, vector<128x512xf32>, vector<16x512xf32> -> vector<16x512xf32>
    %352 = arith.addf %348, %351 : vector<16x512xf32>
    %c0_125 = arith.constant 0 : index
    %c0_126 = arith.constant 0 : index
    %353 = vector.load %arg9[%c0_125, %c0_126] : memref<1x512xf32, #tpu.memory_space<vmem>>, vector<1x512xf32>
    %354 = vector.broadcast %353 : vector<1x512xf32> to vector<16x512xf32>
    %355 = arith.addf %352, %354 : vector<16x512xf32>
    %356 = vector.shape_cast %355 : vector<16x512xf32> to vector<8x2x512xf32>
    %c0_127 = arith.constant 0 : index
    %c0_128 = arith.constant 0 : index
    %c0_129 = arith.constant 0 : index
    %357 = vector.load %arg16[%c0_127, %c0_128, %c0_129] : memref<8x2x512xf32, #tpu.memory_space<vmem>>, vector<8x2x512xf32>
    tpu.vector_store %arg16[%c0_127, %c0_128, %c0_129], %356 {strides = array<i32>} : memref<8x2x512xf32, #tpu.memory_space<vmem>>, vector<8x2x512xf32>,
    %c0_130 = arith.constant 0 : index
    %c0_131 = arith.constant 0 : index
    %358 = vector.load %arg8[%c0_130, %c0_131] : memref<128x512xbf16, #tpu.memory_space<vmem>>, vector<128x512xbf16>
    %cst_132 = arith.constant 0.000000e+00 : f32
    %359 = vector.broadcast %cst_132 : f32 to vector<2x128xf32>
    %cst_133 = arith.constant 0.000000e+00 : f32
    %360 = vector.broadcast %cst_133 : f32 to vector<2x128xf32>
    %c0_i32_134 = arith.constant 0 : i32
    %361 = arith.index_cast %c0_i32_134 : i32 to index
    %c0_135 = arith.constant 0 : index
    %c0_136 = arith.constant 0 : index
    %362 = vector.load %arg16[%361, %c0_135, %c0_136] : memref<8x2x512xf32, #tpu.memory_space<vmem>>, vector<1x2x512xf32>
    %363 = vector.shape_cast %362 : vector<1x2x512xf32> to vector<2x512xf32>
    %364 = arith.truncf %359 : vector<2x128xf32> to vector<2x128xbf16>
    %cst_137 = arith.constant dense<0.000000e+00> : vector<2x512xf32>
    %365 = tpu.matmul %364, %358, %cst_137 {dimension_numbers = #tpu.dot_dimension_numbers<[1], [0], [0], [1], [0, 0, 1, 1], [], []>} : vector<2x128xbf16>, vector<128x512xbf16>, vector<2x512xf32> -> vector<2x512xf32>
    %366 = arith.addf %363, %365 : vector<2x512xf32>
    %367 = vector.extract_strided_slice %366 {offsets = [0, 0], sizes = [2, 128], strides = [1, 1]} : vector<2x512xf32> to vector<2x128xf32>
    %368 = arith.negf %367 : vector<2x128xf32>
    %369 = math.exp %368 : vector<2x128xf32>
    %cst_138 = arith.constant 1.000000e+00 : f32
    %370 = vector.broadcast %cst_138 : f32 to vector<2x128xf32>
    %371 = arith.addf %370, %369 : vector<2x128xf32>
    %372 = arith.divf %370, %371 : vector<2x128xf32>
    %373 = vector.extract_strided_slice %366 {offsets = [0, 128], sizes = [2, 128], strides = [1, 1]} : vector<2x512xf32> to vector<2x128xf32>
    %374 = arith.negf %373 : vector<2x128xf32>
    %375 = math.exp %374 : vector<2x128xf32>
    %cst_139 = arith.constant 1.000000e+00 : f32
    %376 = vector.broadcast %cst_139 : f32 to vector<2x128xf32>
    %377 = arith.addf %376, %375 : vector<2x128xf32>
    %378 = arith.divf %376, %377 : vector<2x128xf32>
    %379 = vector.extract_strided_slice %366 {offsets = [0, 256], sizes = [2, 128], strides = [1, 1]} : vector<2x512xf32> to vector<2x128xf32>
    %380 = math.tanh %379 : vector<2x128xf32>
    %381 = vector.extract_strided_slice %366 {offsets = [0, 384], sizes = [2, 128], strides = [1, 1]} : vector<2x512xf32> to vector<2x128xf32>
    %382 = arith.negf %381 : vector<2x128xf32>
    %383 = math.exp %382 : vector<2x128xf32>
    %cst_140 = arith.constant 1.000000e+00 : f32
    %384 = vector.broadcast %cst_140 : f32 to vector<2x128xf32>
    %385 = arith.addf %384, %383 : vector<2x128xf32>
    %386 = arith.divf %384, %385 : vector<2x128xf32>
    %387 = arith.mulf %378, %360 : vector<2x128xf32>
    %388 = arith.mulf %372, %380 : vector<2x128xf32>
    %389 = arith.addf %387, %388 : vector<2x128xf32>
    %390 = math.tanh %389 : vector<2x128xf32>
    %391 = arith.mulf %386, %390 : vector<2x128xf32>
    %392 = arith.index_cast %c0_i32_134 : i32 to index
    %c0_141 = arith.constant 0 : index
    %c0_142 = arith.constant 0 : index
    %393 = vector.load %arg17[%392, %c0_141, %c0_142] : memref<8x2x128xf32, #tpu.memory_space<vmem>>, vector<1x2x128xf32>
    %394 = vector.shape_cast %393 : vector<1x2x128xf32> to vector<2x128xf32>
    %395 = vector.shape_cast %391 : vector<2x128xf32> to vector<1x2x128xf32>
    tpu.vector_store %arg17[%392, %c0_141, %c0_142], %395 {strides = array<i32>} : memref<8x2x128xf32, #tpu.memory_space<vmem>>, vector<1x2x128xf32>,
    %c7_i32_143 = arith.constant 7 : i32
    %396 = arith.subi %c7_i32_143, %c0_i32_134 : i32
    %397 = arith.index_cast %396 : i32 to index
    %c0_144 = arith.constant 0 : index
    %c0_145 = arith.constant 0 : index
    %398 = vector.load %arg18[%397, %c0_144, %c0_145] : memref<8x2x128xf32, #tpu.memory_space<vmem>>, vector<1x2x128xf32>
    %399 = vector.shape_cast %398 : vector<1x2x128xf32> to vector<2x128xf32>
    %400 = vector.shape_cast %391 : vector<2x128xf32> to vector<1x2x128xf32>
    tpu.vector_store %arg18[%397, %c0_144, %c0_145], %400 {strides = array<i32>} : memref<8x2x128xf32, #tpu.memory_space<vmem>>, vector<1x2x128xf32>,
    %c1_i32_146 = arith.constant 1 : i32
    %401 = arith.index_cast %c1_i32_146 : i32 to index
    %c0_147 = arith.constant 0 : index
    %c0_148 = arith.constant 0 : index
    %402 = vector.load %arg16[%401, %c0_147, %c0_148] : memref<8x2x512xf32, #tpu.memory_space<vmem>>, vector<1x2x512xf32>
    %403 = vector.shape_cast %402 : vector<1x2x512xf32> to vector<2x512xf32>
    %404 = arith.truncf %391 : vector<2x128xf32> to vector<2x128xbf16>
    %cst_149 = arith.constant dense<0.000000e+00> : vector<2x512xf32>
    %405 = tpu.matmul %404, %358, %cst_149 {dimension_numbers = #tpu.dot_dimension_numbers<[1], [0], [0], [1], [0, 0, 1, 1], [], []>} : vector<2x128xbf16>, vector<128x512xbf16>, vector<2x512xf32> -> vector<2x512xf32>
    %406 = arith.addf %403, %405 : vector<2x512xf32>
    %407 = vector.extract_strided_slice %406 {offsets = [0, 0], sizes = [2, 128], strides = [1, 1]} : vector<2x512xf32> to vector<2x128xf32>
    %408 = arith.negf %407 : vector<2x128xf32>
    %409 = math.exp %408 : vector<2x128xf32>
    %cst_150 = arith.constant 1.000000e+00 : f32
    %410 = vector.broadcast %cst_150 : f32 to vector<2x128xf32>
    %411 = arith.addf %410, %409 : vector<2x128xf32>
    %412 = arith.divf %410, %411 : vector<2x128xf32>
    %413 = vector.extract_strided_slice %406 {offsets = [0, 128], sizes = [2, 128], strides = [1, 1]} : vector<2x512xf32> to vector<2x128xf32>
    %414 = arith.negf %413 : vector<2x128xf32>
    %415 = math.exp %414 : vector<2x128xf32>
    %cst_151 = arith.constant 1.000000e+00 : f32
    %416 = vector.broadcast %cst_151 : f32 to vector<2x128xf32>
    %417 = arith.addf %416, %415 : vector<2x128xf32>
    %418 = arith.divf %416, %417 : vector<2x128xf32>
    %419 = vector.extract_strided_slice %406 {offsets = [0, 256], sizes = [2, 128], strides = [1, 1]} : vector<2x512xf32> to vector<2x128xf32>
    %420 = math.tanh %419 : vector<2x128xf32>
    %421 = vector.extract_strided_slice %406 {offsets = [0, 384], sizes = [2, 128], strides = [1, 1]} : vector<2x512xf32> to vector<2x128xf32>
    %422 = arith.negf %421 : vector<2x128xf32>
    %423 = math.exp %422 : vector<2x128xf32>
    %cst_152 = arith.constant 1.000000e+00 : f32
    %424 = vector.broadcast %cst_152 : f32 to vector<2x128xf32>
    %425 = arith.addf %424, %423 : vector<2x128xf32>
    %426 = arith.divf %424, %425 : vector<2x128xf32>
    %427 = arith.mulf %418, %389 : vector<2x128xf32>
    %428 = arith.mulf %412, %420 : vector<2x128xf32>
    %429 = arith.addf %427, %428 : vector<2x128xf32>
    %430 = math.tanh %429 : vector<2x128xf32>
    %431 = arith.mulf %426, %430 : vector<2x128xf32>
    %432 = arith.index_cast %c1_i32_146 : i32 to index
    %c0_153 = arith.constant 0 : index
    %c0_154 = arith.constant 0 : index
    %433 = vector.load %arg17[%432, %c0_153, %c0_154] : memref<8x2x128xf32, #tpu.memory_space<vmem>>, vector<1x2x128xf32>
    %434 = vector.shape_cast %433 : vector<1x2x128xf32> to vector<2x128xf32>
    %435 = vector.shape_cast %431 : vector<2x128xf32> to vector<1x2x128xf32>
    tpu.vector_store %arg17[%432, %c0_153, %c0_154], %435 {strides = array<i32>} : memref<8x2x128xf32, #tpu.memory_space<vmem>>, vector<1x2x128xf32>,
    %c7_i32_155 = arith.constant 7 : i32
    %436 = arith.subi %c7_i32_155, %c1_i32_146 : i32
    %437 = arith.index_cast %436 : i32 to index
    %c0_156 = arith.constant 0 : index
    %c0_157 = arith.constant 0 : index
    %438 = vector.load %arg18[%437, %c0_156, %c0_157] : memref<8x2x128xf32, #tpu.memory_space<vmem>>, vector<1x2x128xf32>
    %439 = vector.shape_cast %438 : vector<1x2x128xf32> to vector<2x128xf32>
    %440 = vector.shape_cast %431 : vector<2x128xf32> to vector<1x2x128xf32>
    tpu.vector_store %arg18[%437, %c0_156, %c0_157], %440 {strides = array<i32>} : memref<8x2x128xf32, #tpu.memory_space<vmem>>, vector<1x2x128xf32>,
    %c2_i32_158 = arith.constant 2 : i32
    %441 = arith.index_cast %c2_i32_158 : i32 to index
    %c0_159 = arith.constant 0 : index
    %c0_160 = arith.constant 0 : index
    %442 = vector.load %arg16[%441, %c0_159, %c0_160] : memref<8x2x512xf32, #tpu.memory_space<vmem>>, vector<1x2x512xf32>
    %443 = vector.shape_cast %442 : vector<1x2x512xf32> to vector<2x512xf32>
    %444 = arith.truncf %431 : vector<2x128xf32> to vector<2x128xbf16>
    %cst_161 = arith.constant dense<0.000000e+00> : vector<2x512xf32>
    %445 = tpu.matmul %444, %358, %cst_161 {dimension_numbers = #tpu.dot_dimension_numbers<[1], [0], [0], [1], [0, 0, 1, 1], [], []>} : vector<2x128xbf16>, vector<128x512xbf16>, vector<2x512xf32> -> vector<2x512xf32>
    %446 = arith.addf %443, %445 : vector<2x512xf32>
    %447 = vector.extract_strided_slice %446 {offsets = [0, 0], sizes = [2, 128], strides = [1, 1]} : vector<2x512xf32> to vector<2x128xf32>
    %448 = arith.negf %447 : vector<2x128xf32>
    %449 = math.exp %448 : vector<2x128xf32>
    %cst_162 = arith.constant 1.000000e+00 : f32
    %450 = vector.broadcast %cst_162 : f32 to vector<2x128xf32>
    %451 = arith.addf %450, %449 : vector<2x128xf32>
    %452 = arith.divf %450, %451 : vector<2x128xf32>
    %453 = vector.extract_strided_slice %446 {offsets = [0, 128], sizes = [2, 128], strides = [1, 1]} : vector<2x512xf32> to vector<2x128xf32>
    %454 = arith.negf %453 : vector<2x128xf32>
    %455 = math.exp %454 : vector<2x128xf32>
    %cst_163 = arith.constant 1.000000e+00 : f32
    %456 = vector.broadcast %cst_163 : f32 to vector<2x128xf32>
    %457 = arith.addf %456, %455 : vector<2x128xf32>
    %458 = arith.divf %456, %457 : vector<2x128xf32>
    %459 = vector.extract_strided_slice %446 {offsets = [0, 256], sizes = [2, 128], strides = [1, 1]} : vector<2x512xf32> to vector<2x128xf32>
    %460 = math.tanh %459 : vector<2x128xf32>
    %461 = vector.extract_strided_slice %446 {offsets = [0, 384], sizes = [2, 128], strides = [1, 1]} : vector<2x512xf32> to vector<2x128xf32>
    %462 = arith.negf %461 : vector<2x128xf32>
    %463 = math.exp %462 : vector<2x128xf32>
    %cst_164 = arith.constant 1.000000e+00 : f32
    %464 = vector.broadcast %cst_164 : f32 to vector<2x128xf32>
    %465 = arith.addf %464, %463 : vector<2x128xf32>
    %466 = arith.divf %464, %465 : vector<2x128xf32>
    %467 = arith.mulf %458, %429 : vector<2x128xf32>
    %468 = arith.mulf %452, %460 : vector<2x128xf32>
    %469 = arith.addf %467, %468 : vector<2x128xf32>
    %470 = math.tanh %469 : vector<2x128xf32>
    %471 = arith.mulf %466, %470 : vector<2x128xf32>
    %472 = arith.index_cast %c2_i32_158 : i32 to index
    %c0_165 = arith.constant 0 : index
    %c0_166 = arith.constant 0 : index
    %473 = vector.load %arg17[%472, %c0_165, %c0_166] : memref<8x2x128xf32, #tpu.memory_space<vmem>>, vector<1x2x128xf32>
    %474 = vector.shape_cast %473 : vector<1x2x128xf32> to vector<2x128xf32>
    %475 = vector.shape_cast %471 : vector<2x128xf32> to vector<1x2x128xf32>
    tpu.vector_store %arg17[%472, %c0_165, %c0_166], %475 {strides = array<i32>} : memref<8x2x128xf32, #tpu.memory_space<vmem>>, vector<1x2x128xf32>,
    %c7_i32_167 = arith.constant 7 : i32
    %476 = arith.subi %c7_i32_167, %c2_i32_158 : i32
    %477 = arith.index_cast %476 : i32 to index
    %c0_168 = arith.constant 0 : index
    %c0_169 = arith.constant 0 : index
    %478 = vector.load %arg18[%477, %c0_168, %c0_169] : memref<8x2x128xf32, #tpu.memory_space<vmem>>, vector<1x2x128xf32>
    %479 = vector.shape_cast %478 : vector<1x2x128xf32> to vector<2x128xf32>
    %480 = vector.shape_cast %471 : vector<2x128xf32> to vector<1x2x128xf32>
    tpu.vector_store %arg18[%477, %c0_168, %c0_169], %480 {strides = array<i32>} : memref<8x2x128xf32, #tpu.memory_space<vmem>>, vector<1x2x128xf32>,
    %c3_i32_170 = arith.constant 3 : i32
    %481 = arith.index_cast %c3_i32_170 : i32 to index
    %c0_171 = arith.constant 0 : index
    %c0_172 = arith.constant 0 : index
    %482 = vector.load %arg16[%481, %c0_171, %c0_172] : memref<8x2x512xf32, #tpu.memory_space<vmem>>, vector<1x2x512xf32>
    %483 = vector.shape_cast %482 : vector<1x2x512xf32> to vector<2x512xf32>
    %484 = arith.truncf %471 : vector<2x128xf32> to vector<2x128xbf16>
    %cst_173 = arith.constant dense<0.000000e+00> : vector<2x512xf32>
    %485 = tpu.matmul %484, %358, %cst_173 {dimension_numbers = #tpu.dot_dimension_numbers<[1], [0], [0], [1], [0, 0, 1, 1], [], []>} : vector<2x128xbf16>, vector<128x512xbf16>, vector<2x512xf32> -> vector<2x512xf32>
    %486 = arith.addf %483, %485 : vector<2x512xf32>
    %487 = vector.extract_strided_slice %486 {offsets = [0, 0], sizes = [2, 128], strides = [1, 1]} : vector<2x512xf32> to vector<2x128xf32>
    %488 = arith.negf %487 : vector<2x128xf32>
    %489 = math.exp %488 : vector<2x128xf32>
    %cst_174 = arith.constant 1.000000e+00 : f32
    %490 = vector.broadcast %cst_174 : f32 to vector<2x128xf32>
    %491 = arith.addf %490, %489 : vector<2x128xf32>
    %492 = arith.divf %490, %491 : vector<2x128xf32>
    %493 = vector.extract_strided_slice %486 {offsets = [0, 128], sizes = [2, 128], strides = [1, 1]} : vector<2x512xf32> to vector<2x128xf32>
    %494 = arith.negf %493 : vector<2x128xf32>
    %495 = math.exp %494 : vector<2x128xf32>
    %cst_175 = arith.constant 1.000000e+00 : f32
    %496 = vector.broadcast %cst_175 : f32 to vector<2x128xf32>
    %497 = arith.addf %496, %495 : vector<2x128xf32>
    %498 = arith.divf %496, %497 : vector<2x128xf32>
    %499 = vector.extract_strided_slice %486 {offsets = [0, 256], sizes = [2, 128], strides = [1, 1]} : vector<2x512xf32> to vector<2x128xf32>
    %500 = math.tanh %499 : vector<2x128xf32>
    %501 = vector.extract_strided_slice %486 {offsets = [0, 384], sizes = [2, 128], strides = [1, 1]} : vector<2x512xf32> to vector<2x128xf32>
    %502 = arith.negf %501 : vector<2x128xf32>
    %503 = math.exp %502 : vector<2x128xf32>
    %cst_176 = arith.constant 1.000000e+00 : f32
    %504 = vector.broadcast %cst_176 : f32 to vector<2x128xf32>
    %505 = arith.addf %504, %503 : vector<2x128xf32>
    %506 = arith.divf %504, %505 : vector<2x128xf32>
    %507 = arith.mulf %498, %469 : vector<2x128xf32>
    %508 = arith.mulf %492, %500 : vector<2x128xf32>
    %509 = arith.addf %507, %508 : vector<2x128xf32>
    %510 = math.tanh %509 : vector<2x128xf32>
    %511 = arith.mulf %506, %510 : vector<2x128xf32>
    %512 = arith.index_cast %c3_i32_170 : i32 to index
    %c0_177 = arith.constant 0 : index
    %c0_178 = arith.constant 0 : index
    %513 = vector.load %arg17[%512, %c0_177, %c0_178] : memref<8x2x128xf32, #tpu.memory_space<vmem>>, vector<1x2x128xf32>
    %514 = vector.shape_cast %513 : vector<1x2x128xf32> to vector<2x128xf32>
    %515 = vector.shape_cast %511 : vector<2x128xf32> to vector<1x2x128xf32>
    tpu.vector_store %arg17[%512, %c0_177, %c0_178], %515 {strides = array<i32>} : memref<8x2x128xf32, #tpu.memory_space<vmem>>, vector<1x2x128xf32>,
    %c7_i32_179 = arith.constant 7 : i32
    %516 = arith.subi %c7_i32_179, %c3_i32_170 : i32
    %517 = arith.index_cast %516 : i32 to index
    %c0_180 = arith.constant 0 : index
    %c0_181 = arith.constant 0 : index
    %518 = vector.load %arg18[%517, %c0_180, %c0_181] : memref<8x2x128xf32, #tpu.memory_space<vmem>>, vector<1x2x128xf32>
    %519 = vector.shape_cast %518 : vector<1x2x128xf32> to vector<2x128xf32>
    %520 = vector.shape_cast %511 : vector<2x128xf32> to vector<1x2x128xf32>
    tpu.vector_store %arg18[%517, %c0_180, %c0_181], %520 {strides = array<i32>} : memref<8x2x128xf32, #tpu.memory_space<vmem>>, vector<1x2x128xf32>,
    %c4_i32_182 = arith.constant 4 : i32
    %521 = arith.index_cast %c4_i32_182 : i32 to index
    %c0_183 = arith.constant 0 : index
    %c0_184 = arith.constant 0 : index
    %522 = vector.load %arg16[%521, %c0_183, %c0_184] : memref<8x2x512xf32, #tpu.memory_space<vmem>>, vector<1x2x512xf32>
    %523 = vector.shape_cast %522 : vector<1x2x512xf32> to vector<2x512xf32>
    %524 = arith.truncf %511 : vector<2x128xf32> to vector<2x128xbf16>
    %cst_185 = arith.constant dense<0.000000e+00> : vector<2x512xf32>
    %525 = tpu.matmul %524, %358, %cst_185 {dimension_numbers = #tpu.dot_dimension_numbers<[1], [0], [0], [1], [0, 0, 1, 1], [], []>} : vector<2x128xbf16>, vector<128x512xbf16>, vector<2x512xf32> -> vector<2x512xf32>
    %526 = arith.addf %523, %525 : vector<2x512xf32>
    %527 = vector.extract_strided_slice %526 {offsets = [0, 0], sizes = [2, 128], strides = [1, 1]} : vector<2x512xf32> to vector<2x128xf32>
    %528 = arith.negf %527 : vector<2x128xf32>
    %529 = math.exp %528 : vector<2x128xf32>
    %cst_186 = arith.constant 1.000000e+00 : f32
    %530 = vector.broadcast %cst_186 : f32 to vector<2x128xf32>
    %531 = arith.addf %530, %529 : vector<2x128xf32>
    %532 = arith.divf %530, %531 : vector<2x128xf32>
    %533 = vector.extract_strided_slice %526 {offsets = [0, 128], sizes = [2, 128], strides = [1, 1]} : vector<2x512xf32> to vector<2x128xf32>
    %534 = arith.negf %533 : vector<2x128xf32>
    %535 = math.exp %534 : vector<2x128xf32>
    %cst_187 = arith.constant 1.000000e+00 : f32
    %536 = vector.broadcast %cst_187 : f32 to vector<2x128xf32>
    %537 = arith.addf %536, %535 : vector<2x128xf32>
    %538 = arith.divf %536, %537 : vector<2x128xf32>
    %539 = vector.extract_strided_slice %526 {offsets = [0, 256], sizes = [2, 128], strides = [1, 1]} : vector<2x512xf32> to vector<2x128xf32>
    %540 = math.tanh %539 : vector<2x128xf32>
    %541 = vector.extract_strided_slice %526 {offsets = [0, 384], sizes = [2, 128], strides = [1, 1]} : vector<2x512xf32> to vector<2x128xf32>
    %542 = arith.negf %541 : vector<2x128xf32>
    %543 = math.exp %542 : vector<2x128xf32>
    %cst_188 = arith.constant 1.000000e+00 : f32
    %544 = vector.broadcast %cst_188 : f32 to vector<2x128xf32>
    %545 = arith.addf %544, %543 : vector<2x128xf32>
    %546 = arith.divf %544, %545 : vector<2x128xf32>
    %547 = arith.mulf %538, %509 : vector<2x128xf32>
    %548 = arith.mulf %532, %540 : vector<2x128xf32>
    %549 = arith.addf %547, %548 : vector<2x128xf32>
    %550 = math.tanh %549 : vector<2x128xf32>
    %551 = arith.mulf %546, %550 : vector<2x128xf32>
    %552 = arith.index_cast %c4_i32_182 : i32 to index
    %c0_189 = arith.constant 0 : index
    %c0_190 = arith.constant 0 : index
    %553 = vector.load %arg17[%552, %c0_189, %c0_190] : memref<8x2x128xf32, #tpu.memory_space<vmem>>, vector<1x2x128xf32>
    %554 = vector.shape_cast %553 : vector<1x2x128xf32> to vector<2x128xf32>
    %555 = vector.shape_cast %551 : vector<2x128xf32> to vector<1x2x128xf32>
    tpu.vector_store %arg17[%552, %c0_189, %c0_190], %555 {strides = array<i32>} : memref<8x2x128xf32, #tpu.memory_space<vmem>>, vector<1x2x128xf32>,
    %c7_i32_191 = arith.constant 7 : i32
    %556 = arith.subi %c7_i32_191, %c4_i32_182 : i32
    %557 = arith.index_cast %556 : i32 to index
    %c0_192 = arith.constant 0 : index
    %c0_193 = arith.constant 0 : index
    %558 = vector.load %arg18[%557, %c0_192, %c0_193] : memref<8x2x128xf32, #tpu.memory_space<vmem>>, vector<1x2x128xf32>
    %559 = vector.shape_cast %558 : vector<1x2x128xf32> to vector<2x128xf32>
    %560 = vector.shape_cast %551 : vector<2x128xf32> to vector<1x2x128xf32>
    tpu.vector_store %arg18[%557, %c0_192, %c0_193], %560 {strides = array<i32>} : memref<8x2x128xf32, #tpu.memory_space<vmem>>, vector<1x2x128xf32>,
    %c5_i32_194 = arith.constant 5 : i32
    %561 = arith.index_cast %c5_i32_194 : i32 to index
    %c0_195 = arith.constant 0 : index
    %c0_196 = arith.constant 0 : index
    %562 = vector.load %arg16[%561, %c0_195, %c0_196] : memref<8x2x512xf32, #tpu.memory_space<vmem>>, vector<1x2x512xf32>
    %563 = vector.shape_cast %562 : vector<1x2x512xf32> to vector<2x512xf32>
    %564 = arith.truncf %551 : vector<2x128xf32> to vector<2x128xbf16>
    %cst_197 = arith.constant dense<0.000000e+00> : vector<2x512xf32>
    %565 = tpu.matmul %564, %358, %cst_197 {dimension_numbers = #tpu.dot_dimension_numbers<[1], [0], [0], [1], [0, 0, 1, 1], [], []>} : vector<2x128xbf16>, vector<128x512xbf16>, vector<2x512xf32> -> vector<2x512xf32>
    %566 = arith.addf %563, %565 : vector<2x512xf32>
    %567 = vector.extract_strided_slice %566 {offsets = [0, 0], sizes = [2, 128], strides = [1, 1]} : vector<2x512xf32> to vector<2x128xf32>
    %568 = arith.negf %567 : vector<2x128xf32>
    %569 = math.exp %568 : vector<2x128xf32>
    %cst_198 = arith.constant 1.000000e+00 : f32
    %570 = vector.broadcast %cst_198 : f32 to vector<2x128xf32>
    %571 = arith.addf %570, %569 : vector<2x128xf32>
    %572 = arith.divf %570, %571 : vector<2x128xf32>
    %573 = vector.extract_strided_slice %566 {offsets = [0, 128], sizes = [2, 128], strides = [1, 1]} : vector<2x512xf32> to vector<2x128xf32>
    %574 = arith.negf %573 : vector<2x128xf32>
    %575 = math.exp %574 : vector<2x128xf32>
    %cst_199 = arith.constant 1.000000e+00 : f32
    %576 = vector.broadcast %cst_199 : f32 to vector<2x128xf32>
    %577 = arith.addf %576, %575 : vector<2x128xf32>
    %578 = arith.divf %576, %577 : vector<2x128xf32>
    %579 = vector.extract_strided_slice %566 {offsets = [0, 256], sizes = [2, 128], strides = [1, 1]} : vector<2x512xf32> to vector<2x128xf32>
    %580 = math.tanh %579 : vector<2x128xf32>
    %581 = vector.extract_strided_slice %566 {offsets = [0, 384], sizes = [2, 128], strides = [1, 1]} : vector<2x512xf32> to vector<2x128xf32>
    %582 = arith.negf %581 : vector<2x128xf32>
    %583 = math.exp %582 : vector<2x128xf32>
    %cst_200 = arith.constant 1.000000e+00 : f32
    %584 = vector.broadcast %cst_200 : f32 to vector<2x128xf32>
    %585 = arith.addf %584, %583 : vector<2x128xf32>
    %586 = arith.divf %584, %585 : vector<2x128xf32>
    %587 = arith.mulf %578, %549 : vector<2x128xf32>
    %588 = arith.mulf %572, %580 : vector<2x128xf32>
    %589 = arith.addf %587, %588 : vector<2x128xf32>
    %590 = math.tanh %589 : vector<2x128xf32>
    %591 = arith.mulf %586, %590 : vector<2x128xf32>
    %592 = arith.index_cast %c5_i32_194 : i32 to index
    %c0_201 = arith.constant 0 : index
    %c0_202 = arith.constant 0 : index
    %593 = vector.load %arg17[%592, %c0_201, %c0_202] : memref<8x2x128xf32, #tpu.memory_space<vmem>>, vector<1x2x128xf32>
    %594 = vector.shape_cast %593 : vector<1x2x128xf32> to vector<2x128xf32>
    %595 = vector.shape_cast %591 : vector<2x128xf32> to vector<1x2x128xf32>
    tpu.vector_store %arg17[%592, %c0_201, %c0_202], %595 {strides = array<i32>} : memref<8x2x128xf32, #tpu.memory_space<vmem>>, vector<1x2x128xf32>,
    %c7_i32_203 = arith.constant 7 : i32
    %596 = arith.subi %c7_i32_203, %c5_i32_194 : i32
    %597 = arith.index_cast %596 : i32 to index
    %c0_204 = arith.constant 0 : index
    %c0_205 = arith.constant 0 : index
    %598 = vector.load %arg18[%597, %c0_204, %c0_205] : memref<8x2x128xf32, #tpu.memory_space<vmem>>, vector<1x2x128xf32>
    %599 = vector.shape_cast %598 : vector<1x2x128xf32> to vector<2x128xf32>
    %600 = vector.shape_cast %591 : vector<2x128xf32> to vector<1x2x128xf32>
    tpu.vector_store %arg18[%597, %c0_204, %c0_205], %600 {strides = array<i32>} : memref<8x2x128xf32, #tpu.memory_space<vmem>>, vector<1x2x128xf32>,
    %c6_i32_206 = arith.constant 6 : i32
    %601 = arith.index_cast %c6_i32_206 : i32 to index
    %c0_207 = arith.constant 0 : index
    %c0_208 = arith.constant 0 : index
    %602 = vector.load %arg16[%601, %c0_207, %c0_208] : memref<8x2x512xf32, #tpu.memory_space<vmem>>, vector<1x2x512xf32>
    %603 = vector.shape_cast %602 : vector<1x2x512xf32> to vector<2x512xf32>
    %604 = arith.truncf %591 : vector<2x128xf32> to vector<2x128xbf16>
    %cst_209 = arith.constant dense<0.000000e+00> : vector<2x512xf32>
    %605 = tpu.matmul %604, %358, %cst_209 {dimension_numbers = #tpu.dot_dimension_numbers<[1], [0], [0], [1], [0, 0, 1, 1], [], []>} : vector<2x128xbf16>, vector<128x512xbf16>, vector<2x512xf32> -> vector<2x512xf32>
    %606 = arith.addf %603, %605 : vector<2x512xf32>
    %607 = vector.extract_strided_slice %606 {offsets = [0, 0], sizes = [2, 128], strides = [1, 1]} : vector<2x512xf32> to vector<2x128xf32>
    %608 = arith.negf %607 : vector<2x128xf32>
    %609 = math.exp %608 : vector<2x128xf32>
    %cst_210 = arith.constant 1.000000e+00 : f32
    %610 = vector.broadcast %cst_210 : f32 to vector<2x128xf32>
    %611 = arith.addf %610, %609 : vector<2x128xf32>
    %612 = arith.divf %610, %611 : vector<2x128xf32>
    %613 = vector.extract_strided_slice %606 {offsets = [0, 128], sizes = [2, 128], strides = [1, 1]} : vector<2x512xf32> to vector<2x128xf32>
    %614 = arith.negf %613 : vector<2x128xf32>
    %615 = math.exp %614 : vector<2x128xf32>
    %cst_211 = arith.constant 1.000000e+00 : f32
    %616 = vector.broadcast %cst_211 : f32 to vector<2x128xf32>
    %617 = arith.addf %616, %615 : vector<2x128xf32>
    %618 = arith.divf %616, %617 : vector<2x128xf32>
    %619 = vector.extract_strided_slice %606 {offsets = [0, 256], sizes = [2, 128], strides = [1, 1]} : vector<2x512xf32> to vector<2x128xf32>
    %620 = math.tanh %619 : vector<2x128xf32>
    %621 = vector.extract_strided_slice %606 {offsets = [0, 384], sizes = [2, 128], strides = [1, 1]} : vector<2x512xf32> to vector<2x128xf32>
    %622 = arith.negf %621 : vector<2x128xf32>
    %623 = math.exp %622 : vector<2x128xf32>
    %cst_212 = arith.constant 1.000000e+00 : f32
    %624 = vector.broadcast %cst_212 : f32 to vector<2x128xf32>
    %625 = arith.addf %624, %623 : vector<2x128xf32>
    %626 = arith.divf %624, %625 : vector<2x128xf32>
    %627 = arith.mulf %618, %589 : vector<2x128xf32>
    %628 = arith.mulf %612, %620 : vector<2x128xf32>
    %629 = arith.addf %627, %628 : vector<2x128xf32>
    %630 = math.tanh %629 : vector<2x128xf32>
    %631 = arith.mulf %626, %630 : vector<2x128xf32>
    %632 = arith.index_cast %c6_i32_206 : i32 to index
    %c0_213 = arith.constant 0 : index
    %c0_214 = arith.constant 0 : index
    %633 = vector.load %arg17[%632, %c0_213, %c0_214] : memref<8x2x128xf32, #tpu.memory_space<vmem>>, vector<1x2x128xf32>
    %634 = vector.shape_cast %633 : vector<1x2x128xf32> to vector<2x128xf32>
    %635 = vector.shape_cast %631 : vector<2x128xf32> to vector<1x2x128xf32>
    tpu.vector_store %arg17[%632, %c0_213, %c0_214], %635 {strides = array<i32>} : memref<8x2x128xf32, #tpu.memory_space<vmem>>, vector<1x2x128xf32>,
    %c7_i32_215 = arith.constant 7 : i32
    %636 = arith.subi %c7_i32_215, %c6_i32_206 : i32
    %637 = arith.index_cast %636 : i32 to index
    %c0_216 = arith.constant 0 : index
    %c0_217 = arith.constant 0 : index
    %638 = vector.load %arg18[%637, %c0_216, %c0_217] : memref<8x2x128xf32, #tpu.memory_space<vmem>>, vector<1x2x128xf32>
    %639 = vector.shape_cast %638 : vector<1x2x128xf32> to vector<2x128xf32>
    %640 = vector.shape_cast %631 : vector<2x128xf32> to vector<1x2x128xf32>
    tpu.vector_store %arg18[%637, %c0_216, %c0_217], %640 {strides = array<i32>} : memref<8x2x128xf32, #tpu.memory_space<vmem>>, vector<1x2x128xf32>,
    %c7_i32_218 = arith.constant 7 : i32
    %641 = arith.index_cast %c7_i32_218 : i32 to index
    %c0_219 = arith.constant 0 : index
    %c0_220 = arith.constant 0 : index
    %642 = vector.load %arg16[%641, %c0_219, %c0_220] : memref<8x2x512xf32, #tpu.memory_space<vmem>>, vector<1x2x512xf32>
    %643 = vector.shape_cast %642 : vector<1x2x512xf32> to vector<2x512xf32>
    %644 = arith.truncf %631 : vector<2x128xf32> to vector<2x128xbf16>
    %cst_221 = arith.constant dense<0.000000e+00> : vector<2x512xf32>
    %645 = tpu.matmul %644, %358, %cst_221 {dimension_numbers = #tpu.dot_dimension_numbers<[1], [0], [0], [1], [0, 0, 1, 1], [], []>} : vector<2x128xbf16>, vector<128x512xbf16>, vector<2x512xf32> -> vector<2x512xf32>
    %646 = arith.addf %643, %645 : vector<2x512xf32>
    %647 = vector.extract_strided_slice %646 {offsets = [0, 0], sizes = [2, 128], strides = [1, 1]} : vector<2x512xf32> to vector<2x128xf32>
    %648 = arith.negf %647 : vector<2x128xf32>
    %649 = math.exp %648 : vector<2x128xf32>
    %cst_222 = arith.constant 1.000000e+00 : f32
    %650 = vector.broadcast %cst_222 : f32 to vector<2x128xf32>
    %651 = arith.addf %650, %649 : vector<2x128xf32>
    %652 = arith.divf %650, %651 : vector<2x128xf32>
    %653 = vector.extract_strided_slice %646 {offsets = [0, 128], sizes = [2, 128], strides = [1, 1]} : vector<2x512xf32> to vector<2x128xf32>
    %654 = arith.negf %653 : vector<2x128xf32>
    %655 = math.exp %654 : vector<2x128xf32>
    %cst_223 = arith.constant 1.000000e+00 : f32
    %656 = vector.broadcast %cst_223 : f32 to vector<2x128xf32>
    %657 = arith.addf %656, %655 : vector<2x128xf32>
    %658 = arith.divf %656, %657 : vector<2x128xf32>
    %659 = vector.extract_strided_slice %646 {offsets = [0, 256], sizes = [2, 128], strides = [1, 1]} : vector<2x512xf32> to vector<2x128xf32>
    %660 = math.tanh %659 : vector<2x128xf32>
    %661 = vector.extract_strided_slice %646 {offsets = [0, 384], sizes = [2, 128], strides = [1, 1]} : vector<2x512xf32> to vector<2x128xf32>
    %662 = arith.negf %661 : vector<2x128xf32>
    %663 = math.exp %662 : vector<2x128xf32>
    %cst_224 = arith.constant 1.000000e+00 : f32
    %664 = vector.broadcast %cst_224 : f32 to vector<2x128xf32>
    %665 = arith.addf %664, %663 : vector<2x128xf32>
    %666 = arith.divf %664, %665 : vector<2x128xf32>
    %667 = arith.mulf %658, %629 : vector<2x128xf32>
    %668 = arith.mulf %652, %660 : vector<2x128xf32>
    %669 = arith.addf %667, %668 : vector<2x128xf32>
    %670 = math.tanh %669 : vector<2x128xf32>
    %671 = arith.mulf %666, %670 : vector<2x128xf32>
    %672 = arith.index_cast %c7_i32_218 : i32 to index
    %c0_225 = arith.constant 0 : index
    %c0_226 = arith.constant 0 : index
    %673 = vector.load %arg17[%672, %c0_225, %c0_226] : memref<8x2x128xf32, #tpu.memory_space<vmem>>, vector<1x2x128xf32>
    %674 = vector.shape_cast %673 : vector<1x2x128xf32> to vector<2x128xf32>
    %675 = vector.shape_cast %671 : vector<2x128xf32> to vector<1x2x128xf32>
    tpu.vector_store %arg17[%672, %c0_225, %c0_226], %675 {strides = array<i32>} : memref<8x2x128xf32, #tpu.memory_space<vmem>>, vector<1x2x128xf32>,
    %c7_i32_227 = arith.constant 7 : i32
    %676 = arith.subi %c7_i32_227, %c7_i32_218 : i32
    %677 = arith.index_cast %676 : i32 to index
    %c0_228 = arith.constant 0 : index
    %c0_229 = arith.constant 0 : index
    %678 = vector.load %arg18[%677, %c0_228, %c0_229] : memref<8x2x128xf32, #tpu.memory_space<vmem>>, vector<1x2x128xf32>
    %679 = vector.shape_cast %678 : vector<1x2x128xf32> to vector<2x128xf32>
    %680 = vector.shape_cast %671 : vector<2x128xf32> to vector<1x2x128xf32>
    tpu.vector_store %arg18[%677, %c0_228, %c0_229], %680 {strides = array<i32>} : memref<8x2x128xf32, #tpu.memory_space<vmem>>, vector<1x2x128xf32>,
    %c8_i32_230 = arith.constant 8 : i32
    %c0_231 = arith.constant 0 : index
    %c0_232 = arith.constant 0 : index
    %c0_233 = arith.constant 0 : index
    %681 = vector.load %arg18[%c0_231, %c0_232, %c0_233] : memref<8x2x128xf32, #tpu.memory_space<vmem>>, vector<8x2x128xf32>
    %c0_234 = arith.constant 0 : index
    %c0_235 = arith.constant 0 : index
    %c0_236 = arith.constant 0 : index
    %682 = vector.load %arg17[%c0_234, %c0_235, %c0_236] : memref<8x2x128xf32, #tpu.memory_space<vmem>>, vector<8x2x128xf32>
    %683 = arith.select %2, %681, %682 : vector<8x2x128xi1>, vector<8x2x128xf32>
    %684 = vector.shape_cast %683 : vector<8x2x128xf32> to vector<16x128xf32>
    %c0_237 = arith.constant 0 : index
    %c0_238 = arith.constant 0 : index
    %685 = vector.load %arg10[%c0_237, %c0_238] : memref<128x64xf32, #tpu.memory_space<vmem>>, vector<128x64xf32>
    %cst_239 = arith.constant dense<0.000000e+00> : vector<16x64xf32>
    %686 = tpu.matmul %684, %685, %cst_239 {dimension_numbers = #tpu.dot_dimension_numbers<[1], [0], [0], [1], [0, 0, 1, 1], [], []>} : vector<16x128xf32>, vector<128x64xf32>, vector<16x64xf32> -> vector<16x64xf32>
    %c0_240 = arith.constant 0 : index
    %c0_241 = arith.constant 0 : index
    %687 = vector.load %arg11[%c0_240, %c0_241] : memref<1x64xf32, #tpu.memory_space<vmem>>, vector<1x64xf32>
    %688 = vector.broadcast %687 : vector<1x64xf32> to vector<16x64xf32>
    %689 = arith.addf %686, %688 : vector<16x64xf32>
    %690 = math.tanh %689 : vector<16x64xf32>
    %691 = vector.shape_cast %690 : vector<16x64xf32> to vector<8x2x64xf32>
    %c0_242 = arith.constant 0 : index
    %c0_243 = arith.constant 0 : index
    %692 = vector.load %arg12[%c0_242, %c0_243] : memref<1x64xf32, #tpu.memory_space<vmem>>, vector<1x64xf32>
    %693 = vector.shape_cast %692 : vector<1x64xf32> to vector<1x1x64xf32>
    %694 = vector.broadcast %693 : vector<1x1x64xf32> to vector<8x2x64xf32>
    %695 = arith.mulf %691, %694 : vector<8x2x64xf32>
    %cst_244 = arith.constant dense<0.000000e+00> : vector<8x2xf32>
    %696 = vector.multi_reduction <add>, %695, %cst_244 [2] : vector<8x2x64xf32> to vector<8x2xf32>
    %697 = vector.shape_cast %696 : vector<8x2xf32> to vector<8x2x1xf32>
    %cst_245 = arith.constant dense<0xFF800000> : vector<2x1xf32>
    %698 = vector.multi_reduction <maximumf>, %697, %cst_245 [0] : vector<8x2x1xf32> to vector<2x1xf32>
    %699 = vector.shape_cast %698 : vector<2x1xf32> to vector<1x2x1xf32>
    %700 = vector.broadcast %699 : vector<1x2x1xf32> to vector<8x2x1xf32>
    %701 = arith.subf %697, %700 : vector<8x2x1xf32>
    %702 = math.exp %701 : vector<8x2x1xf32>
    %cst_246 = arith.constant dense<0.000000e+00> : vector<2x1xf32>
    %703 = vector.multi_reduction <add>, %702, %cst_246 [0] : vector<8x2x1xf32> to vector<2x1xf32>
    %704 = vector.shape_cast %703 : vector<2x1xf32> to vector<1x2x1xf32>
    %705 = vector.broadcast %704 : vector<1x2x1xf32> to vector<8x2x1xf32>
    %706 = arith.divf %702, %705 : vector<8x2x1xf32>
    %707 = vector.broadcast %706 : vector<8x2x1xf32> to vector<8x2x128xf32>
    %708 = arith.mulf %707, %683 : vector<8x2x128xf32>
    %cst_247 = arith.constant dense<0.000000e+00> : vector<2x128xf32>
    %709 = vector.multi_reduction <add>, %708, %cst_247 [0] : vector<8x2x128xf32> to vector<2x128xf32>
    %c0_248 = arith.constant 0 : index
    %c0_249 = arith.constant 0 : index
    %710 = vector.load %arg13[%c0_248, %c0_249] : memref<128x1xf32, #tpu.memory_space<vmem>>, vector<128x1xf32>
    %cst_250 = arith.constant dense<0.000000e+00> : vector<2x1xf32>
    %711 = tpu.matmul %709, %710, %cst_250 {dimension_numbers = #tpu.dot_dimension_numbers<[1], [0], [0], [1], [0, 0, 1, 1], [], []>} : vector<2x128xf32>, vector<128x1xf32>, vector<2x1xf32> -> vector<2x1xf32>
    %c0_251 = arith.constant 0 : index
    %c0_252 = arith.constant 0 : index
    %712 = vector.load %arg14[%c0_251, %c0_252] : memref<1x1xf32, #tpu.memory_space<vmem>>, vector<1x1xf32>
    %713 = vector.broadcast %712 : vector<1x1xf32> to vector<2x1xf32>
    %714 = arith.addf %711, %713 : vector<2x1xf32>
    %c0_253 = arith.constant 0 : index
    %c0_254 = arith.constant 0 : index
    %715 = vector.load %arg15[%c0_253, %c0_254] : memref<2x1xf32, #tpu.memory_space<vmem>>, vector<2x1xf32>
    tpu.vector_store %arg15[%c0_253, %c0_254], %714 {strides = array<i32>} : memref<2x1xf32, #tpu.memory_space<vmem>>, vector<2x1xf32>,
    return
  }
}

</mosaic_0001>

<llo_original>
// kernel: stock_lstm_attention.1
$region0: #{stock_lstm_attention.1}
  #allocation0 [shape = 'u32[]', space=smem, size = 0x4, offset = 0x4, fixed_abs, tag = 'smem constant byte address 0x4 - core index']
  #allocation1 [shape = 'u32[144,128]{1,0:T(1,128)}', space=vmem, size = 0x12000, scoped, tag = 'internal scratch']
  #allocation2 [shape = 'f32[8,2,512]{2,1,0:T(2,128)}', space=vmem, size = 0x8000, scoped, tag = 'scratch operand']
  #allocation3 [shape = 'f32[8,2,128]{2,1,0:T(2,128)}', space=vmem, size = 0x2000, scoped, tag = 'scratch operand']
  #allocation4 [shape = 'f32[8,2,128]{2,1,0:T(2,128)}', space=vmem, size = 0x2000, scoped, tag = 'scratch operand']
  #allocation5 [shape = 'f32[1,1]{1,0:T(1,128)S(1)}', space=vmem, size = 0x200, scoped, tag = 'scoped memory for stock_lstm_attention.1']
  %s0 = inlined_call_operand.vmem [shape: f32[8,2,7], index: 0, kind: input, shape index: {}]
  %s1 = inlined_call_operand.vmem [shape: f32[8,2,7], index: 1, kind: input, shape index: {}]
  %s2 = inlined_call_operand.vmem [shape: f32[7,512], index: 2, kind: input, shape index: {}]
  %s3 = inlined_call_operand.vmem [shape: f32[7,512], index: 3, kind: input, shape index: {}]
  %s4 = inlined_call_operand.vmem [shape: bf16[128,512], index: 4, kind: input, shape index: {}]
  %s5 = inlined_call_operand.vmem [shape: f32[1,512], index: 5, kind: input, shape index: {}]
  %s6 = inlined_call_operand.vmem [shape: f32[128,512], index: 6, kind: input, shape index: {}]
  %s7 = inlined_call_operand.vmem [shape: f32[128,512], index: 7, kind: input, shape index: {}]
  %s8 = inlined_call_operand.vmem [shape: bf16[128,512], index: 8, kind: input, shape index: {}]
  %s9 = inlined_call_operand.vmem [shape: f32[1,512], index: 9, kind: input, shape index: {}]
  %s10 = inlined_call_operand.vmem [shape: f32[128,64], index: 10, kind: input, shape index: {}]
  %s11 = inlined_call_operand.vmem [shape: f32[1,64], index: 11, kind: input, shape index: {}]
  %s12 = inlined_call_operand.vmem [shape: f32[1,64], index: 12, kind: input, shape index: {}]
  %s13 = inlined_call_operand.vmem [shape: f32[128,1], index: 13, kind: input, shape index: {}]
  %s14 = inlined_call_operand.<no memory space> [shape: f32[1,1], index: 14, kind: input, shape index: {}]
  %s15 = inlined_call_operand.vmem [shape: f32[2,1], index: 15, kind: output, shape index: {}]
  %s16 = sld [smem:[#allocation0]]
  $region70: #{stock_lstm_attention.1} parent=0
    _
  %s18 = ssub.s32 1, %s16
  %s19 = scalar_select 0, %s18, %s16
  %v20 = vstv %s14
  %21 = vst [vmem:[#allocation5] sm:$0x1] %v20
  // Predicated region
  $region2: #{stock_lstm_attention.1} parent=0 // pred_check
    _
  $region3: #{stock_lstm_attention.1} parent=0 // pred_check_branch
    %23 = sbr.rel (0) target = $region5
  $region4: #{stock_lstm_attention.1} parent=0 // pred_region
    _
  $region5: #{stock_lstm_attention.1} parent=0 // pred_fallthru
    _
  // Predicated region
  $region6: #{stock_lstm_attention.1} parent=0 // pred_check
    _
  $region7: #{stock_lstm_attention.1} parent=0 // pred_check_branch
    %25 = sbr.rel (0) target = $region9
  $region8: #{stock_lstm_attention.1} parent=0 // pred_region
    _
  $region9: #{stock_lstm_attention.1} parent=0 // pred_fallthru
    _
  // Predicated region
  $region10: #{stock_lstm_attention.1} parent=0 // pred_check
    _
  $region11: #{stock_lstm_attention.1} parent=0 // pred_check_branch
    %27 = sbr.rel (0) target = $region13
  $region12: #{stock_lstm_attention.1} parent=0 // pred_region
    _
  $region13: #{stock_lstm_attention.1} parent=0 // pred_fallthru
    _
  // Predicated region
  $region14: #{stock_lstm_attention.1} parent=0 // pred_check
    _
  $region15: #{stock_lstm_attention.1} parent=0 // pred_check_branch
    %29 = sbr.rel (0) target = $region17
  $region16: #{stock_lstm_attention.1} parent=0 // pred_region
    _
  $region17: #{stock_lstm_attention.1} parent=0 // pred_fallthru
    _
  // Predicated region
  $region18: #{stock_lstm_attention.1} parent=0 // pred_check
    _
  $region19: #{stock_lstm_attention.1} parent=0 // pred_check_branch
    %31 = sbr.rel (0) target = $region21
  $region20: #{stock_lstm_attention.1} parent=0 // pred_region
    _
  $region21: #{stock_lstm_attention.1} parent=0 // pred_fallthru
    _
  // Predicated region
  $region22: #{stock_lstm_attention.1} parent=0 // pred_check
    _
  $region23: #{stock_lstm_attention.1} parent=0 // pred_check_branch
    %33 = sbr.rel (0) target = $region25
  $region24: #{stock_lstm_attention.1} parent=0 // pred_region
    _
  $region25: #{stock_lstm_attention.1} parent=0 // pred_fallthru
    _
  // Predicated region
  $region26: #{stock_lstm_attention.1} parent=0 // pred_check
    _
  $region27: #{stock_lstm_attention.1} parent=0 // pred_check_branch
    %35 = sbr.rel (0) target = $region29
  $region28: #{stock_lstm_attention.1} parent=0 // pred_region
    _
  $region29: #{stock_lstm_attention.1} parent=0 // pred_fallthru
    _
  // Predicated region
  $region30: #{stock_lstm_attention.1} parent=0 // pred_check
    _
  $region31: #{stock_lstm_attention.1} parent=0 // pred_check_branch
    %37 = sbr.rel (0) target = $region33
  $region32: #{stock_lstm_attention.1} parent=0 // pred_region
    _
  $region33: #{stock_lstm_attention.1} parent=0 // pred_fallthru
    _
  // Predicated region
  $region34: #{stock_lstm_attention.1} parent=0 // pred_check
    _
  $region35: #{stock_lstm_attention.1} parent=0 // pred_check_branch
    %39 = sbr.rel (0) target = $region37
  $region36: #{stock_lstm_attention.1} parent=0 // pred_region
    _
  $region37: #{stock_lstm_attention.1} parent=0 // pred_fallthru
    _
  // Predicated region
  $region38: #{stock_lstm_attention.1} parent=0 // pred_check
    _
  $region39: #{stock_lstm_attention.1} parent=0 // pred_check_branch
    %41 = sbr.rel (0) target = $region41
  $region40: #{stock_lstm_attention.1} parent=0 // pred_region
    _
  $region41: #{stock_lstm_attention.1} parent=0 // pred_fallthru
    _
  // Predicated region
  $region42: #{stock_lstm_attention.1} parent=0 // pred_check
    _
  $region43: #{stock_lstm_attention.1} parent=0 // pred_check_branch
    %43 = sbr.rel (0) target = $region45
  $region44: #{stock_lstm_attention.1} parent=0 // pred_region
    _
  $region45: #{stock_lstm_attention.1} parent=0 // pred_fallthru
    _
  // Predicated region
  $region46: #{stock_lstm_attention.1} parent=0 // pred_check
    _
  $region47: #{stock_lstm_attention.1} parent=0 // pred_check_branch
    %45 = sbr.rel (0) target = $region49
  $region48: #{stock_lstm_attention.1} parent=0 // pred_region
    _
  $region49: #{stock_lstm_attention.1} parent=0 // pred_fallthru
    _
  // Predicated region
  $region50: #{stock_lstm_attention.1} parent=0 // pred_check
    _
  $region51: #{stock_lstm_attention.1} parent=0 // pred_check_branch
    %47 = sbr.rel (0) target = $region53
  $region52: #{stock_lstm_attention.1} parent=0 // pred_region
    _
  $region53: #{stock_lstm_attention.1} parent=0 // pred_fallthru
    _
  // Predicated region
  $region54: #{stock_lstm_attention.1} parent=0 // pred_check
    _
  $region55: #{stock_lstm_attention.1} parent=0 // pred_check_branch
    %49 = sbr.rel (0) target = $region57
  $region56: #{stock_lstm_attention.1} parent=0 // pred_region
    _
  $region57: #{stock_lstm_attention.1} parent=0 // pred_fallthru
    _
  // Predicated region
  $region58: #{stock_lstm_attention.1} parent=0 // pred_check
    _
  $region59: #{stock_lstm_attention.1} parent=0 // pred_check_branch
    %51 = sbr.rel (0) target = $region61
  $region60: #{stock_lstm_attention.1} parent=0 // pred_region
    _
  $region61: #{stock_lstm_attention.1} parent=0 // pred_fallthru
    _
  %v53 = vlaneseq
  %v54 = vand.u32 %v53, 127
  %vm55 = vcmp.ge.s32.totalorder %v54, 64
  %v56 = vld [vmem:[%s0] sm:$0x3]
  %v57 = vld [vmem:[%s0 + $0x2] sm:$0x3]
  %v58 = vld [vmem:[%s0 + $0x4] sm:$0x3]
  %v59 = vld [vmem:[%s0 + $0x6] sm:$0x3]
  %v60 = vld [vmem:[%s0 + $0x8] sm:$0x3]
  %v61 = vld [vmem:[%s0 + $0xa] sm:$0x3]
  %v62 = vld [vmem:[%s0 + $0xc] sm:$0x3]
  %v63 = vld [vmem:[%s0 + $0xe] sm:$0x3]
  %v64 = vld [vmem:[%s1] sm:$0x3]
  %v65 = vld [vmem:[%s1 + $0x2] sm:$0x3]
  %v66 = vld [vmem:[%s1 + $0x4] sm:$0x3]
  %v67 = vld [vmem:[%s1 + $0x6] sm:$0x3]
  %v68 = vld [vmem:[%s1 + $0x8] sm:$0x3]
  %v69 = vld [vmem:[%s1 + $0xa] sm:$0x3]
  %v70 = vld [vmem:[%s1 + $0xc] sm:$0x3]
  %v71 = vld [vmem:[%s1 + $0xe] sm:$0x3]
  %v72 = vld [vmem:[%s2] sm:$0x7f]
  %v73 = vld [vmem:[%s2 + $0x8] sm:$0x7f]
  %v74 = vld [vmem:[%s2 + $0x10] sm:$0x7f]
  %v75 = vld [vmem:[%s2 + $0x18] sm:$0x7f]
  %v76 = vld [vmem:[%s3] sm:$0x7f]
  %v77 = vld [vmem:[%s3 + $0x8] sm:$0x7f]
  %v78 = vld [vmem:[%s3 + $0x10] sm:$0x7f]
  %v79 = vld [vmem:[%s3 + $0x18] sm:$0x7f]
  %v88 = vcombine.low %v64, %v65
  %v89 = vcombine.low %v66, %v67
  %v91 = vunpack.c.l.s4 1983009808
  %v92 = vunpack.c.0.s8 %v91
  %v93 = vlaneseq
  %v94 = vshrl.u32 %v93, 7
  %v95 = vsub.s32 %v92, %v94
  %v96 = vrot.slane %v88, %v95
  %v98 = vunpack.c.l.s4 1983009808
  %v99 = vunpack.c.0.s8 %v98
  %v100 = vlaneseq
  %v101 = vshrl.u32 %v100, 7
  %v102 = vsub.s32 %v99, %v101
  %v103 = vrot.slane %v89, %v102
  %v104 = vcombine.low %v96, %v103
  %v105 = vcombine.low %v68, %v69
  %v106 = vcombine.low %v70, %v71
  %v108 = vunpack.c.l.s4 1983009808
  %v109 = vunpack.c.0.s8 %v108
  %v110 = vlaneseq
  %v111 = vshrl.u32 %v110, 7
  %v112 = vsub.s32 %v109, %v111
  %v113 = vrot.slane %v105, %v112
  %v115 = vunpack.c.l.s4 1983009808
  %v116 = vunpack.c.0.s8 %v115
  %v117 = vlaneseq
  %v118 = vshrl.u32 %v117, 7
  %v119 = vsub.s32 %v116, %v118
  %v120 = vrot.slane %v106, %v119
  %v121 = vcombine.low %v113, %v120
  %vm122 = vcmask 56320
  %v123 = vsel %vm122, %v104, 0
  %v125 = vsel %vm122, %v121, 0
  %vm127 = vcmask 1046528
  %v129 = vsel %vm127, %v76, 0
  %v132 = vsel %vm127, %v77, 0
  %v135 = vsel %vm127, %v78, 0
  %v138 = vsel %vm127, %v79, 0
  %140 = vmatprep.subr.mxu0 %v132
  %141 = vmatpush1.msra.mxu0 %v129
  %142 = vmatprep.subr.mxu0 0.0
  %143 = vmatpush1.msra.mxu0 0.0
  %144 = vmatprep.subr.mxu0 0.0
  %145 = vmatpush1.msra.mxu0 0.0
  %146 = vmatprep.subr.mxu0 0.0
  %147 = vmatpush1.msra.mxu0 0.0
  %148 = vmatprep.subr.mxu0 0.0
  %149 = vmatpush1.msra.mxu0 0.0
  %150 = vmatprep.subr.mxu0 0.0
  %151 = vmatpush1.msra.mxu0 0.0
  %152 = vmatprep.subr.mxu0 0.0
  %153 = vmatpush1.msra.mxu0 0.0
  %154 = vmatprep.subr.mxu0 0.0
  %155 = vmatpush1.msra.mxu0 0.0
  %156 = vmatprep.subr.mxu0 0.0
  %157 = vmatpush1.msra.mxu0 0.0
  %158 = vmatprep.subr.mxu0 0.0
  %159 = vmatpush1.msra.mxu0 0.0
  %160 = vmatprep.subr.mxu0 0.0
  %161 = vmatpush1.msra.mxu0 0.0
  %162 = vmatprep.subr.mxu0 0.0
  %163 = vmatpush1.msra.mxu0 0.0
  %164 = vmatprep.subr.mxu0 0.0
  %165 = vmatpush1.msra.mxu0 0.0
  %166 = vmatprep.subr.mxu0 0.0
  %167 = vmatpush1.msra.mxu0 0.0
  %168 = vmatprep.subr.mxu0 0.0
  %169 = vmatpush1.msra.mxu0 0.0
  %170 = vmatprep.subr.mxu0 0.0
  %171 = vmatpush1.msra.mxu0 0.0
  %172 = vmatprep.subr.mxu0 0.0
  %173 = vmatpush1.msra.mxu0 0.0
  %174 = vmatprep.subr.mxu0 0.0
  %175 = vmatpush1.msra.mxu0 0.0
  %176 = vmatprep.subr.mxu0 0.0
  %177 = vmatpush1.msra.mxu0 0.0
  %178 = vmatprep.subr.mxu0 0.0
  %179 = vmatpush1.msra.mxu0 0.0
  %180 = vmatprep.subr.mxu0 0.0
  %181 = vmatpush1.msra.mxu0 0.0
  %182 = vmatprep.subr.mxu0 0.0
  %183 = vmatpush1.msra.mxu0 0.0
  %184 = vmatprep.subr.mxu0 0.0
  %185 = vmatpush1.msra.mxu0 0.0
  %186 = vmatprep.subr.mxu0 0.0
  %187 = vmatpush1.msra.mxu0 0.0
  %188 = vmatprep.subr.mxu0 0.0
  %189 = vmatpush1.msra.mxu0 0.0
  %190 = vmatprep.subr.mxu0 0.0
  %191 = vmatpush1.msra.mxu0 0.0
  %192 = vmatprep.subr.mxu0 0.0
  %193 = vmatpush1.msra.mxu0 0.0
  %194 = vmatprep.subr.mxu0 0.0
  %195 = vmatpush1.msra.mxu0 0.0
  %196 = vmatprep.subr.mxu0 0.0
  %197 = vmatpush1.msra.mxu0 0.0
  %198 = vmatprep.subr.mxu0 0.0
  %199 = vmatpush1.msra.mxu0 0.0
  %200 = vmatprep.subr.mxu0 0.0
  %201 = vmatpush1.msra.mxu0 0.0
  %202 = vmatprep.subr.mxu0 0.0
  %203 = vmatpush1.msra.mxu0 0.0
  %204 = vmatprep.mubr.f32.mxu0 0.0
  %205 = vmatmul.mubr.f32.gmra.mrb[0].mxu0 %v123
  %v206 = vpop.f32.mrb[0].mxu0
  %v207 = vadd.f32 0.0, %v206
  %v208 = vpop.f32.mrb[0].mxu0
  %v209 = vadd.f32 0.0, %v208
  %210 = vmatprep.mubr.f32.mxu0 0.0
  %211 = vmatmul.mubr.f32.gmra.mrb[0].mxu0 %v125
  %v212 = vpop.f32.mrb[0].mxu0
  %v213 = vadd.f32 0.0, %v212
  %v214 = vpop.f32.mrb[0].mxu0
  %v215 = vadd.f32 0.0, %v214
  %216 = vdwg.mxu0
  %217 = vmatprep.subr.mxu0 %v138
  %218 = vmatpush1.msra.mxu0 %v135
  %219 = vmatprep.subr.mxu0 0.0
  %220 = vmatpush1.msra.mxu0 0.0
  %221 = vmatprep.subr.mxu0 0.0
  %222 = vmatpush1.msra.mxu0 0.0
  %223 = vmatprep.subr.mxu0 0.0
  %224 = vmatpush1.msra.mxu0 0.0
  %225 = vmatprep.subr.mxu0 0.0
  %226 = vmatpush1.msra.mxu0 0.0
  %227 = vmatprep.subr.mxu0 0.0
  %228 = vmatpush1.msra.mxu0 0.0
  %229 = vmatprep.subr.mxu0 0.0
  %230 = vmatpush1.msra.mxu0 0.0
  %231 = vmatprep.subr.mxu0 0.0
  %232 = vmatpush1.msra.mxu0 0.0
  %233 = vmatprep.subr.mxu0 0.0
  %234 = vmatpush1.msra.mxu0 0.0
  %235 = vmatprep.subr.mxu0 0.0
  %236 = vmatpush1.msra.mxu0 0.0
  %237 = vmatprep.subr.mxu0 0.0
  %238 = vmatpush1.msra.mxu0 0.0
  %239 = vmatprep.subr.mxu0 0.0
  %240 = vmatpush1.msra.mxu0 0.0
  %241 = vmatprep.subr.mxu0 0.0
  %242 = vmatpush1.msra.mxu0 0.0
  %243 = vmatprep.subr.mxu0 0.0
  %244 = vmatpush1.msra.mxu0 0.0
  %245 = vmatprep.subr.mxu0 0.0
  %246 = vmatpush1.msra.mxu0 0.0
  %247 = vmatprep.subr.mxu0 0.0
  %248 = vmatpush1.msra.mxu0 0.0
  %249 = vmatprep.subr.mxu0 0.0
  %250 = vmatpush1.msra.mxu0 0.0
  %251 = vmatprep.subr.mxu0 0.0
  %252 = vmatpush1.msra.mxu0 0.0
  %253 = vmatprep.subr.mxu0 0.0
  %254 = vmatpush1.msra.mxu0 0.0
  %255 = vmatprep.subr.mxu0 0.0
  %256 = vmatpush1.msra.mxu0 0.0
  %257 = vmatprep.subr.mxu0 0.0
  %258 = vmatpush1.msra.mxu0 0.0
  %259 = vmatprep.subr.mxu0 0.0
  %260 = vmatpush1.msra.mxu0 0.0
  %261 = vmatprep.subr.mxu0 0.0
  %262 = vmatpush1.msra.mxu0 0.0
  %263 = vmatprep.subr.mxu0 0.0
  %264 = vmatpush1.msra.mxu0 0.0
  %265 = vmatprep.subr.mxu0 0.0
  %266 = vmatpush1.msra.mxu0 0.0
  %267 = vmatprep.subr.mxu0 0.0
  %268 = vmatpush1.msra.mxu0 0.0
  %269 = vmatprep.subr.mxu0 0.0
  %270 = vmatpush1.msra.mxu0 0.0
  %271 = vmatprep.subr.mxu0 0.0
  %272 = vmatpush1.msra.mxu0 0.0
  %273 = vmatprep.subr.mxu0 0.0
  %274 = vmatpush1.msra.mxu0 0.0
  %275 = vmatprep.subr.mxu0 0.0
  %276 = vmatpush1.msra.mxu0 0.0
  %277 = vmatprep.subr.mxu0 0.0
  %278 = vmatpush1.msra.mxu0 0.0
  %279 = vmatprep.subr.mxu0 0.0
  %280 = vmatpush1.msra.mxu0 0.0
  %281 = vmatprep.mubr.f32.mxu0 0.0
  %282 = vmatmul.mubr.f32.gmra.mrb[0].mxu0 %v123
  %v283 = vpop.f32.mrb[0].mxu0
  %v284 = vadd.f32 0.0, %v283
  %v285 = vpop.f32.mrb[0].mxu0
  %v286 = vadd.f32 0.0, %v285
  %287 = vmatprep.mubr.f32.mxu0 0.0
  %288 = vmatmul.mubr.f32.gmra.mrb[0].mxu0 %v125
  %v289 = vpop.f32.mrb[0].mxu0
  %v290 = vadd.f32 0.0, %v289
  %v291 = vpop.f32.mrb[0].mxu0
  %v292 = vadd.f32 0.0, %v291
  %293 = vdwg.mxu0
  %v302 = vcombine.low %v56, %v57
  %v303 = vcombine.low %v58, %v59
  %v305 = vunpack.c.l.s4 1983009808
  %v306 = vunpack.c.0.s8 %v305
  %v307 = vlaneseq
  %v308 = vshrl.u32 %v307, 7
  %v309 = vsub.s32 %v306, %v308
  %v310 = vrot.slane %v302, %v309
  %v312 = vunpack.c.l.s4 1983009808
  %v313 = vunpack.c.0.s8 %v312
  %v314 = vlaneseq
  %v315 = vshrl.u32 %v314, 7
  %v316 = vsub.s32 %v313, %v315
  %v317 = vrot.slane %v303, %v316
  %v318 = vcombine.low %v310, %v317
  %v319 = vcombine.low %v60, %v61
  %v320 = vcombine.low %v62, %v63
  %v322 = vunpack.c.l.s4 1983009808
  %v323 = vunpack.c.0.s8 %v322
  %v324 = vlaneseq
  %v325 = vshrl.u32 %v324, 7
  %v326 = vsub.s32 %v323, %v325
  %v327 = vrot.slane %v319, %v326
  %v329 = vunpack.c.l.s4 1983009808
  %v330 = vunpack.c.0.s8 %v329
  %v331 = vlaneseq
  %v332 = vshrl.u32 %v331, 7
  %v333 = vsub.s32 %v330, %v332
  %v334 = vrot.slane %v320, %v333
  %v335 = vcombine.low %v327, %v334
  %v336 = vsel %vm122, %v318, 0
  %v338 = vsel %vm122, %v335, 0
  %v341 = vsel %vm127, %v72, 0
  %v344 = vsel %vm127, %v73, 0
  %v347 = vsel %vm127, %v74, 0
  %v350 = vsel %vm127, %v75, 0
  %352 = vmatprep.subr.mxu0 %v344
  %353 = vmatpush1.msra.mxu0 %v341
  %354 = vmatprep.subr.mxu0 0.0
  %355 = vmatpush1.msra.mxu0 0.0
  %356 = vmatprep.subr.mxu0 0.0
  %357 = vmatpush1.msra.mxu0 0.0
  %358 = vmatprep.subr.mxu0 0.0
  %359 = vmatpush1.msra.mxu0 0.0
  %360 = vmatprep.subr.mxu0 0.0
  %361 = vmatpush1.msra.mxu0 0.0
  %362 = vmatprep.subr.mxu0 0.0
  %363 = vmatpush1.msra.mxu0 0.0
  %364 = vmatprep.subr.mxu0 0.0
  %365 = vmatpush1.msra.mxu0 0.0
  %366 = vmatprep.subr.mxu0 0.0
  %367 = vmatpush1.msra.mxu0 0.0
  %368 = vmatprep.subr.mxu0 0.0
  %369 = vmatpush1.msra.mxu0 0.0
  %370 = vmatprep.subr.mxu0 0.0
  %371 = vmatpush1.msra.mxu0 0.0
  %372 = vmatprep.subr.mxu0 0.0
  %373 = vmatpush1.msra.mxu0 0.0
  %374 = vmatprep.subr.mxu0 0.0
  %375 = vmatpush1.msra.mxu0 0.0
  %376 = vmatprep.subr.mxu0 0.0
  %377 = vmatpush1.msra.mxu0 0.0
  %378 = vmatprep.subr.mxu0 0.0
  %379 = vmatpush1.msra.mxu0 0.0
  %380 = vmatprep.subr.mxu0 0.0
  %381 = vmatpush1.msra.mxu0 0.0
  %382 = vmatprep.subr.mxu0 0.0
  %383 = vmatpush1.msra.mxu0 0.0
  %384 = vmatprep.subr.mxu0 0.0
  %385 = vmatpush1.msra.mxu0 0.0
  %386 = vmatprep.subr.mxu0 0.0
  %387 = vmatpush1.msra.mxu0 0.0
  %388 = vmatprep.subr.mxu0 0.0
  %389 = vmatpush1.msra.mxu0 0.0
  %390 = vmatprep.subr.mxu0 0.0
  %391 = vmatpush1.msra.mxu0 0.0
  %392 = vmatprep.subr.mxu0 0.0
  %393 = vmatpush1.msra.mxu0 0.0
  %394 = vmatprep.subr.mxu0 0.0
  %395 = vmatpush1.msra.mxu0 0.0
  %396 = vmatprep.subr.mxu0 0.0
  %397 = vmatpush1.msra.mxu0 0.0
  %398 = vmatprep.subr.mxu0 0.0
  %399 = vmatpush1.msra.mxu0 0.0
  %400 = vmatprep.subr.mxu0 0.0
  %401 = vmatpush1.msra.mxu0 0.0
  %402 = vmatprep.subr.mxu0 0.0
  %403 = vmatpush1.msra.mxu0 0.0
  %404 = vmatprep.subr.mxu0 0.0
  %405 = vmatpush1.msra.mxu0 0.0
  %406 = vmatprep.subr.mxu0 0.0
  %407 = vmatpush1.msra.mxu0 0.0
  %408 = vmatprep.subr.mxu0 0.0
  %409 = vmatpush1.msra.mxu0 0.0
  %410 = vmatprep.subr.mxu0 0.0
  %411 = vmatpush1.msra.mxu0 0.0
  %412 = vmatprep.subr.mxu0 0.0
  %413 = vmatpush1.msra.mxu0 0.0
  %414 = vmatprep.subr.mxu0 0.0
  %415 = vmatpush1.msra.mxu0 0.0
  %416 = vmatprep.mubr.f32.mxu0 0.0
  %417 = vmatmul.mubr.f32.gmra.mrb[0].mxu0 %v336
  %v418 = vpop.f32.mrb[0].mxu0
  %v419 = vadd.f32 %v207, %v418
  %v420 = vpop.f32.mrb[0].mxu0
  %v421 = vadd.f32 %v209, %v420
  %422 = vmatprep.mubr.f32.mxu0 0.0
  %423 = vmatmul.mubr.f32.gmra.mrb[0].mxu0 %v338
  %v424 = vpop.f32.mrb[0].mxu0
  %v425 = vadd.f32 %v213, %v424
  %v426 = vpop.f32.mrb[0].mxu0
  %v427 = vadd.f32 %v215, %v426
  %428 = vdwg.mxu0
  %429 = vmatprep.subr.mxu0 %v350
  %430 = vmatpush1.msra.mxu0 %v347
  %431 = vmatprep.subr.mxu0 0.0
  %432 = vmatpush1.msra.mxu0 0.0
  %433 = vmatprep.subr.mxu0 0.0
  %434 = vmatpush1.msra.mxu0 0.0
  %435 = vmatprep.subr.mxu0 0.0
  %436 = vmatpush1.msra.mxu0 0.0
  %437 = vmatprep.subr.mxu0 0.0
  %438 = vmatpush1.msra.mxu0 0.0
  %439 = vmatprep.subr.mxu0 0.0
  %440 = vmatpush1.msra.mxu0 0.0
  %441 = vmatprep.subr.mxu0 0.0
  %442 = vmatpush1.msra.mxu0 0.0
  %443 = vmatprep.subr.mxu0 0.0
  %444 = vmatpush1.msra.mxu0 0.0
  %445 = vmatprep.subr.mxu0 0.0
  %446 = vmatpush1.msra.mxu0 0.0
  %447 = vmatprep.subr.mxu0 0.0
  %448 = vmatpush1.msra.mxu0 0.0
  %449 = vmatprep.subr.mxu0 0.0
  %450 = vmatpush1.msra.mxu0 0.0
  %451 = vmatprep.subr.mxu0 0.0
  %452 = vmatpush1.msra.mxu0 0.0
  %453 = vmatprep.subr.mxu0 0.0
  %454 = vmatpush1.msra.mxu0 0.0
  %455 = vmatprep.subr.mxu0 0.0
  %456 = vmatpush1.msra.mxu0 0.0
  %457 = vmatprep.subr.mxu0 0.0
  %458 = vmatpush1.msra.mxu0 0.0
  %459 = vmatprep.subr.mxu0 0.0
  %460 = vmatpush1.msra.mxu0 0.0
  %461 = vmatprep.subr.mxu0 0.0
  %462 = vmatpush1.msra.mxu0 0.0
  %463 = vmatprep.subr.mxu0 0.0
  %464 = vmatpush1.msra.mxu0 0.0
  %465 = vmatprep.subr.mxu0 0.0
  %466 = vmatpush1.msra.mxu0 0.0
  %467 = vmatprep.subr.mxu0 0.0
  %468 = vmatpush1.msra.mxu0 0.0
  %469 = vmatprep.subr.mxu0 0.0
  %470 = vmatpush1.msra.mxu0 0.0
  %471 = vmatprep.subr.mxu0 0.0
  %472 = vmatpush1.msra.mxu0 0.0
  %473 = vmatprep.subr.mxu0 0.0
  %474 = vmatpush1.msra.mxu0 0.0
  %475 = vmatprep.subr.mxu0 0.0
  %476 = vmatpush1.msra.mxu0 0.0
  %477 = vmatprep.subr.mxu0 0.0
  %478 = vmatpush1.msra.mxu0 0.0
  %479 = vmatprep.subr.mxu0 0.0
  %480 = vmatpush1.msra.mxu0 0.0
  %481 = vmatprep.subr.mxu0 0.0
  %482 = vmatpush1.msra.mxu0 0.0
  %483 = vmatprep.subr.mxu0 0.0
  %484 = vmatpush1.msra.mxu0 0.0
  %485 = vmatprep.subr.mxu0 0.0
  %486 = vmatpush1.msra.mxu0 0.0
  %487 = vmatprep.subr.mxu0 0.0
  %488 = vmatpush1.msra.mxu0 0.0
  %489 = vmatprep.subr.mxu0 0.0
  %490 = vmatpush1.msra.mxu0 0.0
  %491 = vmatprep.subr.mxu0 0.0
  %492 = vmatpush1.msra.mxu0 0.0
  %493 = vmatprep.mubr.f32.mxu0 0.0
  %494 = vmatmul.mubr.f32.gmra.mrb[0].mxu0 %v336
  %v495 = vpop.f32.mrb[0].mxu0
  %v496 = vadd.f32 %v284, %v495
  %v497 = vpop.f32.mrb[0].mxu0
  %v498 = vadd.f32 %v286, %v497
  %499 = vmatprep.mubr.f32.mxu0 0.0
  %500 = vmatmul.mubr.f32.gmra.mrb[0].mxu0 %v338
  %v501 = vpop.f32.mrb[0].mxu0
  %v502 = vadd.f32 %v290, %v501
  %v503 = vpop.f32.mrb[0].mxu0
  %v504 = vadd.f32 %v292, %v503
  %505 = vdwg.mxu0
  %v506 = vld [vmem:[%s5] sm:$0xf]
  %v508 = vlaneseq
  %v509 = vshrl.u32 %v508, 7
  %v510 = vsub.s32 0, %v509
  %v511 = vrot.slane %v506, %v510
  %v512 = vlaneseq
  %v513 = vshrl.u32 %v512, 7
  %v514 = vsub.s32 1, %v513
  %v515 = vrot.slane %v506, %v514
  %v516 = vlaneseq
  %v517 = vshrl.u32 %v516, 7
  %v518 = vsub.s32 2, %v517
  %v519 = vrot.slane %v506, %v518
  %v520 = vlaneseq
  %v521 = vshrl.u32 %v520, 7
  %v522 = vsub.s32 3, %v521
  %v523 = vrot.slane %v506, %v522
  %v528 = vadd.f32 %v419, %v511
  %v529 = vadd.f32 %v421, %v515
  %v530 = vadd.f32 %v496, %v519
  %v531 = vadd.f32 %v498, %v523
  %v532 = vadd.f32 %v425, %v511
  %v533 = vadd.f32 %v427, %v515
  %v534 = vadd.f32 %v502, %v519
  %v535 = vadd.f32 %v504, %v523
  %v544 = vcombine.low %v528, %v529
  %v545 = vcombine.high %v528, %v529
  %v546 = vcombine.low %v530, %v531
  %v547 = vcombine.high %v530, %v531
  %v549 = vunpack.c.l.s4 1983009808
  %v550 = vunpack.c.0.s8 %v549
  %v551 = vlaneseq
  %v552 = vshrl.u32 %v551, 7
  %v553 = vsub.s32 %v550, %v552
  %v554 = vrot.slane %v544, %v553
  %v556 = vunpack.c.l.s4 1983009808
  %v557 = vunpack.c.0.s8 %v556
  %v558 = vlaneseq
  %v559 = vshrl.u32 %v558, 7
  %v560 = vsub.s32 %v557, %v559
  %v561 = vrot.slane %v545, %v560
  %v563 = vunpack.c.l.s4 1983009808
  %v564 = vunpack.c.0.s8 %v563
  %v565 = vlaneseq
  %v566 = vshrl.u32 %v565, 7
  %v567 = vsub.s32 %v564, %v566
  %v568 = vrot.slane %v546, %v567
  %v570 = vunpack.c.l.s4 1983009808
  %v571 = vunpack.c.0.s8 %v570
  %v572 = vlaneseq
  %v573 = vshrl.u32 %v572, 7
  %v574 = vsub.s32 %v571, %v573
  %v575 = vrot.slane %v547, %v574
  %v576 = vcombine.low %v554, %v568
  %v577 = vcombine.high %v554, %v568
  %v578 = vcombine.low %v561, %v575
  %v579 = vcombine.high %v561, %v575
  %v580 = vcombine.low %v532, %v533
  %v581 = vcombine.high %v532, %v533
  %v582 = vcombine.low %v534, %v535
  %v583 = vcombine.high %v534, %v535
  %v585 = vunpack.c.l.s4 1983009808
  %v586 = vunpack.c.0.s8 %v585
  %v587 = vlaneseq
  %v588 = vshrl.u32 %v587, 7
  %v589 = vsub.s32 %v586, %v588
  %v590 = vrot.slane %v580, %v589
  %v592 = vunpack.c.l.s4 1983009808
  %v593 = vunpack.c.0.s8 %v592
  %v594 = vlaneseq
  %v595 = vshrl.u32 %v594, 7
  %v596 = vsub.s32 %v593, %v595
  %v597 = vrot.slane %v581, %v596
  %v599 = vunpack.c.l.s4 1983009808
  %v600 = vunpack.c.0.s8 %v599
  %v601 = vlaneseq
  %v602 = vshrl.u32 %v601, 7
  %v603 = vsub.s32 %v600, %v602
  %v604 = vrot.slane %v582, %v603
  %v606 = vunpack.c.l.s4 1983009808
  %v607 = vunpack.c.0.s8 %v606
  %v608 = vlaneseq
  %v609 = vshrl.u32 %v608, 7
  %v610 = vsub.s32 %v607, %v609
  %v611 = vrot.slane %v583, %v610
  %v612 = vcombine.low %v590, %v604
  %v613 = vcombine.high %v590, %v604
  %v614 = vcombine.low %v597, %v611
  %v615 = vcombine.high %v597, %v611
  %624 = vst [vmem:[#allocation2] sm:$0xff] %v576
  %625 = vst [vmem:[#allocation2 + $0x8] sm:$0xff] %v577
  %626 = vst [vmem:[#allocation2 + $0x10] sm:$0xff] %v578
  %627 = vst [vmem:[#allocation2 + $0x18] sm:$0xff] %v579
  %628 = vst [vmem:[#allocation2 + $0x20] sm:$0xff] %v612
  %629 = vst [vmem:[#allocation2 + $0x28] sm:$0xff] %v613
  %630 = vst [vmem:[#allocation2 + $0x30] sm:$0xff] %v614
  %631 = vst [vmem:[#allocation2 + $0x38] sm:$0xff] %v615
  %v632 = vld [vmem:[%s4] sm:$0xff]
  %v633 = vld [vmem:[%s4 + $0x8] sm:$0xff]
  %v634 = vld [vmem:[%s4 + $0x10] sm:$0xff]
  %v635 = vld [vmem:[%s4 + $0x18] sm:$0xff]
  %v636 = vld [vmem:[%s4 + $0x20] sm:$0xff]
  %v637 = vld [vmem:[%s4 + $0x28] sm:$0xff]
  %v638 = vld [vmem:[%s4 + $0x30] sm:$0xff]
  %v639 = vld [vmem:[%s4 + $0x38] sm:$0xff]
  %v640 = vld [vmem:[%s4 + $0x40] sm:$0xff]
  %v641 = vld [vmem:[%s4 + $0x48] sm:$0xff]
  %v642 = vld [vmem:[%s4 + $0x50] sm:$0xff]
  %v643 = vld [vmem:[%s4 + $0x58] sm:$0xff]
  %v644 = vld [vmem:[%s4 + $0x60] sm:$0xff]
  %v645 = vld [vmem:[%s4 + $0x68] sm:$0xff]
  %v646 = vld [vmem:[%s4 + $0x70] sm:$0xff]
  %v647 = vld [vmem:[%s4 + $0x78] sm:$0xff]
  %v648 = vld [vmem:[%s4 + $0x80] sm:$0xff]
  %v649 = vld [vmem:[%s4 + $0x88] sm:$0xff]
  %v650 = vld [vmem:[%s4 + $0x90] sm:$0xff]
  %v651 = vld [vmem:[%s4 + $0x98] sm:$0xff]
  %v652 = vld [vmem:[%s4 + $0xa0] sm:$0xff]
  %v653 = vld [vmem:[%s4 + $0xa8] sm:$0xff]
  %v654 = vld [vmem:[%s4 + $0xb0] sm:$0xff]
  %v655 = vld [vmem:[%s4 + $0xb8] sm:$0xff]
  %v656 = vld [vmem:[%s4 + $0xc0] sm:$0xff]
  %v657 = vld [vmem:[%s4 + $0xc8] sm:$0xff]
  %v658 = vld [vmem:[%s4 + $0xd0] sm:$0xff]
  %v659 = vld [vmem:[%s4 + $0xd8] sm:$0xff]
  %v660 = vld [vmem:[%s4 + $0xe0] sm:$0xff]
  %v661 = vld [vmem:[%s4 + $0xe8] sm:$0xff]
  %v662 = vld [vmem:[%s4 + $0xf0] sm:$0xff]
  %v663 = vld [vmem:[%s4 + $0xf8] sm:$0xff]
  %v664 = vld [vmem:[#allocation2] sm:$0xff]
  %v697 = vunpack.c.l.b16 %v632
  %v698 = vunpack.c.h.b16 %v632
  %v699 = vunpack.c.l.b16 %v633
  %v700 = vunpack.c.h.b16 %v633
  %v701 = vunpack.c.l.b16 %v634
  %v702 = vunpack.c.h.b16 %v634
  %v703 = vunpack.c.l.b16 %v635
  %v704 = vunpack.c.h.b16 %v635
  %v705 = vunpack.c.l.b16 %v636
  %v706 = vunpack.c.h.b16 %v636
  %v707 = vunpack.c.l.b16 %v637
  %v708 = vunpack.c.h.b16 %v637
  %v709 = vunpack.c.l.b16 %v638
  %v710 = vunpack.c.h.b16 %v638
  %v711 = vunpack.c.l.b16 %v639
  %v712 = vunpack.c.h.b16 %v639
  %v713 = vunpack.c.l.b16 %v640
  %v714 = vunpack.c.h.b16 %v640
  %v715 = vunpack.c.l.b16 %v641
  %v716 = vunpack.c.h.b16 %v641
  %v717 = vunpack.c.l.b16 %v642
  %v718 = vunpack.c.h.b16 %v642
  %v719 = vunpack.c.l.b16 %v643
  %v720 = vunpack.c.h.b16 %v643
  %v721 = vunpack.c.l.b16 %v644
  %v722 = vunpack.c.h.b16 %v644
  %v723 = vunpack.c.l.b16 %v645
  %v724 = vunpack.c.h.b16 %v645
  %v725 = vunpack.c.l.b16 %v646
  %v726 = vunpack.c.h.b16 %v646
  %v727 = vunpack.c.l.b16 %v647
  %v728 = vunpack.c.h.b16 %v647
  %v729 = vunpack.c.l.b16 %v648
  %v730 = vunpack.c.h.b16 %v648
  %v731 = vunpack.c.l.b16 %v649
  %v732 = vunpack.c.h.b16 %v649
  %v733 = vunpack.c.l.b16 %v650
  %v734 = vunpack.c.h.b16 %v650
  %v735 = vunpack.c.l.b16 %v651
  %v736 = vunpack.c.h.b16 %v651
  %v737 = vunpack.c.l.b16 %v652
  %v738 = vunpack.c.h.b16 %v652
  %v739 = vunpack.c.l.b16 %v653
  %v740 = vunpack.c.h.b16 %v653
  %v741 = vunpack.c.l.b16 %v654
  %v742 = vunpack.c.h.b16 %v654
  %v743 = vunpack.c.l.b16 %v655
  %v744 = vunpack.c.h.b16 %v655
  %v745 = vunpack.c.l.b16 %v656
  %v746 = vunpack.c.h.b16 %v656
  %v747 = vunpack.c.l.b16 %v657
  %v748 = vunpack.c.h.b16 %v657
  %v749 = vunpack.c.l.b16 %v658
  %v750 = vunpack.c.h.b16 %v658
  %v751 = vunpack.c.l.b16 %v659
  %v752 = vunpack.c.h.b16 %v659
  %v753 = vunpack.c.l.b16 %v660
  %v754 = vunpack.c.h.b16 %v660
  %v755 = vunpack.c.l.b16 %v661
  %v756 = vunpack.c.h.b16 %v661
  %v757 = vunpack.c.l.b16 %v662
  %v758 = vunpack.c.h.b16 %v662
  %v759 = vunpack.c.l.b16 %v663
  %v760 = vunpack.c.h.b16 %v663
  %v761 = vpack.c.b16 %v701, %v697
  %v762 = vpack.c.b16 %v702, %v698
  %v763 = vpack.c.b16 %v703, %v699
  %v764 = vpack.c.b16 %v704, %v700
  %v765 = vpack.c.b16 %v709, %v705
  %v766 = vpack.c.b16 %v710, %v706
  %v767 = vpack.c.b16 %v711, %v707
  %v768 = vpack.c.b16 %v712, %v708
  %v769 = vpack.c.b16 %v717, %v713
  %v770 = vpack.c.b16 %v718, %v714
  %v771 = vpack.c.b16 %v719, %v715
  %v772 = vpack.c.b16 %v720, %v716
  %v773 = vpack.c.b16 %v725, %v721
  %v774 = vpack.c.b16 %v726, %v722
  %v775 = vpack.c.b16 %v727, %v723
  %v776 = vpack.c.b16 %v728, %v724
  %v777 = vpack.c.b16 %v733, %v729
  %v778 = vpack.c.b16 %v734, %v730
  %v779 = vpack.c.b16 %v735, %v731
  %v780 = vpack.c.b16 %v736, %v732
  %v781 = vpack.c.b16 %v741, %v737
  %v782 = vpack.c.b16 %v742, %v738
  %v783 = vpack.c.b16 %v743, %v739
  %v784 = vpack.c.b16 %v744, %v740
  %v785 = vpack.c.b16 %v749, %v745
  %v786 = vpack.c.b16 %v750, %v746
  %v787 = vpack.c.b16 %v751, %v747
  %v788 = vpack.c.b16 %v752, %v748
  %v789 = vpack.c.b16 %v757, %v753
  %v790 = vpack.c.b16 %v758, %v754
  %v791 = vpack.c.b16 %v759, %v755
  %v792 = vpack.c.b16 %v760, %v756
  %825 = vmatprep.subr.bf16.mxu0 %v762
  %826 = vmatpush1.bf16.msra.mxu0 %v761
  %827 = vmatprep.subr.bf16.mxu0 %v766
  %828 = vmatpush1.bf16.msra.mxu0 %v765
  %829 = vmatprep.subr.bf16.mxu0 %v770
  %830 = vmatpush1.bf16.msra.mxu0 %v769
  %831 = vmatprep.subr.bf16.mxu0 %v774
  %832 = vmatpush1.bf16.msra.mxu0 %v773
  %833 = vmatprep.subr.bf16.mxu0 %v778
  %834 = vmatpush1.bf16.msra.mxu0 %v777
  %835 = vmatprep.subr.bf16.mxu0 %v782
  %836 = vmatpush1.bf16.msra.mxu0 %v781
  %837 = vmatprep.subr.bf16.mxu0 %v786
  %838 = vmatpush1.bf16.msra.mxu0 %v785
  %839 = vmatprep.subr.bf16.mxu0 %v790
  %840 = vmatpush1.bf16.msra.mxu0 %v789
  %841 = vmatprep.subr.bf16.mxu0 0
  %842 = vmatpush1.bf16.msra.mxu0 0
  %843 = vmatprep.subr.bf16.mxu0 0
  %844 = vmatpush1.bf16.msra.mxu0 0
  %845 = vmatprep.subr.bf16.mxu0 0
  %846 = vmatpush1.bf16.msra.mxu0 0
  %847 = vmatprep.subr.bf16.mxu0 0
  %848 = vmatpush1.bf16.msra.mxu0 0
  %849 = vmatprep.subr.bf16.mxu0 0
  %850 = vmatpush1.bf16.msra.mxu0 0
  %851 = vmatprep.subr.bf16.mxu0 0
  %852 = vmatpush1.bf16.msra.mxu0 0
  %853 = vmatprep.subr.bf16.mxu0 0
  %854 = vmatpush1.bf16.msra.mxu0 0
  %855 = vmatprep.subr.bf16.mxu0 0
  %856 = vmatpush1.bf16.msra.mxu0 0
  %857 = vmatprep.mubr.bf16.mxu0 0
  %858 = vmatmul.mubr.bf16.gmra.mrb[0].mxu0 0
  %v859 = vpop.f32.mrb[0].mxu0
  %v860 = vadd.f32 0.0, %v859
  %v861 = vpop.f32.mrb[0].mxu0
  %v862 = vadd.f32 0.0, %v861
  %v863 = vpop.f32.mrb[0].mxu0
  %v864 = vpop.f32.mrb[0].mxu0
  %865 = vdwg.mxu0
  %866 = vmatprep.subr.bf16.mxu0 %v764
  %867 = vmatpush1.bf16.msra.mxu0 %v763
  %868 = vmatprep.subr.bf16.mxu0 %v768
  %869 = vmatpush1.bf16.msra.mxu0 %v767
  %870 = vmatprep.subr.bf16.mxu0 %v772
  %871 = vmatpush1.bf16.msra.mxu0 %v771
  %872 = vmatprep.subr.bf16.mxu0 %v776
  %873 = vmatpush1.bf16.msra.mxu0 %v775
  %874 = vmatprep.subr.bf16.mxu0 %v780
  %875 = vmatpush1.bf16.msra.mxu0 %v779
  %876 = vmatprep.subr.bf16.mxu0 %v784
  %877 = vmatpush1.bf16.msra.mxu0 %v783
  %878 = vmatprep.subr.bf16.mxu0 %v788
  %879 = vmatpush1.bf16.msra.mxu0 %v787
  %880 = vmatprep.subr.bf16.mxu0 %v792
  %881 = vmatpush1.bf16.msra.mxu0 %v791
  %882 = vmatprep.subr.bf16.mxu0 0
  %883 = vmatpush1.bf16.msra.mxu0 0
  %884 = vmatprep.subr.bf16.mxu0 0
  %885 = vmatpush1.bf16.msra.mxu0 0
  %886 = vmatprep.subr.bf16.mxu0 0
  %887 = vmatpush1.bf16.msra.mxu0 0
  %888 = vmatprep.subr.bf16.mxu0 0
  %889 = vmatpush1.bf16.msra.mxu0 0
  %890 = vmatprep.subr.bf16.mxu0 0
  %891 = vmatpush1.bf16.msra.mxu0 0
  %892 = vmatprep.subr.bf16.mxu0 0
  %893 = vmatpush1.bf16.msra.mxu0 0
  %894 = vmatprep.subr.bf16.mxu0 0
  %895 = vmatpush1.bf16.msra.mxu0 0
  %896 = vmatprep.subr.bf16.mxu0 0
  %897 = vmatpush1.bf16.msra.mxu0 0
  %898 = vmatprep.mubr.bf16.mxu0 0
  %899 = vmatmul.mubr.bf16.gmra.mrb[0].mxu0 0
  %v900 = vpop.f32.mrb[0].mxu0
  %v901 = vadd.f32 0.0, %v900
  %v902 = vpop.f32.mrb[0].mxu0
  %v903 = vadd.f32 0.0, %v902
  %v904 = vpop.f32.mrb[0].mxu0
  %v905 = vpop.f32.mrb[0].mxu0
  %906 = vdwg.mxu0
  %v911 = vcombine.low %v860, %v862
  %v912 = vcombine.low %v901, %v903
  %v914 = vunpack.c.l.s4 1983009808
  %v915 = vunpack.c.0.s8 %v914
  %v916 = vlaneseq
  %v917 = vshrl.u32 %v916, 7
  %v918 = vsub.s32 %v915, %v917
  %v919 = vrot.slane %v911, %v918
  %v921 = vunpack.c.l.s4 1983009808
  %v922 = vunpack.c.0.s8 %v921
  %v923 = vlaneseq
  %v924 = vshrl.u32 %v923, 7
  %v925 = vsub.s32 %v922, %v924
  %v926 = vrot.slane %v912, %v925
  %v927 = vcombine.low %v919, %v926
  %v929 = vadd.f32 %v664, %v927
  %v930 = vxor.u32 %v929, 2147483648
  %v931 = vmul.f32 %v930, 1.442695
  %v932 = vpow.pop %v931
  %v933 = vadd.f32 %v932, 1.0
  %v934 = vrcp.pop %v933
  %v935 = vmul.f32 1.0, %v934
  %v937 = vrot.slane %v929, 2
  %v939 = vxor.u32 %v937, 2147483648
  %v940 = vmul.f32 %v939, 1.442695
  %v941 = vpow.pop %v940
  %v942 = vadd.f32 %v941, 1.0
  %v943 = vrcp.pop %v942
  %v944 = vmul.f32 1.0, %v943
  %v945 = vrot.slane %v929, 4
  %v947 = vtanh.pop %v945
  %v948 = vrot.slane %v929, 6
  %v950 = vxor.u32 %v948, 2147483648
  %v951 = vmul.f32 %v950, 1.442695
  %v952 = vpow.pop %v951
  %v953 = vadd.f32 %v952, 1.0
  %v954 = vrcp.pop %v953
  %v955 = vmul.f32 1.0, %v954
  %v956 = vmul.f32 %v944, 0.0
  %v957 = vmul.f32 %v935, %v947
  %v958 = vadd.f32 %v956, %v957
  %v959 = vtanh.pop %v958
  %v960 = vmul.f32 %v955, %v959
  %961 = vst [vmem:[#allocation3] sm:$0x3] %v960
  %s962 = scalar_lea.vmem [#allocation4], 14
  %963 = vst [vmem:[%s962] sm:$0x3] %v960
  %s964 = scalar_lea.vmem [#allocation2], 8
  %v965 = vld [vmem:[%s964] sm:$0xff]
  %v966 = vpack.c.bf16 %v960, %v960
  %967 = vmatprep.subr.bf16.mxu0 %v762
  %968 = vmatpush1.bf16.msra.mxu0 %v761
  %969 = vmatprep.subr.bf16.mxu0 %v766
  %970 = vmatpush1.bf16.msra.mxu0 %v765
  %971 = vmatprep.subr.bf16.mxu0 %v770
  %972 = vmatpush1.bf16.msra.mxu0 %v769
  %973 = vmatprep.subr.bf16.mxu0 %v774
  %974 = vmatpush1.bf16.msra.mxu0 %v773
  %975 = vmatprep.subr.bf16.mxu0 %v778
  %976 = vmatpush1.bf16.msra.mxu0 %v777
  %977 = vmatprep.subr.bf16.mxu0 %v782
  %978 = vmatpush1.bf16.msra.mxu0 %v781
  %979 = vmatprep.subr.bf16.mxu0 %v786
  %980 = vmatpush1.bf16.msra.mxu0 %v785
  %981 = vmatprep.subr.bf16.mxu0 %v790
  %982 = vmatpush1.bf16.msra.mxu0 %v789
  %983 = vmatprep.subr.bf16.mxu0 0
  %984 = vmatpush1.bf16.msra.mxu0 0
  %985 = vmatprep.subr.bf16.mxu0 0
  %986 = vmatpush1.bf16.msra.mxu0 0
  %987 = vmatprep.subr.bf16.mxu0 0
  %988 = vmatpush1.bf16.msra.mxu0 0
  %989 = vmatprep.subr.bf16.mxu0 0
  %990 = vmatpush1.bf16.msra.mxu0 0
  %991 = vmatprep.subr.bf16.mxu0 0
  %992 = vmatpush1.bf16.msra.mxu0 0
  %993 = vmatprep.subr.bf16.mxu0 0
  %994 = vmatpush1.bf16.msra.mxu0 0
  %995 = vmatprep.subr.bf16.mxu0 0
  %996 = vmatpush1.bf16.msra.mxu0 0
  %997 = vmatprep.subr.bf16.mxu0 0
  %998 = vmatpush1.bf16.msra.mxu0 0
  %999 = vmatprep.mubr.bf16.mxu0 0
  %1000 = vmatmul.mubr.bf16.gmra.mrb[0].mxu0 %v966
  %v1001 = vpop.f32.mrb[0].mxu0
  %v1002 = vadd.f32 0.0, %v1001
  %v1003 = vpop.f32.mrb[0].mxu0
  %v1004 = vadd.f32 0.0, %v1003
  %v1005 = vpop.f32.mrb[0].mxu0
  %v1006 = vpop.f32.mrb[0].mxu0
  %1007 = vdwg.mxu0
  %1008 = vmatprep.subr.bf16.mxu0 %v764
  %1009 = vmatpush1.bf16.msra.mxu0 %v763
  %1010 = vmatprep.subr.bf16.mxu0 %v768
  %1011 = vmatpush1.bf16.msra.mxu0 %v767
  %1012 = vmatprep.subr.bf16.mxu0 %v772
  %1013 = vmatpush1.bf16.msra.mxu0 %v771
  %1014 = vmatprep.subr.bf16.mxu0 %v776
  %1015 = vmatpush1.bf16.msra.mxu0 %v775
  %1016 = vmatprep.subr.bf16.mxu0 %v780
  %1017 = vmatpush1.bf16.msra.mxu0 %v779
  %1018 = vmatprep.subr.bf16.mxu0 %v784
  %1019 = vmatpush1.bf16.msra.mxu0 %v783
  %1020 = vmatprep.subr.bf16.mxu0 %v788
  %1021 = vmatpush1.bf16.msra.mxu0 %v787
  %1022 = vmatprep.subr.bf16.mxu0 %v792
  %1023 = vmatpush1.bf16.msra.mxu0 %v791
  %1024 = vmatprep.subr.bf16.mxu0 0
  %1025 = vmatpush1.bf16.msra.mxu0 0
  %1026 = vmatprep.subr.bf16.mxu0 0
  %1027 = vmatpush1.bf16.msra.mxu0 0
  %1028 = vmatprep.subr.bf16.mxu0 0
  %1029 = vmatpush1.bf16.msra.mxu0 0
  %1030 = vmatprep.subr.bf16.mxu0 0
  %1031 = vmatpush1.bf16.msra.mxu0 0
  %1032 = vmatprep.subr.bf16.mxu0 0
  %1033 = vmatpush1.bf16.msra.mxu0 0
  %1034 = vmatprep.subr.bf16.mxu0 0
  %1035 = vmatpush1.bf16.msra.mxu0 0
  %1036 = vmatprep.subr.bf16.mxu0 0
  %1037 = vmatpush1.bf16.msra.mxu0 0
  %1038 = vmatprep.subr.bf16.mxu0 0
  %1039 = vmatpush1.bf16.msra.mxu0 0
  %1040 = vmatprep.mubr.bf16.mxu0 0
  %1041 = vmatmul.mubr.bf16.gmra.mrb[0].mxu0 %v966
  %v1042 = vpop.f32.mrb[0].mxu0
  %v1043 = vadd.f32 0.0, %v1042
  %v1044 = vpop.f32.mrb[0].mxu0
  %v1045 = vadd.f32 0.0, %v1044
  %v1046 = vpop.f32.mrb[0].mxu0
  %v1047 = vpop.f32.mrb[0].mxu0
  %1048 = vdwg.mxu0
  %v1053 = vcombine.low %v1002, %v1004
  %v1054 = vcombine.low %v1043, %v1045
  %v1056 = vunpack.c.l.s4 1983009808
  %v1057 = vunpack.c.0.s8 %v1056
  %v1058 = vlaneseq
  %v1059 = vshrl.u32 %v1058, 7
  %v1060 = vsub.s32 %v1057, %v1059
  %v1061 = vrot.slane %v1053, %v1060
  %v1063 = vunpack.c.l.s4 1983009808
  %v1064 = vunpack.c.0.s8 %v1063
  %v1065 = vlaneseq
  %v1066 = vshrl.u32 %v1065, 7
  %v1067 = vsub.s32 %v1064, %v1066
  %v1068 = vrot.slane %v1054, %v1067
  %v1069 = vcombine.low %v1061, %v1068
  %v1071 = vadd.f32 %v965, %v1069
  %v1072 = vxor.u32 %v1071, 2147483648
  %v1073 = vmul.f32 %v1072, 1.442695
  %v1074 = vpow.pop %v1073
  %v1075 = vadd.f32 %v1074, 1.0
  %v1076 = vrcp.pop %v1075
  %v1077 = vmul.f32 1.0, %v1076
  %v1079 = vrot.slane %v1071, 2
  %v1081 = vxor.u32 %v1079, 2147483648
  %v1082 = vmul.f32 %v1081, 1.442695
  %v1083 = vpow.pop %v1082
  %v1084 = vadd.f32 %v1083, 1.0
  %v1085 = vrcp.pop %v1084
  %v1086 = vmul.f32 1.0, %v1085
  %v1087 = vrot.slane %v1071, 4
  %v1089 = vtanh.pop %v1087
  %v1090 = vrot.slane %v1071, 6
  %v1092 = vxor.u32 %v1090, 2147483648
  %v1093 = vmul.f32 %v1092, 1.442695
  %v1094 = vpow.pop %v1093
  %v1095 = vadd.f32 %v1094, 1.0
  %v1096 = vrcp.pop %v1095
  %v1097 = vmul.f32 1.0, %v1096
  %v1098 = vmul.f32 %v1086, %v958
  %v1099 = vmul.f32 %v1077, %v1089
  %v1100 = vadd.f32 %v1098, %v1099
  %v1101 = vtanh.pop %v1100
  %v1102 = vmul.f32 %v1097, %v1101
  %s1103 = scalar_lea.vmem [#allocation3], 2
  %1104 = vst [vmem:[%s1103] sm:$0x3] %v1102
  %s1105 = scalar_lea.vmem [#allocation4], 12
  %1106 = vst [vmem:[%s1105] sm:$0x3] %v1102
  %s1107 = scalar_lea.vmem [#allocation2], 16
  %v1108 = vld [vmem:[%s1107] sm:$0xff]
  %v1109 = vpack.c.bf16 %v1102, %v1102
  %1110 = vmatprep.subr.bf16.mxu0 %v762
  %1111 = vmatpush1.bf16.msra.mxu0 %v761
  %1112 = vmatprep.subr.bf16.mxu0 %v766
  %1113 = vmatpush1.bf16.msra.mxu0 %v765
  %1114 = vmatprep.subr.bf16.mxu0 %v770
  %1115 = vmatpush1.bf16.msra.mxu0 %v769
  %1116 = vmatprep.subr.bf16.mxu0 %v774
  %1117 = vmatpush1.bf16.msra.mxu0 %v773
  %1118 = vmatprep.subr.bf16.mxu0 %v778
  %1119 = vmatpush1.bf16.msra.mxu0 %v777
  %1120 = vmatprep.subr.bf16.mxu0 %v782
  %1121 = vmatpush1.bf16.msra.mxu0 %v781
  %1122 = vmatprep.subr.bf16.mxu0 %v786
  %1123 = vmatpush1.bf16.msra.mxu0 %v785
  %1124 = vmatprep.subr.bf16.mxu0 %v790
  %1125 = vmatpush1.bf16.msra.mxu0 %v789
  %1126 = vmatprep.subr.bf16.mxu0 0
  %1127 = vmatpush1.bf16.msra.mxu0 0
  %1128 = vmatprep.subr.bf16.mxu0 0
  %1129 = vmatpush1.bf16.msra.mxu0 0
  %1130 = vmatprep.subr.bf16.mxu0 0
  %1131 = vmatpush1.bf16.msra.mxu0 0
  %1132 = vmatprep.subr.bf16.mxu0 0
  %1133 = vmatpush1.bf16.msra.mxu0 0
  %1134 = vmatprep.subr.bf16.mxu0 0
  %1135 = vmatpush1.bf16.msra.mxu0 0
  %1136 = vmatprep.subr.bf16.mxu0 0
  %1137 = vmatpush1.bf16.msra.mxu0 0
  %1138 = vmatprep.subr.bf16.mxu0 0
  %1139 = vmatpush1.bf16.msra.mxu0 0
  %1140 = vmatprep.subr.bf16.mxu0 0
  %1141 = vmatpush1.bf16.msra.mxu0 0
  %1142 = vmatprep.mubr.bf16.mxu0 0
  %1143 = vmatmul.mubr.bf16.gmra.mrb[0].mxu0 %v1109
  %v1144 = vpop.f32.mrb[0].mxu0
  %v1145 = vadd.f32 0.0, %v1144
  %v1146 = vpop.f32.mrb[0].mxu0
  %v1147 = vadd.f32 0.0, %v1146
  %v1148 = vpop.f32.mrb[0].mxu0
  %v1149 = vpop.f32.mrb[0].mxu0
  %1150 = vdwg.mxu0
  %1151 = vmatprep.subr.bf16.mxu0 %v764
  %1152 = vmatpush1.bf16.msra.mxu0 %v763
  %1153 = vmatprep.subr.bf16.mxu0 %v768
  %1154 = vmatpush1.bf16.msra.mxu0 %v767
  %1155 = vmatprep.subr.bf16.mxu0 %v772
  %1156 = vmatpush1.bf16.msra.mxu0 %v771
  %1157 = vmatprep.subr.bf16.mxu0 %v776
  %1158 = vmatpush1.bf16.msra.mxu0 %v775
  %1159 = vmatprep.subr.bf16.mxu0 %v780
  %1160 = vmatpush1.bf16.msra.mxu0 %v779
  %1161 = vmatprep.subr.bf16.mxu0 %v784
  %1162 = vmatpush1.bf16.msra.mxu0 %v783
  %1163 = vmatprep.subr.bf16.mxu0 %v788
  %1164 = vmatpush1.bf16.msra.mxu0 %v787
  %1165 = vmatprep.subr.bf16.mxu0 %v792
  %1166 = vmatpush1.bf16.msra.mxu0 %v791
  %1167 = vmatprep.subr.bf16.mxu0 0
  %1168 = vmatpush1.bf16.msra.mxu0 0
  %1169 = vmatprep.subr.bf16.mxu0 0
  %1170 = vmatpush1.bf16.msra.mxu0 0
  %1171 = vmatprep.subr.bf16.mxu0 0
  %1172 = vmatpush1.bf16.msra.mxu0 0
  %1173 = vmatprep.subr.bf16.mxu0 0
  %1174 = vmatpush1.bf16.msra.mxu0 0
  %1175 = vmatprep.subr.bf16.mxu0 0
  %1176 = vmatpush1.bf16.msra.mxu0 0
  %1177 = vmatprep.subr.bf16.mxu0 0
  %1178 = vmatpush1.bf16.msra.mxu0 0
  %1179 = vmatprep.subr.bf16.mxu0 0
  %1180 = vmatpush1.bf16.msra.mxu0 0
  %1181 = vmatprep.subr.bf16.mxu0 0
  %1182 = vmatpush1.bf16.msra.mxu0 0
  %1183 = vmatprep.mubr.bf16.mxu0 0
  %1184 = vmatmul.mubr.bf16.gmra.mrb[0].mxu0 %v1109
  %v1185 = vpop.f32.mrb[0].mxu0
  %v1186 = vadd.f32 0.0, %v1185
  %v1187 = vpop.f32.mrb[0].mxu0
  %v1188 = vadd.f32 0.0, %v1187
  %v1189 = vpop.f32.mrb[0].mxu0
  %v1190 = vpop.f32.mrb[0].mxu0
  %1191 = vdwg.mxu0
  %v1196 = vcombine.low %v1145, %v1147
  %v1197 = vcombine.low %v1186, %v1188
  %v1199 = vunpack.c.l.s4 1983009808
  %v1200 = vunpack.c.0.s8 %v1199
  %v1201 = vlaneseq
  %v1202 = vshrl.u32 %v1201, 7
  %v1203 = vsub.s32 %v1200, %v1202
  %v1204 = vrot.slane %v1196, %v1203
  %v1206 = vunpack.c.l.s4 1983009808
  %v1207 = vunpack.c.0.s8 %v1206
  %v1208 = vlaneseq
  %v1209 = vshrl.u32 %v1208, 7
  %v1210 = vsub.s32 %v1207, %v1209
  %v1211 = vrot.slane %v1197, %v1210
  %v1212 = vcombine.low %v1204, %v1211
  %v1214 = vadd.f32 %v1108, %v1212
  %v1215 = vxor.u32 %v1214, 2147483648
  %v1216 = vmul.f32 %v1215, 1.442695
  %v1217 = vpow.pop %v1216
  %v1218 = vadd.f32 %v1217, 1.0
  %v1219 = vrcp.pop %v1218
  %v1220 = vmul.f32 1.0, %v1219
  %v1222 = vrot.slane %v1214, 2
  %v1224 = vxor.u32 %v1222, 2147483648
  %v1225 = vmul.f32 %v1224, 1.442695
  %v1226 = vpow.pop %v1225
  %v1227 = vadd.f32 %v1226, 1.0
  %v1228 = vrcp.pop %v1227
  %v1229 = vmul.f32 1.0, %v1228
  %v1230 = vrot.slane %v1214, 4
  %v1232 = vtanh.pop %v1230
  %v1233 = vrot.slane %v1214, 6
  %v1235 = vxor.u32 %v1233, 2147483648
  %v1236 = vmul.f32 %v1235, 1.442695
  %v1237 = vpow.pop %v1236
  %v1238 = vadd.f32 %v1237, 1.0
  %v1239 = vrcp.pop %v1238
  %v1240 = vmul.f32 1.0, %v1239
  %v1241 = vmul.f32 %v1229, %v1100
  %v1242 = vmul.f32 %v1220, %v1232
  %v1243 = vadd.f32 %v1241, %v1242
  %v1244 = vtanh.pop %v1243
  %v1245 = vmul.f32 %v1240, %v1244
  %s1246 = scalar_lea.vmem [#allocation3], 4
  %1247 = vst [vmem:[%s1246] sm:$0x3] %v1245
  %s1248 = scalar_lea.vmem [#allocation4], 10
  %1249 = vst [vmem:[%s1248] sm:$0x3] %v1245
  %s1250 = scalar_lea.vmem [#allocation2], 24
  %v1251 = vld [vmem:[%s1250] sm:$0xff]
  %v1252 = vpack.c.bf16 %v1245, %v1245
  %1253 = vmatprep.subr.bf16.mxu0 %v762
  %1254 = vmatpush1.bf16.msra.mxu0 %v761
  %1255 = vmatprep.subr.bf16.mxu0 %v766
  %1256 = vmatpush1.bf16.msra.mxu0 %v765
  %1257 = vmatprep.subr.bf16.mxu0 %v770
  %1258 = vmatpush1.bf16.msra.mxu0 %v769
  %1259 = vmatprep.subr.bf16.mxu0 %v774
  %1260 = vmatpush1.bf16.msra.mxu0 %v773
  %1261 = vmatprep.subr.bf16.mxu0 %v778
  %1262 = vmatpush1.bf16.msra.mxu0 %v777
  %1263 = vmatprep.subr.bf16.mxu0 %v782
  %1264 = vmatpush1.bf16.msra.mxu0 %v781
  %1265 = vmatprep.subr.bf16.mxu0 %v786
  %1266 = vmatpush1.bf16.msra.mxu0 %v785
  %1267 = vmatprep.subr.bf16.mxu0 %v790
  %1268 = vmatpush1.bf16.msra.mxu0 %v789
  %1269 = vmatprep.subr.bf16.mxu0 0
  %1270 = vmatpush1.bf16.msra.mxu0 0
  %1271 = vmatprep.subr.bf16.mxu0 0
  %1272 = vmatpush1.bf16.msra.mxu0 0
  %1273 = vmatprep.subr.bf16.mxu0 0
  %1274 = vmatpush1.bf16.msra.mxu0 0
  %1275 = vmatprep.subr.bf16.mxu0 0
  %1276 = vmatpush1.bf16.msra.mxu0 0
  %1277 = vmatprep.subr.bf16.mxu0 0
  %1278 = vmatpush1.bf16.msra.mxu0 0
  %1279 = vmatprep.subr.bf16.mxu0 0
  %1280 = vmatpush1.bf16.msra.mxu0 0
  %1281 = vmatprep.subr.bf16.mxu0 0
  %1282 = vmatpush1.bf16.msra.mxu0 0
  %1283 = vmatprep.subr.bf16.mxu0 0
  %1284 = vmatpush1.bf16.msra.mxu0 0
  %1285 = vmatprep.mubr.bf16.mxu0 0
  %1286 = vmatmul.mubr.bf16.gmra.mrb[0].mxu0 %v1252
  %v1287 = vpop.f32.mrb[0].mxu0
  %v1288 = vadd.f32 0.0, %v1287
  %v1289 = vpop.f32.mrb[0].mxu0
  %v1290 = vadd.f32 0.0, %v1289
  %v1291 = vpop.f32.mrb[0].mxu0
  %v1292 = vpop.f32.mrb[0].mxu0
  %1293 = vdwg.mxu0
  %1294 = vmatprep.subr.bf16.mxu0 %v764
  %1295 = vmatpush1.bf16.msra.mxu0 %v763
  %1296 = vmatprep.subr.bf16.mxu0 %v768
  %1297 = vmatpush1.bf16.msra.mxu0 %v767
  %1298 = vmatprep.subr.bf16.mxu0 %v772
  %1299 = vmatpush1.bf16.msra.mxu0 %v771
  %1300 = vmatprep.subr.bf16.mxu0 %v776
  %1301 = vmatpush1.bf16.msra.mxu0 %v775
  %1302 = vmatprep.subr.bf16.mxu0 %v780
  %1303 = vmatpush1.bf16.msra.mxu0 %v779
  %1304 = vmatprep.subr.bf16.mxu0 %v784
  %1305 = vmatpush1.bf16.msra.mxu0 %v783
  %1306 = vmatprep.subr.bf16.mxu0 %v788
  %1307 = vmatpush1.bf16.msra.mxu0 %v787
  %1308 = vmatprep.subr.bf16.mxu0 %v792
  %1309 = vmatpush1.bf16.msra.mxu0 %v791
  %1310 = vmatprep.subr.bf16.mxu0 0
  %1311 = vmatpush1.bf16.msra.mxu0 0
  %1312 = vmatprep.subr.bf16.mxu0 0
  %1313 = vmatpush1.bf16.msra.mxu0 0
  %1314 = vmatprep.subr.bf16.mxu0 0
  %1315 = vmatpush1.bf16.msra.mxu0 0
  %1316 = vmatprep.subr.bf16.mxu0 0
  %1317 = vmatpush1.bf16.msra.mxu0 0
  %1318 = vmatprep.subr.bf16.mxu0 0
  %1319 = vmatpush1.bf16.msra.mxu0 0
  %1320 = vmatprep.subr.bf16.mxu0 0
  %1321 = vmatpush1.bf16.msra.mxu0 0
  %1322 = vmatprep.subr.bf16.mxu0 0
  %1323 = vmatpush1.bf16.msra.mxu0 0
  %1324 = vmatprep.subr.bf16.mxu0 0
  %1325 = vmatpush1.bf16.msra.mxu0 0
  %1326 = vmatprep.mubr.bf16.mxu0 0
  %1327 = vmatmul.mubr.bf16.gmra.mrb[0].mxu0 %v1252
  %v1328 = vpop.f32.mrb[0].mxu0
  %v1329 = vadd.f32 0.0, %v1328
  %v1330 = vpop.f32.mrb[0].mxu0
  %v1331 = vadd.f32 0.0, %v1330
  %v1332 = vpop.f32.mrb[0].mxu0
  %v1333 = vpop.f32.mrb[0].mxu0
  %1334 = vdwg.mxu0
  %v1339 = vcombine.low %v1288, %v1290
  %v1340 = vcombine.low %v1329, %v1331
  %v1342 = vunpack.c.l.s4 1983009808
  %v1343 = vunpack.c.0.s8 %v1342
  %v1344 = vlaneseq
  %v1345 = vshrl.u32 %v1344, 7
  %v1346 = vsub.s32 %v1343, %v1345
  %v1347 = vrot.slane %v1339, %v1346
  %v1349 = vunpack.c.l.s4 1983009808
  %v1350 = vunpack.c.0.s8 %v1349
  %v1351 = vlaneseq
  %v1352 = vshrl.u32 %v1351, 7
  %v1353 = vsub.s32 %v1350, %v1352
  %v1354 = vrot.slane %v1340, %v1353
  %v1355 = vcombine.low %v1347, %v1354
  %v1357 = vadd.f32 %v1251, %v1355
  %v1358 = vxor.u32 %v1357, 2147483648
  %v1359 = vmul.f32 %v1358, 1.442695
  %v1360 = vpow.pop %v1359
  %v1361 = vadd.f32 %v1360, 1.0
  %v1362 = vrcp.pop %v1361
  %v1363 = vmul.f32 1.0, %v1362
  %v1365 = vrot.slane %v1357, 2
  %v1367 = vxor.u32 %v1365, 2147483648
  %v1368 = vmul.f32 %v1367, 1.442695
  %v1369 = vpow.pop %v1368
  %v1370 = vadd.f32 %v1369, 1.0
  %v1371 = vrcp.pop %v1370
  %v1372 = vmul.f32 1.0, %v1371
  %v1373 = vrot.slane %v1357, 4
  %v1375 = vtanh.pop %v1373
  %v1376 = vrot.slane %v1357, 6
  %v1378 = vxor.u32 %v1376, 2147483648
  %v1379 = vmul.f32 %v1378, 1.442695
  %v1380 = vpow.pop %v1379
  %v1381 = vadd.f32 %v1380, 1.0
  %v1382 = vrcp.pop %v1381
  %v1383 = vmul.f32 1.0, %v1382
  %v1384 = vmul.f32 %v1372, %v1243
  %v1385 = vmul.f32 %v1363, %v1375
  %v1386 = vadd.f32 %v1384, %v1385
  %v1387 = vtanh.pop %v1386
  %v1388 = vmul.f32 %v1383, %v1387
  %s1389 = scalar_lea.vmem [#allocation3], 6
  %1390 = vst [vmem:[%s1389] sm:$0x3] %v1388
  %s1391 = scalar_lea.vmem [#allocation4], 8
  %1392 = vst [vmem:[%s1391] sm:$0x3] %v1388
  %s1393 = scalar_lea.vmem [#allocation2], 32
  %v1394 = vld [vmem:[%s1393] sm:$0xff]
  %v1395 = vpack.c.bf16 %v1388, %v1388
  %1396 = vmatprep.subr.bf16.mxu0 %v762
  %1397 = vmatpush1.bf16.msra.mxu0 %v761
  %1398 = vmatprep.subr.bf16.mxu0 %v766
  %1399 = vmatpush1.bf16.msra.mxu0 %v765
  %1400 = vmatprep.subr.bf16.mxu0 %v770
  %1401 = vmatpush1.bf16.msra.mxu0 %v769
  %1402 = vmatprep.subr.bf16.mxu0 %v774
  %1403 = vmatpush1.bf16.msra.mxu0 %v773
  %1404 = vmatprep.subr.bf16.mxu0 %v778
  %1405 = vmatpush1.bf16.msra.mxu0 %v777
  %1406 = vmatprep.subr.bf16.mxu0 %v782
  %1407 = vmatpush1.bf16.msra.mxu0 %v781
  %1408 = vmatprep.subr.bf16.mxu0 %v786
  %1409 = vmatpush1.bf16.msra.mxu0 %v785
  %1410 = vmatprep.subr.bf16.mxu0 %v790
  %1411 = vmatpush1.bf16.msra.mxu0 %v789
  %1412 = vmatprep.subr.bf16.mxu0 0
  %1413 = vmatpush1.bf16.msra.mxu0 0
  %1414 = vmatprep.subr.bf16.mxu0 0
  %1415 = vmatpush1.bf16.msra.mxu0 0
  %1416 = vmatprep.subr.bf16.mxu0 0
  %1417 = vmatpush1.bf16.msra.mxu0 0
  %1418 = vmatprep.subr.bf16.mxu0 0
  %1419 = vmatpush1.bf16.msra.mxu0 0
  %1420 = vmatprep.subr.bf16.mxu0 0
  %1421 = vmatpush1.bf16.msra.mxu0 0
  %1422 = vmatprep.subr.bf16.mxu0 0
  %1423 = vmatpush1.bf16.msra.mxu0 0
  %1424 = vmatprep.subr.bf16.mxu0 0
  %1425 = vmatpush1.bf16.msra.mxu0 0
  %1426 = vmatprep.subr.bf16.mxu0 0
  %1427 = vmatpush1.bf16.msra.mxu0 0
  %1428 = vmatprep.mubr.bf16.mxu0 0
  %1429 = vmatmul.mubr.bf16.gmra.mrb[0].mxu0 %v1395
  %v1430 = vpop.f32.mrb[0].mxu0
  %v1431 = vadd.f32 0.0, %v1430
  %v1432 = vpop.f32.mrb[0].mxu0
  %v1433 = vadd.f32 0.0, %v1432
  %v1434 = vpop.f32.mrb[0].mxu0
  %v1435 = vpop.f32.mrb[0].mxu0
  %1436 = vdwg.mxu0
  %1437 = vmatprep.subr.bf16.mxu0 %v764
  %1438 = vmatpush1.bf16.msra.mxu0 %v763
  %1439 = vmatprep.subr.bf16.mxu0 %v768
  %1440 = vmatpush1.bf16.msra.mxu0 %v767
  %1441 = vmatprep.subr.bf16.mxu0 %v772
  %1442 = vmatpush1.bf16.msra.mxu0 %v771
  %1443 = vmatprep.subr.bf16.mxu0 %v776
  %1444 = vmatpush1.bf16.msra.mxu0 %v775
  %1445 = vmatprep.subr.bf16.mxu0 %v780
  %1446 = vmatpush1.bf16.msra.mxu0 %v779
  %1447 = vmatprep.subr.bf16.mxu0 %v784
  %1448 = vmatpush1.bf16.msra.mxu0 %v783
  %1449 = vmatprep.subr.bf16.mxu0 %v788
  %1450 = vmatpush1.bf16.msra.mxu0 %v787
  %1451 = vmatprep.subr.bf16.mxu0 %v792
  %1452 = vmatpush1.bf16.msra.mxu0 %v791
  %1453 = vmatprep.subr.bf16.mxu0 0
  %1454 = vmatpush1.bf16.msra.mxu0 0
  %1455 = vmatprep.subr.bf16.mxu0 0
  %1456 = vmatpush1.bf16.msra.mxu0 0
  %1457 = vmatprep.subr.bf16.mxu0 0
  %1458 = vmatpush1.bf16.msra.mxu0 0
  %1459 = vmatprep.subr.bf16.mxu0 0
  %1460 = vmatpush1.bf16.msra.mxu0 0
  %1461 = vmatprep.subr.bf16.mxu0 0
  %1462 = vmatpush1.bf16.msra.mxu0 0
  %1463 = vmatprep.subr.bf16.mxu0 0
  %1464 = vmatpush1.bf16.msra.mxu0 0
  %1465 = vmatprep.subr.bf16.mxu0 0
  %1466 = vmatpush1.bf16.msra.mxu0 0
  %1467 = vmatprep.subr.bf16.mxu0 0
  %1468 = vmatpush1.bf16.msra.mxu0 0
  %1469 = vmatprep.mubr.bf16.mxu0 0
  %1470 = vmatmul.mubr.bf16.gmra.mrb[0].mxu0 %v1395
  %v1471 = vpop.f32.mrb[0].mxu0
  %v1472 = vadd.f32 0.0, %v1471
  %v1473 = vpop.f32.mrb[0].mxu0
  %v1474 = vadd.f32 0.0, %v1473
  %v1475 = vpop.f32.mrb[0].mxu0
  %v1476 = vpop.f32.mrb[0].mxu0
  %1477 = vdwg.mxu0
  %v1482 = vcombine.low %v1431, %v1433
  %v1483 = vcombine.low %v1472, %v1474
  %v1485 = vunpack.c.l.s4 1983009808
  %v1486 = vunpack.c.0.s8 %v1485
  %v1487 = vlaneseq
  %v1488 = vshrl.u32 %v1487, 7
  %v1489 = vsub.s32 %v1486, %v1488
  %v1490 = vrot.slane %v1482, %v1489
  %v1492 = vunpack.c.l.s4 1983009808
  %v1493 = vunpack.c.0.s8 %v1492
  %v1494 = vlaneseq
  %v1495 = vshrl.u32 %v1494, 7
  %v1496 = vsub.s32 %v1493, %v1495
  %v1497 = vrot.slane %v1483, %v1496
  %v1498 = vcombine.low %v1490, %v1497
  %v1500 = vadd.f32 %v1394, %v1498
  %v1501 = vxor.u32 %v1500, 2147483648
  %v1502 = vmul.f32 %v1501, 1.442695
  %v1503 = vpow.pop %v1502
  %v1504 = vadd.f32 %v1503, 1.0
  %v1505 = vrcp.pop %v1504
  %v1506 = vmul.f32 1.0, %v1505
  %v1508 = vrot.slane %v1500, 2
  %v1510 = vxor.u32 %v1508, 2147483648
  %v1511 = vmul.f32 %v1510, 1.442695
  %v1512 = vpow.pop %v1511
  %v1513 = vadd.f32 %v1512, 1.0
  %v1514 = vrcp.pop %v1513
  %v1515 = vmul.f32 1.0, %v1514
  %v1516 = vrot.slane %v1500, 4
  %v1518 = vtanh.pop %v1516
  %v1519 = vrot.slane %v1500, 6
  %v1521 = vxor.u32 %v1519, 2147483648
  %v1522 = vmul.f32 %v1521, 1.442695
  %v1523 = vpow.pop %v1522
  %v1524 = vadd.f32 %v1523, 1.0
  %v1525 = vrcp.pop %v1524
  %v1526 = vmul.f32 1.0, %v1525
  %v1527 = vmul.f32 %v1515, %v1386
  %v1528 = vmul.f32 %v1506, %v1518
  %v1529 = vadd.f32 %v1527, %v1528
  %v1530 = vtanh.pop %v1529
  %v1531 = vmul.f32 %v1526, %v1530
  %s1532 = scalar_lea.vmem [#allocation3], 8
  %1533 = vst [vmem:[%s1532] sm:$0x3] %v1531
  %s1534 = scalar_lea.vmem [#allocation4], 6
  %1535 = vst [vmem:[%s1534] sm:$0x3] %v1531
  %s1536 = scalar_lea.vmem [#allocation2], 40
  %v1537 = vld [vmem:[%s1536] sm:$0xff]
  %v1538 = vpack.c.bf16 %v1531, %v1531
  %1539 = vmatprep.subr.bf16.mxu0 %v762
  %1540 = vmatpush1.bf16.msra.mxu0 %v761
  %1541 = vmatprep.subr.bf16.mxu0 %v766
  %1542 = vmatpush1.bf16.msra.mxu0 %v765
  %1543 = vmatprep.subr.bf16.mxu0 %v770
  %1544 = vmatpush1.bf16.msra.mxu0 %v769
  %1545 = vmatprep.subr.bf16.mxu0 %v774
  %1546 = vmatpush1.bf16.msra.mxu0 %v773
  %1547 = vmatprep.subr.bf16.mxu0 %v778
  %1548 = vmatpush1.bf16.msra.mxu0 %v777
  %1549 = vmatprep.subr.bf16.mxu0 %v782
  %1550 = vmatpush1.bf16.msra.mxu0 %v781
  %1551 = vmatprep.subr.bf16.mxu0 %v786
  %1552 = vmatpush1.bf16.msra.mxu0 %v785
  %1553 = vmatprep.subr.bf16.mxu0 %v790
  %1554 = vmatpush1.bf16.msra.mxu0 %v789
  %1555 = vmatprep.subr.bf16.mxu0 0
  %1556 = vmatpush1.bf16.msra.mxu0 0
  %1557 = vmatprep.subr.bf16.mxu0 0
  %1558 = vmatpush1.bf16.msra.mxu0 0
  %1559 = vmatprep.subr.bf16.mxu0 0
  %1560 = vmatpush1.bf16.msra.mxu0 0
  %1561 = vmatprep.subr.bf16.mxu0 0
  %1562 = vmatpush1.bf16.msra.mxu0 0
  %1563 = vmatprep.subr.bf16.mxu0 0
  %1564 = vmatpush1.bf16.msra.mxu0 0
  %1565 = vmatprep.subr.bf16.mxu0 0
  %1566 = vmatpush1.bf16.msra.mxu0 0
  %1567 = vmatprep.subr.bf16.mxu0 0
  %1568 = vmatpush1.bf16.msra.mxu0 0
  %1569 = vmatprep.subr.bf16.mxu0 0
  %1570 = vmatpush1.bf16.msra.mxu0 0
  %1571 = vmatprep.mubr.bf16.mxu0 0
  %1572 = vmatmul.mubr.bf16.gmra.mrb[0].mxu0 %v1538
  %v1573 = vpop.f32.mrb[0].mxu0
  %v1574 = vadd.f32 0.0, %v1573
  %v1575 = vpop.f32.mrb[0].mxu0
  %v1576 = vadd.f32 0.0, %v1575
  %v1577 = vpop.f32.mrb[0].mxu0
  %v1578 = vpop.f32.mrb[0].mxu0
  %1579 = vdwg.mxu0
  %1580 = vmatprep.subr.bf16.mxu0 %v764
  %1581 = vmatpush1.bf16.msra.mxu0 %v763
  %1582 = vmatprep.subr.bf16.mxu0 %v768
  %1583 = vmatpush1.bf16.msra.mxu0 %v767
  %1584 = vmatprep.subr.bf16.mxu0 %v772
  %1585 = vmatpush1.bf16.msra.mxu0 %v771
  %1586 = vmatprep.subr.bf16.mxu0 %v776
  %1587 = vmatpush1.bf16.msra.mxu0 %v775
  %1588 = vmatprep.subr.bf16.mxu0 %v780
  %1589 = vmatpush1.bf16.msra.mxu0 %v779
  %1590 = vmatprep.subr.bf16.mxu0 %v784
  %1591 = vmatpush1.bf16.msra.mxu0 %v783
  %1592 = vmatprep.subr.bf16.mxu0 %v788
  %1593 = vmatpush1.bf16.msra.mxu0 %v787
  %1594 = vmatprep.subr.bf16.mxu0 %v792
  %1595 = vmatpush1.bf16.msra.mxu0 %v791
  %1596 = vmatprep.subr.bf16.mxu0 0
  %1597 = vmatpush1.bf16.msra.mxu0 0
  %1598 = vmatprep.subr.bf16.mxu0 0
  %1599 = vmatpush1.bf16.msra.mxu0 0
  %1600 = vmatprep.subr.bf16.mxu0 0
  %1601 = vmatpush1.bf16.msra.mxu0 0
  %1602 = vmatprep.subr.bf16.mxu0 0
  %1603 = vmatpush1.bf16.msra.mxu0 0
  %1604 = vmatprep.subr.bf16.mxu0 0
  %1605 = vmatpush1.bf16.msra.mxu0 0
  %1606 = vmatprep.subr.bf16.mxu0 0
  %1607 = vmatpush1.bf16.msra.mxu0 0
  %1608 = vmatprep.subr.bf16.mxu0 0
  %1609 = vmatpush1.bf16.msra.mxu0 0
  %1610 = vmatprep.subr.bf16.mxu0 0
  %1611 = vmatpush1.bf16.msra.mxu0 0
  %1612 = vmatprep.mubr.bf16.mxu0 0
  %1613 = vmatmul.mubr.bf16.gmra.mrb[0].mxu0 %v1538
  %v1614 = vpop.f32.mrb[0].mxu0
  %v1615 = vadd.f32 0.0, %v1614
  %v1616 = vpop.f32.mrb[0].mxu0
  %v1617 = vadd.f32 0.0, %v1616
  %v1618 = vpop.f32.mrb[0].mxu0
  %v1619 = vpop.f32.mrb[0].mxu0
  %1620 = vdwg.mxu0
  %v1625 = vcombine.low %v1574, %v1576
  %v1626 = vcombine.low %v1615, %v1617
  %v1628 = vunpack.c.l.s4 1983009808
  %v1629 = vunpack.c.0.s8 %v1628
  %v1630 = vlaneseq
  %v1631 = vshrl.u32 %v1630, 7
  %v1632 = vsub.s32 %v1629, %v1631
  %v1633 = vrot.slane %v1625, %v1632
  %v1635 = vunpack.c.l.s4 1983009808
  %v1636 = vunpack.c.0.s8 %v1635
  %v1637 = vlaneseq
  %v1638 = vshrl.u32 %v1637, 7
  %v1639 = vsub.s32 %v1636, %v1638
  %v1640 = vrot.slane %v1626, %v1639
  %v1641 = vcombine.low %v1633, %v1640
  %v1643 = vadd.f32 %v1537, %v1641
  %v1644 = vxor.u32 %v1643, 2147483648
  %v1645 = vmul.f32 %v1644, 1.442695
  %v1646 = vpow.pop %v1645
  %v1647 = vadd.f32 %v1646, 1.0
  %v1648 = vrcp.pop %v1647
  %v1649 = vmul.f32 1.0, %v1648
  %v1651 = vrot.slane %v1643, 2
  %v1653 = vxor.u32 %v1651, 2147483648
  %v1654 = vmul.f32 %v1653, 1.442695
  %v1655 = vpow.pop %v1654
  %v1656 = vadd.f32 %v1655, 1.0
  %v1657 = vrcp.pop %v1656
  %v1658 = vmul.f32 1.0, %v1657
  %v1659 = vrot.slane %v1643, 4
  %v1661 = vtanh.pop %v1659
  %v1662 = vrot.slane %v1643, 6
  %v1664 = vxor.u32 %v1662, 2147483648
  %v1665 = vmul.f32 %v1664, 1.442695
  %v1666 = vpow.pop %v1665
  %v1667 = vadd.f32 %v1666, 1.0
  %v1668 = vrcp.pop %v1667
  %v1669 = vmul.f32 1.0, %v1668
  %v1670 = vmul.f32 %v1658, %v1529
  %v1671 = vmul.f32 %v1649, %v1661
  %v1672 = vadd.f32 %v1670, %v1671
  %v1673 = vtanh.pop %v1672
  %v1674 = vmul.f32 %v1669, %v1673
  %s1675 = scalar_lea.vmem [#allocation3], 10
  %1676 = vst [vmem:[%s1675] sm:$0x3] %v1674
  %s1677 = scalar_lea.vmem [#allocation4], 4
  %1678 = vst [vmem:[%s1677] sm:$0x3] %v1674
  %s1679 = scalar_lea.vmem [#allocation2], 48
  %v1680 = vld [vmem:[%s1679] sm:$0xff]
  %v1681 = vpack.c.bf16 %v1674, %v1674
  %1682 = vmatprep.subr.bf16.mxu0 %v762
  %1683 = vmatpush1.bf16.msra.mxu0 %v761
  %1684 = vmatprep.subr.bf16.mxu0 %v766
  %1685 = vmatpush1.bf16.msra.mxu0 %v765
  %1686 = vmatprep.subr.bf16.mxu0 %v770
  %1687 = vmatpush1.bf16.msra.mxu0 %v769
  %1688 = vmatprep.subr.bf16.mxu0 %v774
  %1689 = vmatpush1.bf16.msra.mxu0 %v773
  %1690 = vmatprep.subr.bf16.mxu0 %v778
  %1691 = vmatpush1.bf16.msra.mxu0 %v777
  %1692 = vmatprep.subr.bf16.mxu0 %v782
  %1693 = vmatpush1.bf16.msra.mxu0 %v781
  %1694 = vmatprep.subr.bf16.mxu0 %v786
  %1695 = vmatpush1.bf16.msra.mxu0 %v785
  %1696 = vmatprep.subr.bf16.mxu0 %v790
  %1697 = vmatpush1.bf16.msra.mxu0 %v789
  %1698 = vmatprep.subr.bf16.mxu0 0
  %1699 = vmatpush1.bf16.msra.mxu0 0
  %1700 = vmatprep.subr.bf16.mxu0 0
  %1701 = vmatpush1.bf16.msra.mxu0 0
  %1702 = vmatprep.subr.bf16.mxu0 0
  %1703 = vmatpush1.bf16.msra.mxu0 0
  %1704 = vmatprep.subr.bf16.mxu0 0
  %1705 = vmatpush1.bf16.msra.mxu0 0
  %1706 = vmatprep.subr.bf16.mxu0 0
  %1707 = vmatpush1.bf16.msra.mxu0 0
  %1708 = vmatprep.subr.bf16.mxu0 0
  %1709 = vmatpush1.bf16.msra.mxu0 0
  %1710 = vmatprep.subr.bf16.mxu0 0
  %1711 = vmatpush1.bf16.msra.mxu0 0
  %1712 = vmatprep.subr.bf16.mxu0 0
  %1713 = vmatpush1.bf16.msra.mxu0 0
  %1714 = vmatprep.mubr.bf16.mxu0 0
  %1715 = vmatmul.mubr.bf16.gmra.mrb[0].mxu0 %v1681
  %v1716 = vpop.f32.mrb[0].mxu0
  %v1717 = vadd.f32 0.0, %v1716
  %v1718 = vpop.f32.mrb[0].mxu0
  %v1719 = vadd.f32 0.0, %v1718
  %v1720 = vpop.f32.mrb[0].mxu0
  %v1721 = vpop.f32.mrb[0].mxu0
  %1722 = vdwg.mxu0
  %1723 = vmatprep.subr.bf16.mxu0 %v764
  %1724 = vmatpush1.bf16.msra.mxu0 %v763
  %1725 = vmatprep.subr.bf16.mxu0 %v768
  %1726 = vmatpush1.bf16.msra.mxu0 %v767
  %1727 = vmatprep.subr.bf16.mxu0 %v772
  %1728 = vmatpush1.bf16.msra.mxu0 %v771
  %1729 = vmatprep.subr.bf16.mxu0 %v776
  %1730 = vmatpush1.bf16.msra.mxu0 %v775
  %1731 = vmatprep.subr.bf16.mxu0 %v780
  %1732 = vmatpush1.bf16.msra.mxu0 %v779
  %1733 = vmatprep.subr.bf16.mxu0 %v784
  %1734 = vmatpush1.bf16.msra.mxu0 %v783
  %1735 = vmatprep.subr.bf16.mxu0 %v788
  %1736 = vmatpush1.bf16.msra.mxu0 %v787
  %1737 = vmatprep.subr.bf16.mxu0 %v792
  %1738 = vmatpush1.bf16.msra.mxu0 %v791
  %1739 = vmatprep.subr.bf16.mxu0 0
  %1740 = vmatpush1.bf16.msra.mxu0 0
  %1741 = vmatprep.subr.bf16.mxu0 0
  %1742 = vmatpush1.bf16.msra.mxu0 0
  %1743 = vmatprep.subr.bf16.mxu0 0
  %1744 = vmatpush1.bf16.msra.mxu0 0
  %1745 = vmatprep.subr.bf16.mxu0 0
  %1746 = vmatpush1.bf16.msra.mxu0 0
  %1747 = vmatprep.subr.bf16.mxu0 0
  %1748 = vmatpush1.bf16.msra.mxu0 0
  %1749 = vmatprep.subr.bf16.mxu0 0
  %1750 = vmatpush1.bf16.msra.mxu0 0
  %1751 = vmatprep.subr.bf16.mxu0 0
  %1752 = vmatpush1.bf16.msra.mxu0 0
  %1753 = vmatprep.subr.bf16.mxu0 0
  %1754 = vmatpush1.bf16.msra.mxu0 0
  %1755 = vmatprep.mubr.bf16.mxu0 0
  %1756 = vmatmul.mubr.bf16.gmra.mrb[0].mxu0 %v1681
  %v1757 = vpop.f32.mrb[0].mxu0
  %v1758 = vadd.f32 0.0, %v1757
  %v1759 = vpop.f32.mrb[0].mxu0
  %v1760 = vadd.f32 0.0, %v1759
  %v1761 = vpop.f32.mrb[0].mxu0
  %v1762 = vpop.f32.mrb[0].mxu0
  %1763 = vdwg.mxu0
  %v1768 = vcombine.low %v1717, %v1719
  %v1769 = vcombine.low %v1758, %v1760
  %v1771 = vunpack.c.l.s4 1983009808
  %v1772 = vunpack.c.0.s8 %v1771
  %v1773 = vlaneseq
  %v1774 = vshrl.u32 %v1773, 7
  %v1775 = vsub.s32 %v1772, %v1774
  %v1776 = vrot.slane %v1768, %v1775
  %v1778 = vunpack.c.l.s4 1983009808
  %v1779 = vunpack.c.0.s8 %v1778
  %v1780 = vlaneseq
  %v1781 = vshrl.u32 %v1780, 7
  %v1782 = vsub.s32 %v1779, %v1781
  %v1783 = vrot.slane %v1769, %v1782
  %v1784 = vcombine.low %v1776, %v1783
  %v1786 = vadd.f32 %v1680, %v1784
  %v1787 = vxor.u32 %v1786, 2147483648
  %v1788 = vmul.f32 %v1787, 1.442695
  %v1789 = vpow.pop %v1788
  %v1790 = vadd.f32 %v1789, 1.0
  %v1791 = vrcp.pop %v1790
  %v1792 = vmul.f32 1.0, %v1791
  %v1794 = vrot.slane %v1786, 2
  %v1796 = vxor.u32 %v1794, 2147483648
  %v1797 = vmul.f32 %v1796, 1.442695
  %v1798 = vpow.pop %v1797
  %v1799 = vadd.f32 %v1798, 1.0
  %v1800 = vrcp.pop %v1799
  %v1801 = vmul.f32 1.0, %v1800
  %v1802 = vrot.slane %v1786, 4
  %v1804 = vtanh.pop %v1802
  %v1805 = vrot.slane %v1786, 6
  %v1807 = vxor.u32 %v1805, 2147483648
  %v1808 = vmul.f32 %v1807, 1.442695
  %v1809 = vpow.pop %v1808
  %v1810 = vadd.f32 %v1809, 1.0
  %v1811 = vrcp.pop %v1810
  %v1812 = vmul.f32 1.0, %v1811
  %v1813 = vmul.f32 %v1801, %v1672
  %v1814 = vmul.f32 %v1792, %v1804
  %v1815 = vadd.f32 %v1813, %v1814
  %v1816 = vtanh.pop %v1815
  %v1817 = vmul.f32 %v1812, %v1816
  %s1818 = scalar_lea.vmem [#allocation3], 12
  %1819 = vst [vmem:[%s1818] sm:$0x3] %v1817
  %s1820 = scalar_lea.vmem [#allocation4], 2
  %1821 = vst [vmem:[%s1820] sm:$0x3] %v1817
  %s1822 = scalar_lea.vmem [#allocation2], 56
  %v1823 = vld [vmem:[%s1822] sm:$0xff]
  %v1824 = vpack.c.bf16 %v1817, %v1817
  %1825 = vmatprep.subr.bf16.mxu0 %v762
  %1826 = vmatpush1.bf16.msra.mxu0 %v761
  %1827 = vmatprep.subr.bf16.mxu0 %v766
  %1828 = vmatpush1.bf16.msra.mxu0 %v765
  %1829 = vmatprep.subr.bf16.mxu0 %v770
  %1830 = vmatpush1.bf16.msra.mxu0 %v769
  %1831 = vmatprep.subr.bf16.mxu0 %v774
  %1832 = vmatpush1.bf16.msra.mxu0 %v773
  %1833 = vmatprep.subr.bf16.mxu0 %v778
  %1834 = vmatpush1.bf16.msra.mxu0 %v777
  %1835 = vmatprep.subr.bf16.mxu0 %v782
  %1836 = vmatpush1.bf16.msra.mxu0 %v781
  %1837 = vmatprep.subr.bf16.mxu0 %v786
  %1838 = vmatpush1.bf16.msra.mxu0 %v785
  %1839 = vmatprep.subr.bf16.mxu0 %v790
  %1840 = vmatpush1.bf16.msra.mxu0 %v789
  %1841 = vmatprep.subr.bf16.mxu0 0
  %1842 = vmatpush1.bf16.msra.mxu0 0
  %1843 = vmatprep.subr.bf16.mxu0 0
  %1844 = vmatpush1.bf16.msra.mxu0 0
  %1845 = vmatprep.subr.bf16.mxu0 0
  %1846 = vmatpush1.bf16.msra.mxu0 0
  %1847 = vmatprep.subr.bf16.mxu0 0
  %1848 = vmatpush1.bf16.msra.mxu0 0
  %1849 = vmatprep.subr.bf16.mxu0 0
  %1850 = vmatpush1.bf16.msra.mxu0 0
  %1851 = vmatprep.subr.bf16.mxu0 0
  %1852 = vmatpush1.bf16.msra.mxu0 0
  %1853 = vmatprep.subr.bf16.mxu0 0
  %1854 = vmatpush1.bf16.msra.mxu0 0
  %1855 = vmatprep.subr.bf16.mxu0 0
  %1856 = vmatpush1.bf16.msra.mxu0 0
  %1857 = vmatprep.mubr.bf16.mxu0 0
  %1858 = vmatmul.mubr.bf16.gmra.mrb[0].mxu0 %v1824
  %v1859 = vpop.f32.mrb[0].mxu0
  %v1860 = vadd.f32 0.0, %v1859
  %v1861 = vpop.f32.mrb[0].mxu0
  %v1862 = vadd.f32 0.0, %v1861
  %v1863 = vpop.f32.mrb[0].mxu0
  %v1864 = vpop.f32.mrb[0].mxu0
  %1865 = vdwg.mxu0
  %1866 = vmatprep.subr.bf16.mxu0 %v764
  %1867 = vmatpush1.bf16.msra.mxu0 %v763
  %1868 = vmatprep.subr.bf16.mxu0 %v768
  %1869 = vmatpush1.bf16.msra.mxu0 %v767
  %1870 = vmatprep.subr.bf16.mxu0 %v772
  %1871 = vmatpush1.bf16.msra.mxu0 %v771
  %1872 = vmatprep.subr.bf16.mxu0 %v776
  %1873 = vmatpush1.bf16.msra.mxu0 %v775
  %1874 = vmatprep.subr.bf16.mxu0 %v780
  %1875 = vmatpush1.bf16.msra.mxu0 %v779
  %1876 = vmatprep.subr.bf16.mxu0 %v784
  %1877 = vmatpush1.bf16.msra.mxu0 %v783
  %1878 = vmatprep.subr.bf16.mxu0 %v788
  %1879 = vmatpush1.bf16.msra.mxu0 %v787
  %1880 = vmatprep.subr.bf16.mxu0 %v792
  %1881 = vmatpush1.bf16.msra.mxu0 %v791
  %1882 = vmatprep.subr.bf16.mxu0 0
  %1883 = vmatpush1.bf16.msra.mxu0 0
  %1884 = vmatprep.subr.bf16.mxu0 0
  %1885 = vmatpush1.bf16.msra.mxu0 0
  %1886 = vmatprep.subr.bf16.mxu0 0
  %1887 = vmatpush1.bf16.msra.mxu0 0
  %1888 = vmatprep.subr.bf16.mxu0 0
  %1889 = vmatpush1.bf16.msra.mxu0 0
  %1890 = vmatprep.subr.bf16.mxu0 0
  %1891 = vmatpush1.bf16.msra.mxu0 0
  %1892 = vmatprep.subr.bf16.mxu0 0
  %1893 = vmatpush1.bf16.msra.mxu0 0
  %1894 = vmatprep.subr.bf16.mxu0 0
  %1895 = vmatpush1.bf16.msra.mxu0 0
  %1896 = vmatprep.subr.bf16.mxu0 0
  %1897 = vmatpush1.bf16.msra.mxu0 0
  %1898 = vmatprep.mubr.bf16.mxu0 0
  %1899 = vmatmul.mubr.bf16.gmra.mrb[0].mxu0 %v1824
  %v1900 = vpop.f32.mrb[0].mxu0
  %v1901 = vadd.f32 0.0, %v1900
  %v1902 = vpop.f32.mrb[0].mxu0
  %v1903 = vadd.f32 0.0, %v1902
  %v1904 = vpop.f32.mrb[0].mxu0
  %v1905 = vpop.f32.mrb[0].mxu0
  %1906 = vdwg.mxu0
  %v1911 = vcombine.low %v1860, %v1862
  %v1912 = vcombine.low %v1901, %v1903
  %v1914 = vunpack.c.l.s4 1983009808
  %v1915 = vunpack.c.0.s8 %v1914
  %v1916 = vlaneseq
  %v1917 = vshrl.u32 %v1916, 7
  %v1918 = vsub.s32 %v1915, %v1917
  %v1919 = vrot.slane %v1911, %v1918
  %v1921 = vunpack.c.l.s4 1983009808
  %v1922 = vunpack.c.0.s8 %v1921
  %v1923 = vlaneseq
  %v1924 = vshrl.u32 %v1923, 7
  %v1925 = vsub.s32 %v1922, %v1924
  %v1926 = vrot.slane %v1912, %v1925
  %v1927 = vcombine.low %v1919, %v1926
  %v1929 = vadd.f32 %v1823, %v1927
  %v1930 = vxor.u32 %v1929, 2147483648
  %v1931 = vmul.f32 %v1930, 1.442695
  %v1932 = vpow.pop %v1931
  %v1933 = vadd.f32 %v1932, 1.0
  %v1934 = vrcp.pop %v1933
  %v1935 = vmul.f32 1.0, %v1934
  %v1937 = vrot.slane %v1929, 2
  %v1939 = vxor.u32 %v1937, 2147483648
  %v1940 = vmul.f32 %v1939, 1.442695
  %v1941 = vpow.pop %v1940
  %v1942 = vadd.f32 %v1941, 1.0
  %v1943 = vrcp.pop %v1942
  %v1944 = vmul.f32 1.0, %v1943
  %v1945 = vrot.slane %v1929, 4
  %v1947 = vtanh.pop %v1945
  %v1948 = vrot.slane %v1929, 6
  %v1950 = vxor.u32 %v1948, 2147483648
  %v1951 = vmul.f32 %v1950, 1.442695
  %v1952 = vpow.pop %v1951
  %v1953 = vadd.f32 %v1952, 1.0
  %v1954 = vrcp.pop %v1953
  %v1955 = vmul.f32 1.0, %v1954
  %v1956 = vmul.f32 %v1944, %v1815
  %v1957 = vmul.f32 %v1935, %v1947
  %v1958 = vadd.f32 %v1956, %v1957
  %v1959 = vtanh.pop %v1958
  %v1960 = vmul.f32 %v1955, %v1959
  %s1961 = scalar_lea.vmem [#allocation3], 14
  %1962 = vst [vmem:[%s1961] sm:$0x3] %v1960
  %1963 = vst [vmem:[#allocation4] sm:$0x3] %v1960
  %v1964 = vld [vmem:[#allocation4] sm:$0x3]
  %v1965 = vld [vmem:[#allocation4 + $0x2] sm:$0x3]
  %v1966 = vld [vmem:[#allocation4 + $0x4] sm:$0x3]
  %v1967 = vld [vmem:[#allocation4 + $0x6] sm:$0x3]
  %v1968 = vld [vmem:[#allocation4 + $0x8] sm:$0x3]
  %v1969 = vld [vmem:[#allocation4 + $0xa] sm:$0x3]
  %v1970 = vld [vmem:[#allocation4 + $0xc] sm:$0x3]
  %v1971 = vld [vmem:[#allocation4 + $0xe] sm:$0x3]
  %v1972 = vld [vmem:[#allocation3] sm:$0x3]
  %v1973 = vld [vmem:[#allocation3 + $0x2] sm:$0x3]
  %v1974 = vld [vmem:[#allocation3 + $0x4] sm:$0x3]
  %v1975 = vld [vmem:[#allocation3 + $0x6] sm:$0x3]
  %v1976 = vld [vmem:[#allocation3 + $0x8] sm:$0x3]
  %v1977 = vld [vmem:[#allocation3 + $0xa] sm:$0x3]
  %v1978 = vld [vmem:[#allocation3 + $0xc] sm:$0x3]
  %v1979 = vld [vmem:[#allocation3 + $0xe] sm:$0x3]
  %v1980 = vsel %vm55, %v1964, %v1972
  %v1981 = vsel %vm55, %v1965, %v1973
  %v1982 = vsel %vm55, %v1966, %v1974
  %v1983 = vsel %vm55, %v1967, %v1975
  %v1984 = vsel %vm55, %v1968, %v1976
  %v1985 = vsel %vm55, %v1969, %v1977
  %v1986 = vsel %vm55, %v1970, %v1978
  %v1987 = vsel %vm55, %v1971, %v1979
  %v1988 = vsel %vm55, %v1972, %v1964
  %v1989 = vsel %vm55, %v1973, %v1965
  %v1990 = vsel %vm55, %v1974, %v1966
  %v1991 = vsel %vm55, %v1975, %v1967
  %v1992 = vsel %vm55, %v1976, %v1968
  %v1993 = vsel %vm55, %v1977, %v1969
  %v1994 = vsel %vm55, %v1978, %v1970
  %v1995 = vsel %vm55, %v1979, %v1971
  %v1996 = vld [vmem:[%s6] sm:$0xff]
  %v1997 = vld [vmem:[%s6 + $0x8] sm:$0xff]
  %v1998 = vld [vmem:[%s6 + $0x10] sm:$0xff]
  %v1999 = vld [vmem:[%s6 + $0x18] sm:$0xff]
  %v2000 = vld [vmem:[%s6 + $0x20] sm:$0xff]
  %v2001 = vld [vmem:[%s6 + $0x28] sm:$0xff]
  %v2002 = vld [vmem:[%s6 + $0x30] sm:$0xff]
  %v2003 = vld [vmem:[%s6 + $0x38] sm:$0xff]
  %v2004 = vld [vmem:[%s6 + $0x40] sm:$0xff]
  %v2005 = vld [vmem:[%s6 + $0x48] sm:$0xff]
  %v2006 = vld [vmem:[%s6 + $0x50] sm:$0xff]
  %v2007 = vld [vmem:[%s6 + $0x58] sm:$0xff]
  %v2008 = vld [vmem:[%s6 + $0x60] sm:$0xff]
  %v2009 = vld [vmem:[%s6 + $0x68] sm:$0xff]
  %v2010 = vld [vmem:[%s6 + $0x70] sm:$0xff]
  %v2011 = vld [vmem:[%s6 + $0x78] sm:$0xff]
  %v2012 = vld [vmem:[%s6 + $0x80] sm:$0xff]
  %v2013 = vld [vmem:[%s6 + $0x88] sm:$0xff]
  %v2014 = vld [vmem:[%s6 + $0x90] sm:$0xff]
  %v2015 = vld [vmem:[%s6 + $0x98] sm:$0xff]
  %v2016 = vld [vmem:[%s6 + $0xa0] sm:$0xff]
  %v2017 = vld [vmem:[%s6 + $0xa8] sm:$0xff]
  %v2018 = vld [vmem:[%s6 + $0xb0] sm:$0xff]
  %v2019 = vld [vmem:[%s6 + $0xb8] sm:$0xff]
  %v2020 = vld [vmem:[%s6 + $0xc0] sm:$0xff]
  %v2021 = vld [vmem:[%s6 + $0xc8] sm:$0xff]
  %v2022 = vld [vmem:[%s6 + $0xd0] sm:$0xff]
  %v2023 = vld [vmem:[%s6 + $0xd8] sm:$0xff]
  %v2024 = vld [vmem:[%s6 + $0xe0] sm:$0xff]
  %v2025 = vld [vmem:[%s6 + $0xe8] sm:$0xff]
  %v2026 = vld [vmem:[%s6 + $0xf0] sm:$0xff]
  %v2027 = vld [vmem:[%s6 + $0xf8] sm:$0xff]
  %v2028 = vld [vmem:[%s6 + $0x100] sm:$0xff]
  %v2029 = vld [vmem:[%s6 + $0x108] sm:$0xff]
  %v2030 = vld [vmem:[%s6 + $0x110] sm:$0xff]
  %v2031 = vld [vmem:[%s6 + $0x118] sm:$0xff]
  %v2032 = vld [vmem:[%s6 + $0x120] sm:$0xff]
  %v2033 = vld [vmem:[%s6 + $0x128] sm:$0xff]
  %v2034 = vld [vmem:[%s6 + $0x130] sm:$0xff]
  %v2035 = vld [vmem:[%s6 + $0x138] sm:$0xff]
  %v2036 = vld [vmem:[%s6 + $0x140] sm:$0xff]
  %v2037 = vld [vmem:[%s6 + $0x148] sm:$0xff]
  %v2038 = vld [vmem:[%s6 + $0x150] sm:$0xff]
  %v2039 = vld [vmem:[%s6 + $0x158] sm:$0xff]
  %v2040 = vld [vmem:[%s6 + $0x160] sm:$0xff]
  %v2041 = vld [vmem:[%s6 + $0x168] sm:$0xff]
  %v2042 = vld [vmem:[%s6 + $0x170] sm:$0xff]
  %v2043 = vld [vmem:[%s6 + $0x178] sm:$0xff]
  %v2044 = vld [vmem:[%s6 + $0x180] sm:$0xff]
  %v2045 = vld [vmem:[%s6 + $0x188] sm:$0xff]
  %v2046 = vld [vmem:[%s6 + $0x190] sm:$0xff]
  %v2047 = vld [vmem:[%s6 + $0x198] sm:$0xff]
  %v2048 = vld [vmem:[%s6 + $0x1a0] sm:$0xff]
  %v2049 = vld [vmem:[%s6 + $0x1a8] sm:$0xff]
  %v2050 = vld [vmem:[%s6 + $0x1b0] sm:$0xff]
  %v2051 = vld [vmem:[%s6 + $0x1b8] sm:$0xff]
  %v2052 = vld [vmem:[%s6 + $0x1c0] sm:$0xff]
  %v2053 = vld [vmem:[%s6 + $0x1c8] sm:$0xff]
  %v2054 = vld [vmem:[%s6 + $0x1d0] sm:$0xff]
  %v2055 = vld [vmem:[%s6 + $0x1d8] sm:$0xff]
  %v2056 = vld [vmem:[%s6 + $0x1e0] sm:$0xff]
  %v2057 = vld [vmem:[%s6 + $0x1e8] sm:$0xff]
  %v2058 = vld [vmem:[%s6 + $0x1f0] sm:$0xff]
  %v2059 = vld [vmem:[%s6 + $0x1f8] sm:$0xff]
  %v2060 = vld [vmem:[%s7] sm:$0xff]
  %v2061 = vld [vmem:[%s7 + $0x8] sm:$0xff]
  %v2062 = vld [vmem:[%s7 + $0x10] sm:$0xff]
  %v2063 = vld [vmem:[%s7 + $0x18] sm:$0xff]
  %v2064 = vld [vmem:[%s7 + $0x20] sm:$0xff]
  %v2065 = vld [vmem:[%s7 + $0x28] sm:$0xff]
  %v2066 = vld [vmem:[%s7 + $0x30] sm:$0xff]
  %v2067 = vld [vmem:[%s7 + $0x38] sm:$0xff]
  %v2068 = vld [vmem:[%s7 + $0x40] sm:$0xff]
  %v2069 = vld [vmem:[%s7 + $0x48] sm:$0xff]
  %v2070 = vld [vmem:[%s7 + $0x50] sm:$0xff]
  %v2071 = vld [vmem:[%s7 + $0x58] sm:$0xff]
  %v2072 = vld [vmem:[%s7 + $0x60] sm:$0xff]
  %v2073 = vld [vmem:[%s7 + $0x68] sm:$0xff]
  %v2074 = vld [vmem:[%s7 + $0x70] sm:$0xff]
  %v2075 = vld [vmem:[%s7 + $0x78] sm:$0xff]
  %v2076 = vld [vmem:[%s7 + $0x80] sm:$0xff]
  %v2077 = vld [vmem:[%s7 + $0x88] sm:$0xff]
  %v2078 = vld [vmem:[%s7 + $0x90] sm:$0xff]
  %v2079 = vld [vmem:[%s7 + $0x98] sm:$0xff]
  %v2080 = vld [vmem:[%s7 + $0xa0] sm:$0xff]
  %v2081 = vld [vmem:[%s7 + $0xa8] sm:$0xff]
  %v2082 = vld [vmem:[%s7 + $0xb0] sm:$0xff]
  %v2083 = vld [vmem:[%s7 + $0xb8] sm:$0xff]
  %v2084 = vld [vmem:[%s7 + $0xc0] sm:$0xff]
  %v2085 = vld [vmem:[%s7 + $0xc8] sm:$0xff]
  %v2086 = vld [vmem:[%s7 + $0xd0] sm:$0xff]
  %v2087 = vld [vmem:[%s7 + $0xd8] sm:$0xff]
  %v2088 = vld [vmem:[%s7 + $0xe0] sm:$0xff]
  %v2089 = vld [vmem:[%s7 + $0xe8] sm:$0xff]
  %v2090 = vld [vmem:[%s7 + $0xf0] sm:$0xff]
  %v2091 = vld [vmem:[%s7 + $0xf8] sm:$0xff]
  %v2092 = vld [vmem:[%s7 + $0x100] sm:$0xff]
  %v2093 = vld [vmem:[%s7 + $0x108] sm:$0xff]
  %v2094 = vld [vmem:[%s7 + $0x110] sm:$0xff]
  %v2095 = vld [vmem:[%s7 + $0x118] sm:$0xff]
  %v2096 = vld [vmem:[%s7 + $0x120] sm:$0xff]
  %v2097 = vld [vmem:[%s7 + $0x128] sm:$0xff]
  %v2098 = vld [vmem:[%s7 + $0x130] sm:$0xff]
  %v2099 = vld [vmem:[%s7 + $0x138] sm:$0xff]
  %v2100 = vld [vmem:[%s7 + $0x140] sm:$0xff]
  %v2101 = vld [vmem:[%s7 + $0x148] sm:$0xff]
  %v2102 = vld [vmem:[%s7 + $0x150] sm:$0xff]
  %v2103 = vld [vmem:[%s7 + $0x158] sm:$0xff]
  %v2104 = vld [vmem:[%s7 + $0x160] sm:$0xff]
  %v2105 = vld [vmem:[%s7 + $0x168] sm:$0xff]
  %v2106 = vld [vmem:[%s7 + $0x170] sm:$0xff]
  %v2107 = vld [vmem:[%s7 + $0x178] sm:$0xff]
  %v2108 = vld [vmem:[%s7 + $0x180] sm:$0xff]
  %v2109 = vld [vmem:[%s7 + $0x188] sm:$0xff]
  %v2110 = vld [vmem:[%s7 + $0x190] sm:$0xff]
  %v2111 = vld [vmem:[%s7 + $0x198] sm:$0xff]
  %v2112 = vld [vmem:[%s7 + $0x1a0] sm:$0xff]
  %v2113 = vld [vmem:[%s7 + $0x1a8] sm:$0xff]
  %v2114 = vld [vmem:[%s7 + $0x1b0] sm:$0xff]
  %v2115 = vld [vmem:[%s7 + $0x1b8] sm:$0xff]
  %v2116 = vld [vmem:[%s7 + $0x1c0] sm:$0xff]
  %v2117 = vld [vmem:[%s7 + $0x1c8] sm:$0xff]
  %v2118 = vld [vmem:[%s7 + $0x1d0] sm:$0xff]
  %v2119 = vld [vmem:[%s7 + $0x1d8] sm:$0xff]
  %v2120 = vld [vmem:[%s7 + $0x1e0] sm:$0xff]
  %v2121 = vld [vmem:[%s7 + $0x1e8] sm:$0xff]
  %v2122 = vld [vmem:[%s7 + $0x1f0] sm:$0xff]
  %v2123 = vld [vmem:[%s7 + $0x1f8] sm:$0xff]
  %v2132 = vcombine.low %v1988, %v1989
  %v2133 = vcombine.low %v1990, %v1991
  %v2135 = vunpack.c.l.s4 1983009808
  %v2136 = vunpack.c.0.s8 %v2135
  %v2137 = vlaneseq
  %v2138 = vshrl.u32 %v2137, 7
  %v2139 = vsub.s32 %v2136, %v2138
  %v2140 = vrot.slane %v2132, %v2139
  %v2142 = vunpack.c.l.s4 1983009808
  %v2143 = vunpack.c.0.s8 %v2142
  %v2144 = vlaneseq
  %v2145 = vshrl.u32 %v2144, 7
  %v2146 = vsub.s32 %v2143, %v2145
  %v2147 = vrot.slane %v2133, %v2146
  %v2148 = vcombine.low %v2140, %v2147
  %v2149 = vcombine.low %v1992, %v1993
  %v2150 = vcombine.low %v1994, %v1995
  %v2152 = vunpack.c.l.s4 1983009808
  %v2153 = vunpack.c.0.s8 %v2152
  %v2154 = vlaneseq
  %v2155 = vshrl.u32 %v2154, 7
  %v2156 = vsub.s32 %v2153, %v2155
  %v2157 = vrot.slane %v2149, %v2156
  %v2159 = vunpack.c.l.s4 1983009808
  %v2160 = vunpack.c.0.s8 %v2159
  %v2161 = vlaneseq
  %v2162 = vshrl.u32 %v2161, 7
  %v2163 = vsub.s32 %v2160, %v2162
  %v2164 = vrot.slane %v2150, %v2163
  %v2165 = vcombine.low %v2157, %v2164
  %2168 = vmatprep.subr.mxu0 %v2061
  %2169 = vmatpush1.msra.mxu0 %v2060
  %2170 = vmatprep.subr.mxu0 %v2065
  %2171 = vmatpush1.msra.mxu0 %v2064
  %2172 = vmatprep.subr.mxu0 %v2069
  %2173 = vmatpush1.msra.mxu0 %v2068
  %2174 = vmatprep.subr.mxu0 %v2073
  %2175 = vmatpush1.msra.mxu0 %v2072
  %2176 = vmatprep.subr.mxu0 %v2077
  %2177 = vmatpush1.msra.mxu0 %v2076
  %2178 = vmatprep.subr.mxu0 %v2081
  %2179 = vmatpush1.msra.mxu0 %v2080
  %2180 = vmatprep.subr.mxu0 %v2085
  %2181 = vmatpush1.msra.mxu0 %v2084
  %2182 = vmatprep.subr.mxu0 %v2089
  %2183 = vmatpush1.msra.mxu0 %v2088
  %2184 = vmatprep.subr.mxu0 %v2093
  %2185 = vmatpush1.msra.mxu0 %v2092
  %2186 = vmatprep.subr.mxu0 %v2097
  %2187 = vmatpush1.msra.mxu0 %v2096
  %2188 = vmatprep.subr.mxu0 %v2101
  %2189 = vmatpush1.msra.mxu0 %v2100
  %2190 = vmatprep.subr.mxu0 %v2105
  %2191 = vmatpush1.msra.mxu0 %v2104
  %2192 = vmatprep.subr.mxu0 %v2109
  %2193 = vmatpush1.msra.mxu0 %v2108
  %2194 = vmatprep.subr.mxu0 %v2113
  %2195 = vmatpush1.msra.mxu0 %v2112
  %2196 = vmatprep.subr.mxu0 %v2117
  %2197 = vmatpush1.msra.mxu0 %v2116
  %2198 = vmatprep.subr.mxu0 %v2121
  %2199 = vmatpush1.msra.mxu0 %v2120
  %2200 = vmatprep.subr.mxu0 0.0
  %2201 = vmatpush1.msra.mxu0 0.0
  %2202 = vmatprep.subr.mxu0 0.0
  %2203 = vmatpush1.msra.mxu0 0.0
  %2204 = vmatprep.subr.mxu0 0.0
  %2205 = vmatpush1.msra.mxu0 0.0
  %2206 = vmatprep.subr.mxu0 0.0
  %2207 = vmatpush1.msra.mxu0 0.0
  %2208 = vmatprep.subr.mxu0 0.0
  %2209 = vmatpush1.msra.mxu0 0.0
  %2210 = vmatprep.subr.mxu0 0.0
  %2211 = vmatpush1.msra.mxu0 0.0
  %2212 = vmatprep.subr.mxu0 0.0
  %2213 = vmatpush1.msra.mxu0 0.0
  %2214 = vmatprep.subr.mxu0 0.0
  %2215 = vmatpush1.msra.mxu0 0.0
  %2216 = vmatprep.subr.mxu0 0.0
  %2217 = vmatpush1.msra.mxu0 0.0
  %2218 = vmatprep.subr.mxu0 0.0
  %2219 = vmatpush1.msra.mxu0 0.0
  %2220 = vmatprep.subr.mxu0 0.0
  %2221 = vmatpush1.msra.mxu0 0.0
  %2222 = vmatprep.subr.mxu0 0.0
  %2223 = vmatpush1.msra.mxu0 0.0
  %2224 = vmatprep.subr.mxu0 0.0
  %2225 = vmatpush1.msra.mxu0 0.0
  %2226 = vmatprep.subr.mxu0 0.0
  %2227 = vmatpush1.msra.mxu0 0.0
  %2228 = vmatprep.subr.mxu0 0.0
  %2229 = vmatpush1.msra.mxu0 0.0
  %2230 = vmatprep.subr.mxu0 0.0
  %2231 = vmatpush1.msra.mxu0 0.0
  %2232 = vmatprep.mubr.f32.mxu0 0.0
  %2233 = vmatmul.mubr.f32.gmra.mrb[0].mxu0 %v2148
  %v2234 = vpop.f32.mrb[0].mxu0
  %v2235 = vadd.f32 0.0, %v2234
  %v2236 = vpop.f32.mrb[0].mxu0
  %v2237 = vadd.f32 0.0, %v2236
  %2238 = vmatprep.mubr.f32.mxu0 0.0
  %2239 = vmatmul.mubr.f32.gmra.mrb[0].mxu0 %v2165
  %v2240 = vpop.f32.mrb[0].mxu0
  %v2241 = vadd.f32 0.0, %v2240
  %v2242 = vpop.f32.mrb[0].mxu0
  %v2243 = vadd.f32 0.0, %v2242
  %2244 = vdwg.mxu0
  %2245 = vmatprep.subr.mxu0 %v2063
  %2246 = vmatpush1.msra.mxu0 %v2062
  %2247 = vmatprep.subr.mxu0 %v2067
  %2248 = vmatpush1.msra.mxu0 %v2066
  %2249 = vmatprep.subr.mxu0 %v2071
  %2250 = vmatpush1.msra.mxu0 %v2070
  %2251 = vmatprep.subr.mxu0 %v2075
  %2252 = vmatpush1.msra.mxu0 %v2074
  %2253 = vmatprep.subr.mxu0 %v2079
  %2254 = vmatpush1.msra.mxu0 %v2078
  %2255 = vmatprep.subr.mxu0 %v2083
  %2256 = vmatpush1.msra.mxu0 %v2082
  %2257 = vmatprep.subr.mxu0 %v2087
  %2258 = vmatpush1.msra.mxu0 %v2086
  %2259 = vmatprep.subr.mxu0 %v2091
  %2260 = vmatpush1.msra.mxu0 %v2090
  %2261 = vmatprep.subr.mxu0 %v2095
  %2262 = vmatpush1.msra.mxu0 %v2094
  %2263 = vmatprep.subr.mxu0 %v2099
  %2264 = vmatpush1.msra.mxu0 %v2098
  %2265 = vmatprep.subr.mxu0 %v2103
  %2266 = vmatpush1.msra.mxu0 %v2102
  %2267 = vmatprep.subr.mxu0 %v2107
  %2268 = vmatpush1.msra.mxu0 %v2106
  %2269 = vmatprep.subr.mxu0 %v2111
  %2270 = vmatpush1.msra.mxu0 %v2110
  %2271 = vmatprep.subr.mxu0 %v2115
  %2272 = vmatpush1.msra.mxu0 %v2114
  %2273 = vmatprep.subr.mxu0 %v2119
  %2274 = vmatpush1.msra.mxu0 %v2118
  %2275 = vmatprep.subr.mxu0 %v2123
  %2276 = vmatpush1.msra.mxu0 %v2122
  %2277 = vmatprep.subr.mxu0 0.0
  %2278 = vmatpush1.msra.mxu0 0.0
  %2279 = vmatprep.subr.mxu0 0.0
  %2280 = vmatpush1.msra.mxu0 0.0
  %2281 = vmatprep.subr.mxu0 0.0
  %2282 = vmatpush1.msra.mxu0 0.0
  %2283 = vmatprep.subr.mxu0 0.0
  %2284 = vmatpush1.msra.mxu0 0.0
  %2285 = vmatprep.subr.mxu0 0.0
  %2286 = vmatpush1.msra.mxu0 0.0
  %2287 = vmatprep.subr.mxu0 0.0
  %2288 = vmatpush1.msra.mxu0 0.0
  %2289 = vmatprep.subr.mxu0 0.0
  %2290 = vmatpush1.msra.mxu0 0.0
  %2291 = vmatprep.subr.mxu0 0.0
  %2292 = vmatpush1.msra.mxu0 0.0
  %2293 = vmatprep.subr.mxu0 0.0
  %2294 = vmatpush1.msra.mxu0 0.0
  %2295 = vmatprep.subr.mxu0 0.0
  %2296 = vmatpush1.msra.mxu0 0.0
  %2297 = vmatprep.subr.mxu0 0.0
  %2298 = vmatpush1.msra.mxu0 0.0
  %2299 = vmatprep.subr.mxu0 0.0
  %2300 = vmatpush1.msra.mxu0 0.0
  %2301 = vmatprep.subr.mxu0 0.0
  %2302 = vmatpush1.msra.mxu0 0.0
  %2303 = vmatprep.subr.mxu0 0.0
  %2304 = vmatpush1.msra.mxu0 0.0
  %2305 = vmatprep.subr.mxu0 0.0
  %2306 = vmatpush1.msra.mxu0 0.0
  %2307 = vmatprep.subr.mxu0 0.0
  %2308 = vmatpush1.msra.mxu0 0.0
  %2309 = vmatprep.mubr.f32.mxu0 0.0
  %2310 = vmatmul.mubr.f32.gmra.mrb[0].mxu0 %v2148
  %v2311 = vpop.f32.mrb[0].mxu0
  %v2312 = vadd.f32 0.0, %v2311
  %v2313 = vpop.f32.mrb[0].mxu0
  %v2314 = vadd.f32 0.0, %v2313
  %2315 = vmatprep.mubr.f32.mxu0 0.0
  %2316 = vmatmul.mubr.f32.gmra.mrb[0].mxu0 %v2165
  %v2317 = vpop.f32.mrb[0].mxu0
  %v2318 = vadd.f32 0.0, %v2317
  %v2319 = vpop.f32.mrb[0].mxu0
  %v2320 = vadd.f32 0.0, %v2319
  %2321 = vdwg.mxu0
  %v2330 = vcombine.low %v1980, %v1981
  %v2331 = vcombine.low %v1982, %v1983
  %v2333 = vunpack.c.l.s4 1983009808
  %v2334 = vunpack.c.0.s8 %v2333
  %v2335 = vlaneseq
  %v2336 = vshrl.u32 %v2335, 7
  %v2337 = vsub.s32 %v2334, %v2336
  %v2338 = vrot.slane %v2330, %v2337
  %v2340 = vunpack.c.l.s4 1983009808
  %v2341 = vunpack.c.0.s8 %v2340
  %v2342 = vlaneseq
  %v2343 = vshrl.u32 %v2342, 7
  %v2344 = vsub.s32 %v2341, %v2343
  %v2345 = vrot.slane %v2331, %v2344
  %v2346 = vcombine.low %v2338, %v2345
  %v2347 = vcombine.low %v1984, %v1985
  %v2348 = vcombine.low %v1986, %v1987
  %v2350 = vunpack.c.l.s4 1983009808
  %v2351 = vunpack.c.0.s8 %v2350
  %v2352 = vlaneseq
  %v2353 = vshrl.u32 %v2352, 7
  %v2354 = vsub.s32 %v2351, %v2353
  %v2355 = vrot.slane %v2347, %v2354
  %v2357 = vunpack.c.l.s4 1983009808
  %v2358 = vunpack.c.0.s8 %v2357
  %v2359 = vlaneseq
  %v2360 = vshrl.u32 %v2359, 7
  %v2361 = vsub.s32 %v2358, %v2360
  %v2362 = vrot.slane %v2348, %v2361
  %v2363 = vcombine.low %v2355, %v2362
  %2366 = vmatprep.subr.mxu0 %v1997
  %2367 = vmatpush1.msra.mxu0 %v1996
  %2368 = vmatprep.subr.mxu0 %v2001
  %2369 = vmatpush1.msra.mxu0 %v2000
  %2370 = vmatprep.subr.mxu0 %v2005
  %2371 = vmatpush1.msra.mxu0 %v2004
  %2372 = vmatprep.subr.mxu0 %v2009
  %2373 = vmatpush1.msra.mxu0 %v2008
  %2374 = vmatprep.subr.mxu0 %v2013
  %2375 = vmatpush1.msra.mxu0 %v2012
  %2376 = vmatprep.subr.mxu0 %v2017
  %2377 = vmatpush1.msra.mxu0 %v2016
  %2378 = vmatprep.subr.mxu0 %v2021
  %2379 = vmatpush1.msra.mxu0 %v2020
  %2380 = vmatprep.subr.mxu0 %v2025
  %2381 = vmatpush1.msra.mxu0 %v2024
  %2382 = vmatprep.subr.mxu0 %v2029
  %2383 = vmatpush1.msra.mxu0 %v2028
  %2384 = vmatprep.subr.mxu0 %v2033
  %2385 = vmatpush1.msra.mxu0 %v2032
  %2386 = vmatprep.subr.mxu0 %v2037
  %2387 = vmatpush1.msra.mxu0 %v2036
  %2388 = vmatprep.subr.mxu0 %v2041
  %2389 = vmatpush1.msra.mxu0 %v2040
  %2390 = vmatprep.subr.mxu0 %v2045
  %2391 = vmatpush1.msra.mxu0 %v2044
  %2392 = vmatprep.subr.mxu0 %v2049
  %2393 = vmatpush1.msra.mxu0 %v2048
  %2394 = vmatprep.subr.mxu0 %v2053
  %2395 = vmatpush1.msra.mxu0 %v2052
  %2396 = vmatprep.subr.mxu0 %v2057
  %2397 = vmatpush1.msra.mxu0 %v2056
  %2398 = vmatprep.subr.mxu0 0.0
  %2399 = vmatpush1.msra.mxu0 0.0
  %2400 = vmatprep.subr.mxu0 0.0
  %2401 = vmatpush1.msra.mxu0 0.0
  %2402 = vmatprep.subr.mxu0 0.0
  %2403 = vmatpush1.msra.mxu0 0.0
  %2404 = vmatprep.subr.mxu0 0.0
  %2405 = vmatpush1.msra.mxu0 0.0
  %2406 = vmatprep.subr.mxu0 0.0
  %2407 = vmatpush1.msra.mxu0 0.0
  %2408 = vmatprep.subr.mxu0 0.0
  %2409 = vmatpush1.msra.mxu0 0.0
  %2410 = vmatprep.subr.mxu0 0.0
  %2411 = vmatpush1.msra.mxu0 0.0
  %2412 = vmatprep.subr.mxu0 0.0
  %2413 = vmatpush1.msra.mxu0 0.0
  %2414 = vmatprep.subr.mxu0 0.0
  %2415 = vmatpush1.msra.mxu0 0.0
  %2416 = vmatprep.subr.mxu0 0.0
  %2417 = vmatpush1.msra.mxu0 0.0
  %2418 = vmatprep.subr.mxu0 0.0
  %2419 = vmatpush1.msra.mxu0 0.0
  %2420 = vmatprep.subr.mxu0 0.0
  %2421 = vmatpush1.msra.mxu0 0.0
  %2422 = vmatprep.subr.mxu0 0.0
  %2423 = vmatpush1.msra.mxu0 0.0
  %2424 = vmatprep.subr.mxu0 0.0
  %2425 = vmatpush1.msra.mxu0 0.0
  %2426 = vmatprep.subr.mxu0 0.0
  %2427 = vmatpush1.msra.mxu0 0.0
  %2428 = vmatprep.subr.mxu0 0.0
  %2429 = vmatpush1.msra.mxu0 0.0
  %2430 = vmatprep.mubr.f32.mxu0 0.0
  %2431 = vmatmul.mubr.f32.gmra.mrb[0].mxu0 %v2346
  %v2432 = vpop.f32.mrb[0].mxu0
  %v2433 = vadd.f32 %v2235, %v2432
  %v2434 = vpop.f32.mrb[0].mxu0
  %v2435 = vadd.f32 %v2237, %v2434
  %2436 = vmatprep.mubr.f32.mxu0 0.0
  %2437 = vmatmul.mubr.f32.gmra.mrb[0].mxu0 %v2363
  %v2438 = vpop.f32.mrb[0].mxu0
  %v2439 = vadd.f32 %v2241, %v2438
  %v2440 = vpop.f32.mrb[0].mxu0
  %v2441 = vadd.f32 %v2243, %v2440
  %2442 = vdwg.mxu0
  %2443 = vmatprep.subr.mxu0 %v1999
  %2444 = vmatpush1.msra.mxu0 %v1998
  %2445 = vmatprep.subr.mxu0 %v2003
  %2446 = vmatpush1.msra.mxu0 %v2002
  %2447 = vmatprep.subr.mxu0 %v2007
  %2448 = vmatpush1.msra.mxu0 %v2006
  %2449 = vmatprep.subr.mxu0 %v2011
  %2450 = vmatpush1.msra.mxu0 %v2010
  %2451 = vmatprep.subr.mxu0 %v2015
  %2452 = vmatpush1.msra.mxu0 %v2014
  %2453 = vmatprep.subr.mxu0 %v2019
  %2454 = vmatpush1.msra.mxu0 %v2018
  %2455 = vmatprep.subr.mxu0 %v2023
  %2456 = vmatpush1.msra.mxu0 %v2022
  %2457 = vmatprep.subr.mxu0 %v2027
  %2458 = vmatpush1.msra.mxu0 %v2026
  %2459 = vmatprep.subr.mxu0 %v2031
  %2460 = vmatpush1.msra.mxu0 %v2030
  %2461 = vmatprep.subr.mxu0 %v2035
  %2462 = vmatpush1.msra.mxu0 %v2034
  %2463 = vmatprep.subr.mxu0 %v2039
  %2464 = vmatpush1.msra.mxu0 %v2038
  %2465 = vmatprep.subr.mxu0 %v2043
  %2466 = vmatpush1.msra.mxu0 %v2042
  %2467 = vmatprep.subr.mxu0 %v2047
  %2468 = vmatpush1.msra.mxu0 %v2046
  %2469 = vmatprep.subr.mxu0 %v2051
  %2470 = vmatpush1.msra.mxu0 %v2050
  %2471 = vmatprep.subr.mxu0 %v2055
  %2472 = vmatpush1.msra.mxu0 %v2054
  %2473 = vmatprep.subr.mxu0 %v2059
  %2474 = vmatpush1.msra.mxu0 %v2058
  %2475 = vmatprep.subr.mxu0 0.0
  %2476 = vmatpush1.msra.mxu0 0.0
  %2477 = vmatprep.subr.mxu0 0.0
  %2478 = vmatpush1.msra.mxu0 0.0
  %2479 = vmatprep.subr.mxu0 0.0
  %2480 = vmatpush1.msra.mxu0 0.0
  %2481 = vmatprep.subr.mxu0 0.0
  %2482 = vmatpush1.msra.mxu0 0.0
  %2483 = vmatprep.subr.mxu0 0.0
  %2484 = vmatpush1.msra.mxu0 0.0
  %2485 = vmatprep.subr.mxu0 0.0
  %2486 = vmatpush1.msra.mxu0 0.0
  %2487 = vmatprep.subr.mxu0 0.0
  %2488 = vmatpush1.msra.mxu0 0.0
  %2489 = vmatprep.subr.mxu0 0.0
  %2490 = vmatpush1.msra.mxu0 0.0
  %2491 = vmatprep.subr.mxu0 0.0
  %2492 = vmatpush1.msra.mxu0 0.0
  %2493 = vmatprep.subr.mxu0 0.0
  %2494 = vmatpush1.msra.mxu0 0.0
  %2495 = vmatprep.subr.mxu0 0.0
  %2496 = vmatpush1.msra.mxu0 0.0
  %2497 = vmatprep.subr.mxu0 0.0
  %2498 = vmatpush1.msra.mxu0 0.0
  %2499 = vmatprep.subr.mxu0 0.0
  %2500 = vmatpush1.msra.mxu0 0.0
  %2501 = vmatprep.subr.mxu0 0.0
  %2502 = vmatpush1.msra.mxu0 0.0
  %2503 = vmatprep.subr.mxu0 0.0
  %2504 = vmatpush1.msra.mxu0 0.0
  %2505 = vmatprep.subr.mxu0 0.0
  %2506 = vmatpush1.msra.mxu0 0.0
  %2507 = vmatprep.mubr.f32.mxu0 0.0
  %2508 = vmatmul.mubr.f32.gmra.mrb[0].mxu0 %v2346
  %v2509 = vpop.f32.mrb[0].mxu0
  %v2510 = vadd.f32 %v2312, %v2509
  %v2511 = vpop.f32.mrb[0].mxu0
  %v2512 = vadd.f32 %v2314, %v2511
  %2513 = vmatprep.mubr.f32.mxu0 0.0
  %2514 = vmatmul.mubr.f32.gmra.mrb[0].mxu0 %v2363
  %v2515 = vpop.f32.mrb[0].mxu0
  %v2516 = vadd.f32 %v2318, %v2515
  %v2517 = vpop.f32.mrb[0].mxu0
  %v2518 = vadd.f32 %v2320, %v2517
  %2519 = vdwg.mxu0
  %v2520 = vld [vmem:[%s9] sm:$0xf]
  %v2522 = vlaneseq
  %v2523 = vshrl.u32 %v2522, 7
  %v2524 = vsub.s32 0, %v2523
  %v2525 = vrot.slane %v2520, %v2524
  %v2526 = vlaneseq
  %v2527 = vshrl.u32 %v2526, 7
  %v2528 = vsub.s32 1, %v2527
  %v2529 = vrot.slane %v2520, %v2528
  %v2530 = vlaneseq
  %v2531 = vshrl.u32 %v2530, 7
  %v2532 = vsub.s32 2, %v2531
  %v2533 = vrot.slane %v2520, %v2532
  %v2534 = vlaneseq
  %v2535 = vshrl.u32 %v2534, 7
  %v2536 = vsub.s32 3, %v2535
  %v2537 = vrot.slane %v2520, %v2536
  %v2542 = vadd.f32 %v2433, %v2525
  %v2543 = vadd.f32 %v2435, %v2529
  %v2544 = vadd.f32 %v2510, %v2533
  %v2545 = vadd.f32 %v2512, %v2537
  %v2546 = vadd.f32 %v2439, %v2525
  %v2547 = vadd.f32 %v2441, %v2529
  %v2548 = vadd.f32 %v2516, %v2533
  %v2549 = vadd.f32 %v2518, %v2537
  %v2558 = vcombine.low %v2542, %v2543
  %v2559 = vcombine.high %v2542, %v2543
  %v2560 = vcombine.low %v2544, %v2545
  %v2561 = vcombine.high %v2544, %v2545
  %v2563 = vunpack.c.l.s4 1983009808
  %v2564 = vunpack.c.0.s8 %v2563
  %v2565 = vlaneseq
  %v2566 = vshrl.u32 %v2565, 7
  %v2567 = vsub.s32 %v2564, %v2566
  %v2568 = vrot.slane %v2558, %v2567
  %v2570 = vunpack.c.l.s4 1983009808
  %v2571 = vunpack.c.0.s8 %v2570
  %v2572 = vlaneseq
  %v2573 = vshrl.u32 %v2572, 7
  %v2574 = vsub.s32 %v2571, %v2573
  %v2575 = vrot.slane %v2559, %v2574
  %v2577 = vunpack.c.l.s4 1983009808
  %v2578 = vunpack.c.0.s8 %v2577
  %v2579 = vlaneseq
  %v2580 = vshrl.u32 %v2579, 7
  %v2581 = vsub.s32 %v2578, %v2580
  %v2582 = vrot.slane %v2560, %v2581
  %v2584 = vunpack.c.l.s4 1983009808
  %v2585 = vunpack.c.0.s8 %v2584
  %v2586 = vlaneseq
  %v2587 = vshrl.u32 %v2586, 7
  %v2588 = vsub.s32 %v2585, %v2587
  %v2589 = vrot.slane %v2561, %v2588
  %v2590 = vcombine.low %v2568, %v2582
  %v2591 = vcombine.high %v2568, %v2582
  %v2592 = vcombine.low %v2575, %v2589
  %v2593 = vcombine.high %v2575, %v2589
  %v2594 = vcombine.low %v2546, %v2547
  %v2595 = vcombine.high %v2546, %v2547
  %v2596 = vcombine.low %v2548, %v2549
  %v2597 = vcombine.high %v2548, %v2549
  %v2599 = vunpack.c.l.s4 1983009808
  %v2600 = vunpack.c.0.s8 %v2599
  %v2601 = vlaneseq
  %v2602 = vshrl.u32 %v2601, 7
  %v2603 = vsub.s32 %v2600, %v2602
  %v2604 = vrot.slane %v2594, %v2603
  %v2606 = vunpack.c.l.s4 1983009808
  %v2607 = vunpack.c.0.s8 %v2606
  %v2608 = vlaneseq
  %v2609 = vshrl.u32 %v2608, 7
  %v2610 = vsub.s32 %v2607, %v2609
  %v2611 = vrot.slane %v2595, %v2610
  %v2613 = vunpack.c.l.s4 1983009808
  %v2614 = vunpack.c.0.s8 %v2613
  %v2615 = vlaneseq
  %v2616 = vshrl.u32 %v2615, 7
  %v2617 = vsub.s32 %v2614, %v2616
  %v2618 = vrot.slane %v2596, %v2617
  %v2620 = vunpack.c.l.s4 1983009808
  %v2621 = vunpack.c.0.s8 %v2620
  %v2622 = vlaneseq
  %v2623 = vshrl.u32 %v2622, 7
  %v2624 = vsub.s32 %v2621, %v2623
  %v2625 = vrot.slane %v2597, %v2624
  %v2626 = vcombine.low %v2604, %v2618
  %v2627 = vcombine.high %v2604, %v2618
  %v2628 = vcombine.low %v2611, %v2625
  %v2629 = vcombine.high %v2611, %v2625
  %2638 = vst [vmem:[#allocation2] sm:$0xff] %v2590
  %2639 = vst [vmem:[#allocation2 + $0x8] sm:$0xff] %v2591
  %2640 = vst [vmem:[#allocation2 + $0x10] sm:$0xff] %v2592
  %2641 = vst [vmem:[#allocation2 + $0x18] sm:$0xff] %v2593
  %2642 = vst [vmem:[#allocation2 + $0x20] sm:$0xff] %v2626
  %2643 = vst [vmem:[#allocation2 + $0x28] sm:$0xff] %v2627
  %2644 = vst [vmem:[#allocation2 + $0x30] sm:$0xff] %v2628
  %2645 = vst [vmem:[#allocation2 + $0x38] sm:$0xff] %v2629
  %v2646 = vld [vmem:[%s8] sm:$0xff]
  %v2647 = vld [vmem:[%s8 + $0x8] sm:$0xff]
  %v2648 = vld [vmem:[%s8 + $0x10] sm:$0xff]
  %v2649 = vld [vmem:[%s8 + $0x18] sm:$0xff]
  %v2650 = vld [vmem:[%s8 + $0x20] sm:$0xff]
  %v2651 = vld [vmem:[%s8 + $0x28] sm:$0xff]
  %v2652 = vld [vmem:[%s8 + $0x30] sm:$0xff]
  %v2653 = vld [vmem:[%s8 + $0x38] sm:$0xff]
  %v2654 = vld [vmem:[%s8 + $0x40] sm:$0xff]
  %v2655 = vld [vmem:[%s8 + $0x48] sm:$0xff]
  %v2656 = vld [vmem:[%s8 + $0x50] sm:$0xff]
  %v2657 = vld [vmem:[%s8 + $0x58] sm:$0xff]
  %v2658 = vld [vmem:[%s8 + $0x60] sm:$0xff]
  %v2659 = vld [vmem:[%s8 + $0x68] sm:$0xff]
  %v2660 = vld [vmem:[%s8 + $0x70] sm:$0xff]
  %v2661 = vld [vmem:[%s8 + $0x78] sm:$0xff]
  %v2662 = vld [vmem:[%s8 + $0x80] sm:$0xff]
  %v2663 = vld [vmem:[%s8 + $0x88] sm:$0xff]
  %v2664 = vld [vmem:[%s8 + $0x90] sm:$0xff]
  %v2665 = vld [vmem:[%s8 + $0x98] sm:$0xff]
  %v2666 = vld [vmem:[%s8 + $0xa0] sm:$0xff]
  %v2667 = vld [vmem:[%s8 + $0xa8] sm:$0xff]
  %v2668 = vld [vmem:[%s8 + $0xb0] sm:$0xff]
  %v2669 = vld [vmem:[%s8 + $0xb8] sm:$0xff]
  %v2670 = vld [vmem:[%s8 + $0xc0] sm:$0xff]
  %v2671 = vld [vmem:[%s8 + $0xc8] sm:$0xff]
  %v2672 = vld [vmem:[%s8 + $0xd0] sm:$0xff]
  %v2673 = vld [vmem:[%s8 + $0xd8] sm:$0xff]
  %v2674 = vld [vmem:[%s8 + $0xe0] sm:$0xff]
  %v2675 = vld [vmem:[%s8 + $0xe8] sm:$0xff]
  %v2676 = vld [vmem:[%s8 + $0xf0] sm:$0xff]
  %v2677 = vld [vmem:[%s8 + $0xf8] sm:$0xff]
  %v2678 = vld [vmem:[#allocation2] sm:$0xff]
  %v2711 = vunpack.c.l.b16 %v2646
  %v2712 = vunpack.c.h.b16 %v2646
  %v2713 = vunpack.c.l.b16 %v2647
  %v2714 = vunpack.c.h.b16 %v2647
  %v2715 = vunpack.c.l.b16 %v2648
  %v2716 = vunpack.c.h.b16 %v2648
  %v2717 = vunpack.c.l.b16 %v2649
  %v2718 = vunpack.c.h.b16 %v2649
  %v2719 = vunpack.c.l.b16 %v2650
  %v2720 = vunpack.c.h.b16 %v2650
  %v2721 = vunpack.c.l.b16 %v2651
  %v2722 = vunpack.c.h.b16 %v2651
  %v2723 = vunpack.c.l.b16 %v2652
  %v2724 = vunpack.c.h.b16 %v2652
  %v2725 = vunpack.c.l.b16 %v2653
  %v2726 = vunpack.c.h.b16 %v2653
  %v2727 = vunpack.c.l.b16 %v2654
  %v2728 = vunpack.c.h.b16 %v2654
  %v2729 = vunpack.c.l.b16 %v2655
  %v2730 = vunpack.c.h.b16 %v2655
  %v2731 = vunpack.c.l.b16 %v2656
  %v2732 = vunpack.c.h.b16 %v2656
  %v2733 = vunpack.c.l.b16 %v2657
  %v2734 = vunpack.c.h.b16 %v2657
  %v2735 = vunpack.c.l.b16 %v2658
  %v2736 = vunpack.c.h.b16 %v2658
  %v2737 = vunpack.c.l.b16 %v2659
  %v2738 = vunpack.c.h.b16 %v2659
  %v2739 = vunpack.c.l.b16 %v2660
  %v2740 = vunpack.c.h.b16 %v2660
  %v2741 = vunpack.c.l.b16 %v2661
  %v2742 = vunpack.c.h.b16 %v2661
  %v2743 = vunpack.c.l.b16 %v2662
  %v2744 = vunpack.c.h.b16 %v2662
  %v2745 = vunpack.c.l.b16 %v2663
  %v2746 = vunpack.c.h.b16 %v2663
  %v2747 = vunpack.c.l.b16 %v2664
  %v2748 = vunpack.c.h.b16 %v2664
  %v2749 = vunpack.c.l.b16 %v2665
  %v2750 = vunpack.c.h.b16 %v2665
  %v2751 = vunpack.c.l.b16 %v2666
  %v2752 = vunpack.c.h.b16 %v2666
  %v2753 = vunpack.c.l.b16 %v2667
  %v2754 = vunpack.c.h.b16 %v2667
  %v2755 = vunpack.c.l.b16 %v2668
  %v2756 = vunpack.c.h.b16 %v2668
  %v2757 = vunpack.c.l.b16 %v2669
  %v2758 = vunpack.c.h.b16 %v2669
  %v2759 = vunpack.c.l.b16 %v2670
  %v2760 = vunpack.c.h.b16 %v2670
  %v2761 = vunpack.c.l.b16 %v2671
  %v2762 = vunpack.c.h.b16 %v2671
  %v2763 = vunpack.c.l.b16 %v2672
  %v2764 = vunpack.c.h.b16 %v2672
  %v2765 = vunpack.c.l.b16 %v2673
  %v2766 = vunpack.c.h.b16 %v2673
  %v2767 = vunpack.c.l.b16 %v2674
  %v2768 = vunpack.c.h.b16 %v2674
  %v2769 = vunpack.c.l.b16 %v2675
  %v2770 = vunpack.c.h.b16 %v2675
  %v2771 = vunpack.c.l.b16 %v2676
  %v2772 = vunpack.c.h.b16 %v2676
  %v2773 = vunpack.c.l.b16 %v2677
  %v2774 = vunpack.c.h.b16 %v2677
  %v2775 = vpack.c.b16 %v2715, %v2711
  %v2776 = vpack.c.b16 %v2716, %v2712
  %v2777 = vpack.c.b16 %v2717, %v2713
  %v2778 = vpack.c.b16 %v2718, %v2714
  %v2779 = vpack.c.b16 %v2723, %v2719
  %v2780 = vpack.c.b16 %v2724, %v2720
  %v2781 = vpack.c.b16 %v2725, %v2721
  %v2782 = vpack.c.b16 %v2726, %v2722
  %v2783 = vpack.c.b16 %v2731, %v2727
  %v2784 = vpack.c.b16 %v2732, %v2728
  %v2785 = vpack.c.b16 %v2733, %v2729
  %v2786 = vpack.c.b16 %v2734, %v2730
  %v2787 = vpack.c.b16 %v2739, %v2735
  %v2788 = vpack.c.b16 %v2740, %v2736
  %v2789 = vpack.c.b16 %v2741, %v2737
  %v2790 = vpack.c.b16 %v2742, %v2738
  %v2791 = vpack.c.b16 %v2747, %v2743
  %v2792 = vpack.c.b16 %v2748, %v2744
  %v2793 = vpack.c.b16 %v2749, %v2745
  %v2794 = vpack.c.b16 %v2750, %v2746
  %v2795 = vpack.c.b16 %v2755, %v2751
  %v2796 = vpack.c.b16 %v2756, %v2752
  %v2797 = vpack.c.b16 %v2757, %v2753
  %v2798 = vpack.c.b16 %v2758, %v2754
  %v2799 = vpack.c.b16 %v2763, %v2759
  %v2800 = vpack.c.b16 %v2764, %v2760
  %v2801 = vpack.c.b16 %v2765, %v2761
  %v2802 = vpack.c.b16 %v2766, %v2762
  %v2803 = vpack.c.b16 %v2771, %v2767
  %v2804 = vpack.c.b16 %v2772, %v2768
  %v2805 = vpack.c.b16 %v2773, %v2769
  %v2806 = vpack.c.b16 %v2774, %v2770
  %2839 = vmatprep.subr.bf16.mxu0 %v2776
  %2840 = vmatpush1.bf16.msra.mxu0 %v2775
  %2841 = vmatprep.subr.bf16.mxu0 %v2780
  %2842 = vmatpush1.bf16.msra.mxu0 %v2779
  %2843 = vmatprep.subr.bf16.mxu0 %v2784
  %2844 = vmatpush1.bf16.msra.mxu0 %v2783
  %2845 = vmatprep.subr.bf16.mxu0 %v2788
  %2846 = vmatpush1.bf16.msra.mxu0 %v2787
  %2847 = vmatprep.subr.bf16.mxu0 %v2792
  %2848 = vmatpush1.bf16.msra.mxu0 %v2791
  %2849 = vmatprep.subr.bf16.mxu0 %v2796
  %2850 = vmatpush1.bf16.msra.mxu0 %v2795
  %2851 = vmatprep.subr.bf16.mxu0 %v2800
  %2852 = vmatpush1.bf16.msra.mxu0 %v2799
  %2853 = vmatprep.subr.bf16.mxu0 %v2804
  %2854 = vmatpush1.bf16.msra.mxu0 %v2803
  %2855 = vmatprep.subr.bf16.mxu0 0
  %2856 = vmatpush1.bf16.msra.mxu0 0
  %2857 = vmatprep.subr.bf16.mxu0 0
  %2858 = vmatpush1.bf16.msra.mxu0 0
  %2859 = vmatprep.subr.bf16.mxu0 0
  %2860 = vmatpush1.bf16.msra.mxu0 0
  %2861 = vmatprep.subr.bf16.mxu0 0
  %2862 = vmatpush1.bf16.msra.mxu0 0
  %2863 = vmatprep.subr.bf16.mxu0 0
  %2864 = vmatpush1.bf16.msra.mxu0 0
  %2865 = vmatprep.subr.bf16.mxu0 0
  %2866 = vmatpush1.bf16.msra.mxu0 0
  %2867 = vmatprep.subr.bf16.mxu0 0
  %2868 = vmatpush1.bf16.msra.mxu0 0
  %2869 = vmatprep.subr.bf16.mxu0 0
  %2870 = vmatpush1.bf16.msra.mxu0 0
  %2871 = vmatprep.mubr.bf16.mxu0 0
  %2872 = vmatmul.mubr.bf16.gmra.mrb[0].mxu0 0
  %v2873 = vpop.f32.mrb[0].mxu0
  %v2874 = vadd.f32 0.0, %v2873
  %v2875 = vpop.f32.mrb[0].mxu0
  %v2876 = vadd.f32 0.0, %v2875
  %v2877 = vpop.f32.mrb[0].mxu0
  %v2878 = vpop.f32.mrb[0].mxu0
  %2879 = vdwg.mxu0
  %2880 = vmatprep.subr.bf16.mxu0 %v2778
  %2881 = vmatpush1.bf16.msra.mxu0 %v2777
  %2882 = vmatprep.subr.bf16.mxu0 %v2782
  %2883 = vmatpush1.bf16.msra.mxu0 %v2781
  %2884 = vmatprep.subr.bf16.mxu0 %v2786
  %2885 = vmatpush1.bf16.msra.mxu0 %v2785
  %2886 = vmatprep.subr.bf16.mxu0 %v2790
  %2887 = vmatpush1.bf16.msra.mxu0 %v2789
  %2888 = vmatprep.subr.bf16.mxu0 %v2794
  %2889 = vmatpush1.bf16.msra.mxu0 %v2793
  %2890 = vmatprep.subr.bf16.mxu0 %v2798
  %2891 = vmatpush1.bf16.msra.mxu0 %v2797
  %2892 = vmatprep.subr.bf16.mxu0 %v2802
  %2893 = vmatpush1.bf16.msra.mxu0 %v2801
  %2894 = vmatprep.subr.bf16.mxu0 %v2806
  %2895 = vmatpush1.bf16.msra.mxu0 %v2805
  %2896 = vmatprep.subr.bf16.mxu0 0
  %2897 = vmatpush1.bf16.msra.mxu0 0
  %2898 = vmatprep.subr.bf16.mxu0 0
  %2899 = vmatpush1.bf16.msra.mxu0 0
  %2900 = vmatprep.subr.bf16.mxu0 0
  %2901 = vmatpush1.bf16.msra.mxu0 0
  %2902 = vmatprep.subr.bf16.mxu0 0
  %2903 = vmatpush1.bf16.msra.mxu0 0
  %2904 = vmatprep.subr.bf16.mxu0 0
  %2905 = vmatpush1.bf16.msra.mxu0 0
  %2906 = vmatprep.subr.bf16.mxu0 0
  %2907 = vmatpush1.bf16.msra.mxu0 0
  %2908 = vmatprep.subr.bf16.mxu0 0
  %2909 = vmatpush1.bf16.msra.mxu0 0
  %2910 = vmatprep.subr.bf16.mxu0 0
  %2911 = vmatpush1.bf16.msra.mxu0 0
  %2912 = vmatprep.mubr.bf16.mxu0 0
  %2913 = vmatmul.mubr.bf16.gmra.mrb[0].mxu0 0
  %v2914 = vpop.f32.mrb[0].mxu0
  %v2915 = vadd.f32 0.0, %v2914
  %v2916 = vpop.f32.mrb[0].mxu0
  %v2917 = vadd.f32 0.0, %v2916
  %v2918 = vpop.f32.mrb[0].mxu0
  %v2919 = vpop.f32.mrb[0].mxu0
  %2920 = vdwg.mxu0
  %v2925 = vcombine.low %v2874, %v2876
  %v2926 = vcombine.low %v2915, %v2917
  %v2928 = vunpack.c.l.s4 1983009808
  %v2929 = vunpack.c.0.s8 %v2928
  %v2930 = vlaneseq
  %v2931 = vshrl.u32 %v2930, 7
  %v2932 = vsub.s32 %v2929, %v2931
  %v2933 = vrot.slane %v2925, %v2932
  %v2935 = vunpack.c.l.s4 1983009808
  %v2936 = vunpack.c.0.s8 %v2935
  %v2937 = vlaneseq
  %v2938 = vshrl.u32 %v2937, 7
  %v2939 = vsub.s32 %v2936, %v2938
  %v2940 = vrot.slane %v2926, %v2939
  %v2941 = vcombine.low %v2933, %v2940
  %v2943 = vadd.f32 %v2678, %v2941
  %v2944 = vxor.u32 %v2943, 2147483648
  %v2945 = vmul.f32 %v2944, 1.442695
  %v2946 = vpow.pop %v2945
  %v2947 = vadd.f32 %v2946, 1.0
  %v2948 = vrcp.pop %v2947
  %v2949 = vmul.f32 1.0, %v2948
  %v2951 = vrot.slane %v2943, 2
  %v2953 = vxor.u32 %v2951, 2147483648
  %v2954 = vmul.f32 %v2953, 1.442695
  %v2955 = vpow.pop %v2954
  %v2956 = vadd.f32 %v2955, 1.0
  %v2957 = vrcp.pop %v2956
  %v2958 = vmul.f32 1.0, %v2957
  %v2959 = vrot.slane %v2943, 4
  %v2961 = vtanh.pop %v2959
  %v2962 = vrot.slane %v2943, 6
  %v2964 = vxor.u32 %v2962, 2147483648
  %v2965 = vmul.f32 %v2964, 1.442695
  %v2966 = vpow.pop %v2965
  %v2967 = vadd.f32 %v2966, 1.0
  %v2968 = vrcp.pop %v2967
  %v2969 = vmul.f32 1.0, %v2968
  %v2970 = vmul.f32 %v2958, 0.0
  %v2971 = vmul.f32 %v2949, %v2961
  %v2972 = vadd.f32 %v2970, %v2971
  %v2973 = vtanh.pop %v2972
  %v2974 = vmul.f32 %v2969, %v2973
  %2975 = vst [vmem:[#allocation3] sm:$0x3] %v2974
  %2976 = vst [vmem:[%s962] sm:$0x3] %v2974
  %v2977 = vld [vmem:[%s964] sm:$0xff]
  %v2978 = vpack.c.bf16 %v2974, %v2974
  %2979 = vmatprep.subr.bf16.mxu0 %v2776
  %2980 = vmatpush1.bf16.msra.mxu0 %v2775
  %2981 = vmatprep.subr.bf16.mxu0 %v2780
  %2982 = vmatpush1.bf16.msra.mxu0 %v2779
  %2983 = vmatprep.subr.bf16.mxu0 %v2784
  %2984 = vmatpush1.bf16.msra.mxu0 %v2783
  %2985 = vmatprep.subr.bf16.mxu0 %v2788
  %2986 = vmatpush1.bf16.msra.mxu0 %v2787
  %2987 = vmatprep.subr.bf16.mxu0 %v2792
  %2988 = vmatpush1.bf16.msra.mxu0 %v2791
  %2989 = vmatprep.subr.bf16.mxu0 %v2796
  %2990 = vmatpush1.bf16.msra.mxu0 %v2795
  %2991 = vmatprep.subr.bf16.mxu0 %v2800
  %2992 = vmatpush1.bf16.msra.mxu0 %v2799
  %2993 = vmatprep.subr.bf16.mxu0 %v2804
  %2994 = vmatpush1.bf16.msra.mxu0 %v2803
  %2995 = vmatprep.subr.bf16.mxu0 0
  %2996 = vmatpush1.bf16.msra.mxu0 0
  %2997 = vmatprep.subr.bf16.mxu0 0
  %2998 = vmatpush1.bf16.msra.mxu0 0
  %2999 = vmatprep.subr.bf16.mxu0 0
  %3000 = vmatpush1.bf16.msra.mxu0 0
  %3001 = vmatprep.subr.bf16.mxu0 0
  %3002 = vmatpush1.bf16.msra.mxu0 0
  %3003 = vmatprep.subr.bf16.mxu0 0
  %3004 = vmatpush1.bf16.msra.mxu0 0
  %3005 = vmatprep.subr.bf16.mxu0 0
  %3006 = vmatpush1.bf16.msra.mxu0 0
  %3007 = vmatprep.subr.bf16.mxu0 0
  %3008 = vmatpush1.bf16.msra.mxu0 0
  %3009 = vmatprep.subr.bf16.mxu0 0
  %3010 = vmatpush1.bf16.msra.mxu0 0
  %3011 = vmatprep.mubr.bf16.mxu0 0
  %3012 = vmatmul.mubr.bf16.gmra.mrb[0].mxu0 %v2978
  %v3013 = vpop.f32.mrb[0].mxu0
  %v3014 = vadd.f32 0.0, %v3013
  %v3015 = vpop.f32.mrb[0].mxu0
  %v3016 = vadd.f32 0.0, %v3015
  %v3017 = vpop.f32.mrb[0].mxu0
  %v3018 = vpop.f32.mrb[0].mxu0
  %3019 = vdwg.mxu0
  %3020 = vmatprep.subr.bf16.mxu0 %v2778
  %3021 = vmatpush1.bf16.msra.mxu0 %v2777
  %3022 = vmatprep.subr.bf16.mxu0 %v2782
  %3023 = vmatpush1.bf16.msra.mxu0 %v2781
  %3024 = vmatprep.subr.bf16.mxu0 %v2786
  %3025 = vmatpush1.bf16.msra.mxu0 %v2785
  %3026 = vmatprep.subr.bf16.mxu0 %v2790
  %3027 = vmatpush1.bf16.msra.mxu0 %v2789
  %3028 = vmatprep.subr.bf16.mxu0 %v2794
  %3029 = vmatpush1.bf16.msra.mxu0 %v2793
  %3030 = vmatprep.subr.bf16.mxu0 %v2798
  %3031 = vmatpush1.bf16.msra.mxu0 %v2797
  %3032 = vmatprep.subr.bf16.mxu0 %v2802
  %3033 = vmatpush1.bf16.msra.mxu0 %v2801
  %3034 = vmatprep.subr.bf16.mxu0 %v2806
  %3035 = vmatpush1.bf16.msra.mxu0 %v2805
  %3036 = vmatprep.subr.bf16.mxu0 0
  %3037 = vmatpush1.bf16.msra.mxu0 0
  %3038 = vmatprep.subr.bf16.mxu0 0
  %3039 = vmatpush1.bf16.msra.mxu0 0
  %3040 = vmatprep.subr.bf16.mxu0 0
  %3041 = vmatpush1.bf16.msra.mxu0 0
  %3042 = vmatprep.subr.bf16.mxu0 0
  %3043 = vmatpush1.bf16.msra.mxu0 0
  %3044 = vmatprep.subr.bf16.mxu0 0
  %3045 = vmatpush1.bf16.msra.mxu0 0
  %3046 = vmatprep.subr.bf16.mxu0 0
  %3047 = vmatpush1.bf16.msra.mxu0 0
  %3048 = vmatprep.subr.bf16.mxu0 0
  %3049 = vmatpush1.bf16.msra.mxu0 0
  %3050 = vmatprep.subr.bf16.mxu0 0
  %3051 = vmatpush1.bf16.msra.mxu0 0
  %3052 = vmatprep.mubr.bf16.mxu0 0
  %3053 = vmatmul.mubr.bf16.gmra.mrb[0].mxu0 %v2978
  %v3054 = vpop.f32.mrb[0].mxu0
  %v3055 = vadd.f32 0.0, %v3054
  %v3056 = vpop.f32.mrb[0].mxu0
  %v3057 = vadd.f32 0.0, %v3056
  %v3058 = vpop.f32.mrb[0].mxu0
  %v3059 = vpop.f32.mrb[0].mxu0
  %3060 = vdwg.mxu0
  %v3065 = vcombine.low %v3014, %v3016
  %v3066 = vcombine.low %v3055, %v3057
  %v3068 = vunpack.c.l.s4 1983009808
  %v3069 = vunpack.c.0.s8 %v3068
  %v3070 = vlaneseq
  %v3071 = vshrl.u32 %v3070, 7
  %v3072 = vsub.s32 %v3069, %v3071
  %v3073 = vrot.slane %v3065, %v3072
  %v3075 = vunpack.c.l.s4 1983009808
  %v3076 = vunpack.c.0.s8 %v3075
  %v3077 = vlaneseq
  %v3078 = vshrl.u32 %v3077, 7
  %v3079 = vsub.s32 %v3076, %v3078
  %v3080 = vrot.slane %v3066, %v3079
  %v3081 = vcombine.low %v3073, %v3080
  %v3083 = vadd.f32 %v2977, %v3081
  %v3084 = vxor.u32 %v3083, 2147483648
  %v3085 = vmul.f32 %v3084, 1.442695
  %v3086 = vpow.pop %v3085
  %v3087 = vadd.f32 %v3086, 1.0
  %v3088 = vrcp.pop %v3087
  %v3089 = vmul.f32 1.0, %v3088
  %v3091 = vrot.slane %v3083, 2
  %v3093 = vxor.u32 %v3091, 2147483648
  %v3094 = vmul.f32 %v3093, 1.442695
  %v3095 = vpow.pop %v3094
  %v3096 = vadd.f32 %v3095, 1.0
  %v3097 = vrcp.pop %v3096
  %v3098 = vmul.f32 1.0, %v3097
  %v3099 = vrot.slane %v3083, 4
  %v3101 = vtanh.pop %v3099
  %v3102 = vrot.slane %v3083, 6
  %v3104 = vxor.u32 %v3102, 2147483648
  %v3105 = vmul.f32 %v3104, 1.442695
  %v3106 = vpow.pop %v3105
  %v3107 = vadd.f32 %v3106, 1.0
  %v3108 = vrcp.pop %v3107
  %v3109 = vmul.f32 1.0, %v3108
  %v3110 = vmul.f32 %v3098, %v2972
  %v3111 = vmul.f32 %v3089, %v3101
  %v3112 = vadd.f32 %v3110, %v3111
  %v3113 = vtanh.pop %v3112
  %v3114 = vmul.f32 %v3109, %v3113
  %3115 = vst [vmem:[%s1103] sm:$0x3] %v3114
  %3116 = vst [vmem:[%s1105] sm:$0x3] %v3114
  %v3117 = vld [vmem:[%s1107] sm:$0xff]
  %v3118 = vpack.c.bf16 %v3114, %v3114
  %3119 = vmatprep.subr.bf16.mxu0 %v2776
  %3120 = vmatpush1.bf16.msra.mxu0 %v2775
  %3121 = vmatprep.subr.bf16.mxu0 %v2780
  %3122 = vmatpush1.bf16.msra.mxu0 %v2779
  %3123 = vmatprep.subr.bf16.mxu0 %v2784
  %3124 = vmatpush1.bf16.msra.mxu0 %v2783
  %3125 = vmatprep.subr.bf16.mxu0 %v2788
  %3126 = vmatpush1.bf16.msra.mxu0 %v2787
  %3127 = vmatprep.subr.bf16.mxu0 %v2792
  %3128 = vmatpush1.bf16.msra.mxu0 %v2791
  %3129 = vmatprep.subr.bf16.mxu0 %v2796
  %3130 = vmatpush1.bf16.msra.mxu0 %v2795
  %3131 = vmatprep.subr.bf16.mxu0 %v2800
  %3132 = vmatpush1.bf16.msra.mxu0 %v2799
  %3133 = vmatprep.subr.bf16.mxu0 %v2804
  %3134 = vmatpush1.bf16.msra.mxu0 %v2803
  %3135 = vmatprep.subr.bf16.mxu0 0
  %3136 = vmatpush1.bf16.msra.mxu0 0
  %3137 = vmatprep.subr.bf16.mxu0 0
  %3138 = vmatpush1.bf16.msra.mxu0 0
  %3139 = vmatprep.subr.bf16.mxu0 0
  %3140 = vmatpush1.bf16.msra.mxu0 0
  %3141 = vmatprep.subr.bf16.mxu0 0
  %3142 = vmatpush1.bf16.msra.mxu0 0
  %3143 = vmatprep.subr.bf16.mxu0 0
  %3144 = vmatpush1.bf16.msra.mxu0 0
  %3145 = vmatprep.subr.bf16.mxu0 0
  %3146 = vmatpush1.bf16.msra.mxu0 0
  %3147 = vmatprep.subr.bf16.mxu0 0
  %3148 = vmatpush1.bf16.msra.mxu0 0
  %3149 = vmatprep.subr.bf16.mxu0 0
  %3150 = vmatpush1.bf16.msra.mxu0 0
  %3151 = vmatprep.mubr.bf16.mxu0 0
  %3152 = vmatmul.mubr.bf16.gmra.mrb[0].mxu0 %v3118
  %v3153 = vpop.f32.mrb[0].mxu0
  %v3154 = vadd.f32 0.0, %v3153
  %v3155 = vpop.f32.mrb[0].mxu0
  %v3156 = vadd.f32 0.0, %v3155
  %v3157 = vpop.f32.mrb[0].mxu0
  %v3158 = vpop.f32.mrb[0].mxu0
  %3159 = vdwg.mxu0
  %3160 = vmatprep.subr.bf16.mxu0 %v2778
  %3161 = vmatpush1.bf16.msra.mxu0 %v2777
  %3162 = vmatprep.subr.bf16.mxu0 %v2782
  %3163 = vmatpush1.bf16.msra.mxu0 %v2781
  %3164 = vmatprep.subr.bf16.mxu0 %v2786
  %3165 = vmatpush1.bf16.msra.mxu0 %v2785
  %3166 = vmatprep.subr.bf16.mxu0 %v2790
  %3167 = vmatpush1.bf16.msra.mxu0 %v2789
  %3168 = vmatprep.subr.bf16.mxu0 %v2794
  %3169 = vmatpush1.bf16.msra.mxu0 %v2793
  %3170 = vmatprep.subr.bf16.mxu0 %v2798
  %3171 = vmatpush1.bf16.msra.mxu0 %v2797
  %3172 = vmatprep.subr.bf16.mxu0 %v2802
  %3173 = vmatpush1.bf16.msra.mxu0 %v2801
  %3174 = vmatprep.subr.bf16.mxu0 %v2806
  %3175 = vmatpush1.bf16.msra.mxu0 %v2805
  %3176 = vmatprep.subr.bf16.mxu0 0
  %3177 = vmatpush1.bf16.msra.mxu0 0
  %3178 = vmatprep.subr.bf16.mxu0 0
  %3179 = vmatpush1.bf16.msra.mxu0 0
  %3180 = vmatprep.subr.bf16.mxu0 0
  %3181 = vmatpush1.bf16.msra.mxu0 0
  %3182 = vmatprep.subr.bf16.mxu0 0
  %3183 = vmatpush1.bf16.msra.mxu0 0
  %3184 = vmatprep.subr.bf16.mxu0 0
  %3185 = vmatpush1.bf16.msra.mxu0 0
  %3186 = vmatprep.subr.bf16.mxu0 0
  %3187 = vmatpush1.bf16.msra.mxu0 0
  %3188 = vmatprep.subr.bf16.mxu0 0
  %3189 = vmatpush1.bf16.msra.mxu0 0
  %3190 = vmatprep.subr.bf16.mxu0 0
  %3191 = vmatpush1.bf16.msra.mxu0 0
  %3192 = vmatprep.mubr.bf16.mxu0 0
  %3193 = vmatmul.mubr.bf16.gmra.mrb[0].mxu0 %v3118
  %v3194 = vpop.f32.mrb[0].mxu0
  %v3195 = vadd.f32 0.0, %v3194
  %v3196 = vpop.f32.mrb[0].mxu0
  %v3197 = vadd.f32 0.0, %v3196
  %v3198 = vpop.f32.mrb[0].mxu0
  %v3199 = vpop.f32.mrb[0].mxu0
  %3200 = vdwg.mxu0
  %v3205 = vcombine.low %v3154, %v3156
  %v3206 = vcombine.low %v3195, %v3197
  %v3208 = vunpack.c.l.s4 1983009808
  %v3209 = vunpack.c.0.s8 %v3208
  %v3210 = vlaneseq
  %v3211 = vshrl.u32 %v3210, 7
  %v3212 = vsub.s32 %v3209, %v3211
  %v3213 = vrot.slane %v3205, %v3212
  %v3215 = vunpack.c.l.s4 1983009808
  %v3216 = vunpack.c.0.s8 %v3215
  %v3217 = vlaneseq
  %v3218 = vshrl.u32 %v3217, 7
  %v3219 = vsub.s32 %v3216, %v3218
  %v3220 = vrot.slane %v3206, %v3219
  %v3221 = vcombine.low %v3213, %v3220
  %v3223 = vadd.f32 %v3117, %v3221
  %v3224 = vxor.u32 %v3223, 2147483648
  %v3225 = vmul.f32 %v3224, 1.442695
  %v3226 = vpow.pop %v3225
  %v3227 = vadd.f32 %v3226, 1.0
  %v3228 = vrcp.pop %v3227
  %v3229 = vmul.f32 1.0, %v3228
  %v3231 = vrot.slane %v3223, 2
  %v3233 = vxor.u32 %v3231, 2147483648
  %v3234 = vmul.f32 %v3233, 1.442695
  %v3235 = vpow.pop %v3234
  %v3236 = vadd.f32 %v3235, 1.0
  %v3237 = vrcp.pop %v3236
  %v3238 = vmul.f32 1.0, %v3237
  %v3239 = vrot.slane %v3223, 4
  %v3241 = vtanh.pop %v3239
  %v3242 = vrot.slane %v3223, 6
  %v3244 = vxor.u32 %v3242, 2147483648
  %v3245 = vmul.f32 %v3244, 1.442695
  %v3246 = vpow.pop %v3245
  %v3247 = vadd.f32 %v3246, 1.0
  %v3248 = vrcp.pop %v3247
  %v3249 = vmul.f32 1.0, %v3248
  %v3250 = vmul.f32 %v3238, %v3112
  %v3251 = vmul.f32 %v3229, %v3241
  %v3252 = vadd.f32 %v3250, %v3251
  %v3253 = vtanh.pop %v3252
  %v3254 = vmul.f32 %v3249, %v3253
  %3255 = vst [vmem:[%s1246] sm:$0x3] %v3254
  %3256 = vst [vmem:[%s1248] sm:$0x3] %v3254
  %v3257 = vld [vmem:[%s1250] sm:$0xff]
  %v3258 = vpack.c.bf16 %v3254, %v3254
  %3259 = vmatprep.subr.bf16.mxu0 %v2776
  %3260 = vmatpush1.bf16.msra.mxu0 %v2775
  %3261 = vmatprep.subr.bf16.mxu0 %v2780
  %3262 = vmatpush1.bf16.msra.mxu0 %v2779
  %3263 = vmatprep.subr.bf16.mxu0 %v2784
  %3264 = vmatpush1.bf16.msra.mxu0 %v2783
  %3265 = vmatprep.subr.bf16.mxu0 %v2788
  %3266 = vmatpush1.bf16.msra.mxu0 %v2787
  %3267 = vmatprep.subr.bf16.mxu0 %v2792
  %3268 = vmatpush1.bf16.msra.mxu0 %v2791
  %3269 = vmatprep.subr.bf16.mxu0 %v2796
  %3270 = vmatpush1.bf16.msra.mxu0 %v2795
  %3271 = vmatprep.subr.bf16.mxu0 %v2800
  %3272 = vmatpush1.bf16.msra.mxu0 %v2799
  %3273 = vmatprep.subr.bf16.mxu0 %v2804
  %3274 = vmatpush1.bf16.msra.mxu0 %v2803
  %3275 = vmatprep.subr.bf16.mxu0 0
  %3276 = vmatpush1.bf16.msra.mxu0 0
  %3277 = vmatprep.subr.bf16.mxu0 0
  %3278 = vmatpush1.bf16.msra.mxu0 0
  %3279 = vmatprep.subr.bf16.mxu0 0
  %3280 = vmatpush1.bf16.msra.mxu0 0
  %3281 = vmatprep.subr.bf16.mxu0 0
  %3282 = vmatpush1.bf16.msra.mxu0 0
  %3283 = vmatprep.subr.bf16.mxu0 0
  %3284 = vmatpush1.bf16.msra.mxu0 0
  %3285 = vmatprep.subr.bf16.mxu0 0
  %3286 = vmatpush1.bf16.msra.mxu0 0
  %3287 = vmatprep.subr.bf16.mxu0 0
  %3288 = vmatpush1.bf16.msra.mxu0 0
  %3289 = vmatprep.subr.bf16.mxu0 0
  %3290 = vmatpush1.bf16.msra.mxu0 0
  %3291 = vmatprep.mubr.bf16.mxu0 0
  %3292 = vmatmul.mubr.bf16.gmra.mrb[0].mxu0 %v3258
  %v3293 = vpop.f32.mrb[0].mxu0
  %v3294 = vadd.f32 0.0, %v3293
  %v3295 = vpop.f32.mrb[0].mxu0
  %v3296 = vadd.f32 0.0, %v3295
  %v3297 = vpop.f32.mrb[0].mxu0
  %v3298 = vpop.f32.mrb[0].mxu0
  %3299 = vdwg.mxu0
  %3300 = vmatprep.subr.bf16.mxu0 %v2778
  %3301 = vmatpush1.bf16.msra.mxu0 %v2777
  %3302 = vmatprep.subr.bf16.mxu0 %v2782
  %3303 = vmatpush1.bf16.msra.mxu0 %v2781
  %3304 = vmatprep.subr.bf16.mxu0 %v2786
  %3305 = vmatpush1.bf16.msra.mxu0 %v2785
  %3306 = vmatprep.subr.bf16.mxu0 %v2790
  %3307 = vmatpush1.bf16.msra.mxu0 %v2789
  %3308 = vmatprep.subr.bf16.mxu0 %v2794
  %3309 = vmatpush1.bf16.msra.mxu0 %v2793
  %3310 = vmatprep.subr.bf16.mxu0 %v2798
  %3311 = vmatpush1.bf16.msra.mxu0 %v2797
  %3312 = vmatprep.subr.bf16.mxu0 %v2802
  %3313 = vmatpush1.bf16.msra.mxu0 %v2801
  %3314 = vmatprep.subr.bf16.mxu0 %v2806
  %3315 = vmatpush1.bf16.msra.mxu0 %v2805
  %3316 = vmatprep.subr.bf16.mxu0 0
  %3317 = vmatpush1.bf16.msra.mxu0 0
  %3318 = vmatprep.subr.bf16.mxu0 0
  %3319 = vmatpush1.bf16.msra.mxu0 0
  %3320 = vmatprep.subr.bf16.mxu0 0
  %3321 = vmatpush1.bf16.msra.mxu0 0
  %3322 = vmatprep.subr.bf16.mxu0 0
  %3323 = vmatpush1.bf16.msra.mxu0 0
  %3324 = vmatprep.subr.bf16.mxu0 0
  %3325 = vmatpush1.bf16.msra.mxu0 0
  %3326 = vmatprep.subr.bf16.mxu0 0
  %3327 = vmatpush1.bf16.msra.mxu0 0
  %3328 = vmatprep.subr.bf16.mxu0 0
  %3329 = vmatpush1.bf16.msra.mxu0 0
  %3330 = vmatprep.subr.bf16.mxu0 0
  %3331 = vmatpush1.bf16.msra.mxu0 0
  %3332 = vmatprep.mubr.bf16.mxu0 0
  %3333 = vmatmul.mubr.bf16.gmra.mrb[0].mxu0 %v3258
  %v3334 = vpop.f32.mrb[0].mxu0
  %v3335 = vadd.f32 0.0, %v3334
  %v3336 = vpop.f32.mrb[0].mxu0
  %v3337 = vadd.f32 0.0, %v3336
  %v3338 = vpop.f32.mrb[0].mxu0
  %v3339 = vpop.f32.mrb[0].mxu0
  %3340 = vdwg.mxu0
  %v3345 = vcombine.low %v3294, %v3296
  %v3346 = vcombine.low %v3335, %v3337
  %v3348 = vunpack.c.l.s4 1983009808
  %v3349 = vunpack.c.0.s8 %v3348
  %v3350 = vlaneseq
  %v3351 = vshrl.u32 %v3350, 7
  %v3352 = vsub.s32 %v3349, %v3351
  %v3353 = vrot.slane %v3345, %v3352
  %v3355 = vunpack.c.l.s4 1983009808
  %v3356 = vunpack.c.0.s8 %v3355
  %v3357 = vlaneseq
  %v3358 = vshrl.u32 %v3357, 7
  %v3359 = vsub.s32 %v3356, %v3358
  %v3360 = vrot.slane %v3346, %v3359
  %v3361 = vcombine.low %v3353, %v3360
  %v3363 = vadd.f32 %v3257, %v3361
  %v3364 = vxor.u32 %v3363, 2147483648
  %v3365 = vmul.f32 %v3364, 1.442695
  %v3366 = vpow.pop %v3365
  %v3367 = vadd.f32 %v3366, 1.0
  %v3368 = vrcp.pop %v3367
  %v3369 = vmul.f32 1.0, %v3368
  %v3371 = vrot.slane %v3363, 2
  %v3373 = vxor.u32 %v3371, 2147483648
  %v3374 = vmul.f32 %v3373, 1.442695
  %v3375 = vpow.pop %v3374
  %v3376 = vadd.f32 %v3375, 1.0
  %v3377 = vrcp.pop %v3376
  %v3378 = vmul.f32 1.0, %v3377
  %v3379 = vrot.slane %v3363, 4
  %v3381 = vtanh.pop %v3379
  %v3382 = vrot.slane %v3363, 6
  %v3384 = vxor.u32 %v3382, 2147483648
  %v3385 = vmul.f32 %v3384, 1.442695
  %v3386 = vpow.pop %v3385
  %v3387 = vadd.f32 %v3386, 1.0
  %v3388 = vrcp.pop %v3387
  %v3389 = vmul.f32 1.0, %v3388
  %v3390 = vmul.f32 %v3378, %v3252
  %v3391 = vmul.f32 %v3369, %v3381
  %v3392 = vadd.f32 %v3390, %v3391
  %v3393 = vtanh.pop %v3392
  %v3394 = vmul.f32 %v3389, %v3393
  %3395 = vst [vmem:[%s1389] sm:$0x3] %v3394
  %3396 = vst [vmem:[%s1391] sm:$0x3] %v3394
  %v3397 = vld [vmem:[%s1393] sm:$0xff]
  %v3398 = vpack.c.bf16 %v3394, %v3394
  %3399 = vmatprep.subr.bf16.mxu0 %v2776
  %3400 = vmatpush1.bf16.msra.mxu0 %v2775
  %3401 = vmatprep.subr.bf16.mxu0 %v2780
  %3402 = vmatpush1.bf16.msra.mxu0 %v2779
  %3403 = vmatprep.subr.bf16.mxu0 %v2784
  %3404 = vmatpush1.bf16.msra.mxu0 %v2783
  %3405 = vmatprep.subr.bf16.mxu0 %v2788
  %3406 = vmatpush1.bf16.msra.mxu0 %v2787
  %3407 = vmatprep.subr.bf16.mxu0 %v2792
  %3408 = vmatpush1.bf16.msra.mxu0 %v2791
  %3409 = vmatprep.subr.bf16.mxu0 %v2796
  %3410 = vmatpush1.bf16.msra.mxu0 %v2795
  %3411 = vmatprep.subr.bf16.mxu0 %v2800
  %3412 = vmatpush1.bf16.msra.mxu0 %v2799
  %3413 = vmatprep.subr.bf16.mxu0 %v2804
  %3414 = vmatpush1.bf16.msra.mxu0 %v2803
  %3415 = vmatprep.subr.bf16.mxu0 0
  %3416 = vmatpush1.bf16.msra.mxu0 0
  %3417 = vmatprep.subr.bf16.mxu0 0
  %3418 = vmatpush1.bf16.msra.mxu0 0
  %3419 = vmatprep.subr.bf16.mxu0 0
  %3420 = vmatpush1.bf16.msra.mxu0 0
  %3421 = vmatprep.subr.bf16.mxu0 0
  %3422 = vmatpush1.bf16.msra.mxu0 0
  %3423 = vmatprep.subr.bf16.mxu0 0
  %3424 = vmatpush1.bf16.msra.mxu0 0
  %3425 = vmatprep.subr.bf16.mxu0 0
  %3426 = vmatpush1.bf16.msra.mxu0 0
  %3427 = vmatprep.subr.bf16.mxu0 0
  %3428 = vmatpush1.bf16.msra.mxu0 0
  %3429 = vmatprep.subr.bf16.mxu0 0
  %3430 = vmatpush1.bf16.msra.mxu0 0
  %3431 = vmatprep.mubr.bf16.mxu0 0
  %3432 = vmatmul.mubr.bf16.gmra.mrb[0].mxu0 %v3398
  %v3433 = vpop.f32.mrb[0].mxu0
  %v3434 = vadd.f32 0.0, %v3433
  %v3435 = vpop.f32.mrb[0].mxu0
  %v3436 = vadd.f32 0.0, %v3435
  %v3437 = vpop.f32.mrb[0].mxu0
  %v3438 = vpop.f32.mrb[0].mxu0
  %3439 = vdwg.mxu0
  %3440 = vmatprep.subr.bf16.mxu0 %v2778
  %3441 = vmatpush1.bf16.msra.mxu0 %v2777
  %3442 = vmatprep.subr.bf16.mxu0 %v2782
  %3443 = vmatpush1.bf16.msra.mxu0 %v2781
  %3444 = vmatprep.subr.bf16.mxu0 %v2786
  %3445 = vmatpush1.bf16.msra.mxu0 %v2785
  %3446 = vmatprep.subr.bf16.mxu0 %v2790
  %3447 = vmatpush1.bf16.msra.mxu0 %v2789
  %3448 = vmatprep.subr.bf16.mxu0 %v2794
  %3449 = vmatpush1.bf16.msra.mxu0 %v2793
  %3450 = vmatprep.subr.bf16.mxu0 %v2798
  %3451 = vmatpush1.bf16.msra.mxu0 %v2797
  %3452 = vmatprep.subr.bf16.mxu0 %v2802
  %3453 = vmatpush1.bf16.msra.mxu0 %v2801
  %3454 = vmatprep.subr.bf16.mxu0 %v2806
  %3455 = vmatpush1.bf16.msra.mxu0 %v2805
  %3456 = vmatprep.subr.bf16.mxu0 0
  %3457 = vmatpush1.bf16.msra.mxu0 0
  %3458 = vmatprep.subr.bf16.mxu0 0
  %3459 = vmatpush1.bf16.msra.mxu0 0
  %3460 = vmatprep.subr.bf16.mxu0 0
  %3461 = vmatpush1.bf16.msra.mxu0 0
  %3462 = vmatprep.subr.bf16.mxu0 0
  %3463 = vmatpush1.bf16.msra.mxu0 0
  %3464 = vmatprep.subr.bf16.mxu0 0
  %3465 = vmatpush1.bf16.msra.mxu0 0
  %3466 = vmatprep.subr.bf16.mxu0 0
  %3467 = vmatpush1.bf16.msra.mxu0 0
  %3468 = vmatprep.subr.bf16.mxu0 0
  %3469 = vmatpush1.bf16.msra.mxu0 0
  %3470 = vmatprep.subr.bf16.mxu0 0
  %3471 = vmatpush1.bf16.msra.mxu0 0
  %3472 = vmatprep.mubr.bf16.mxu0 0
  %3473 = vmatmul.mubr.bf16.gmra.mrb[0].mxu0 %v3398
  %v3474 = vpop.f32.mrb[0].mxu0
  %v3475 = vadd.f32 0.0, %v3474
  %v3476 = vpop.f32.mrb[0].mxu0
  %v3477 = vadd.f32 0.0, %v3476
  %v3478 = vpop.f32.mrb[0].mxu0
  %v3479 = vpop.f32.mrb[0].mxu0
  %3480 = vdwg.mxu0
  %v3485 = vcombine.low %v3434, %v3436
  %v3486 = vcombine.low %v3475, %v3477
  %v3488 = vunpack.c.l.s4 1983009808
  %v3489 = vunpack.c.0.s8 %v3488
  %v3490 = vlaneseq
  %v3491 = vshrl.u32 %v3490, 7
  %v3492 = vsub.s32 %v3489, %v3491
  %v3493 = vrot.slane %v3485, %v3492
  %v3495 = vunpack.c.l.s4 1983009808
  %v3496 = vunpack.c.0.s8 %v3495
  %v3497 = vlaneseq
  %v3498 = vshrl.u32 %v3497, 7
  %v3499 = vsub.s32 %v3496, %v3498
  %v3500 = vrot.slane %v3486, %v3499
  %v3501 = vcombine.low %v3493, %v3500
  %v3503 = vadd.f32 %v3397, %v3501
  %v3504 = vxor.u32 %v3503, 2147483648
  %v3505 = vmul.f32 %v3504, 1.442695
  %v3506 = vpow.pop %v3505
  %v3507 = vadd.f32 %v3506, 1.0
  %v3508 = vrcp.pop %v3507
  %v3509 = vmul.f32 1.0, %v3508
  %v3511 = vrot.slane %v3503, 2
  %v3513 = vxor.u32 %v3511, 2147483648
  %v3514 = vmul.f32 %v3513, 1.442695
  %v3515 = vpow.pop %v3514
  %v3516 = vadd.f32 %v3515, 1.0
  %v3517 = vrcp.pop %v3516
  %v3518 = vmul.f32 1.0, %v3517
  %v3519 = vrot.slane %v3503, 4
  %v3521 = vtanh.pop %v3519
  %v3522 = vrot.slane %v3503, 6
  %v3524 = vxor.u32 %v3522, 2147483648
  %v3525 = vmul.f32 %v3524, 1.442695
  %v3526 = vpow.pop %v3525
  %v3527 = vadd.f32 %v3526, 1.0
  %v3528 = vrcp.pop %v3527
  %v3529 = vmul.f32 1.0, %v3528
  %v3530 = vmul.f32 %v3518, %v3392
  %v3531 = vmul.f32 %v3509, %v3521
  %v3532 = vadd.f32 %v3530, %v3531
  %v3533 = vtanh.pop %v3532
  %v3534 = vmul.f32 %v3529, %v3533
  %3535 = vst [vmem:[%s1532] sm:$0x3] %v3534
  %3536 = vst [vmem:[%s1534] sm:$0x3] %v3534
  %v3537 = vld [vmem:[%s1536] sm:$0xff]
  %v3538 = vpack.c.bf16 %v3534, %v3534
  %3539 = vmatprep.subr.bf16.mxu0 %v2776
  %3540 = vmatpush1.bf16.msra.mxu0 %v2775
  %3541 = vmatprep.subr.bf16.mxu0 %v2780
  %3542 = vmatpush1.bf16.msra.mxu0 %v2779
  %3543 = vmatprep.subr.bf16.mxu0 %v2784
  %3544 = vmatpush1.bf16.msra.mxu0 %v2783
  %3545 = vmatprep.subr.bf16.mxu0 %v2788
  %3546 = vmatpush1.bf16.msra.mxu0 %v2787
  %3547 = vmatprep.subr.bf16.mxu0 %v2792
  %3548 = vmatpush1.bf16.msra.mxu0 %v2791
  %3549 = vmatprep.subr.bf16.mxu0 %v2796
  %3550 = vmatpush1.bf16.msra.mxu0 %v2795
  %3551 = vmatprep.subr.bf16.mxu0 %v2800
  %3552 = vmatpush1.bf16.msra.mxu0 %v2799
  %3553 = vmatprep.subr.bf16.mxu0 %v2804
  %3554 = vmatpush1.bf16.msra.mxu0 %v2803
  %3555 = vmatprep.subr.bf16.mxu0 0
  %3556 = vmatpush1.bf16.msra.mxu0 0
  %3557 = vmatprep.subr.bf16.mxu0 0
  %3558 = vmatpush1.bf16.msra.mxu0 0
  %3559 = vmatprep.subr.bf16.mxu0 0
  %3560 = vmatpush1.bf16.msra.mxu0 0
  %3561 = vmatprep.subr.bf16.mxu0 0
  %3562 = vmatpush1.bf16.msra.mxu0 0
  %3563 = vmatprep.subr.bf16.mxu0 0
  %3564 = vmatpush1.bf16.msra.mxu0 0
  %3565 = vmatprep.subr.bf16.mxu0 0
  %3566 = vmatpush1.bf16.msra.mxu0 0
  %3567 = vmatprep.subr.bf16.mxu0 0
  %3568 = vmatpush1.bf16.msra.mxu0 0
  %3569 = vmatprep.subr.bf16.mxu0 0
  %3570 = vmatpush1.bf16.msra.mxu0 0
  %3571 = vmatprep.mubr.bf16.mxu0 0
  %3572 = vmatmul.mubr.bf16.gmra.mrb[0].mxu0 %v3538
  %v3573 = vpop.f32.mrb[0].mxu0
  %v3574 = vadd.f32 0.0, %v3573
  %v3575 = vpop.f32.mrb[0].mxu0
  %v3576 = vadd.f32 0.0, %v3575
  %v3577 = vpop.f32.mrb[0].mxu0
  %v3578 = vpop.f32.mrb[0].mxu0
  %3579 = vdwg.mxu0
  %3580 = vmatprep.subr.bf16.mxu0 %v2778
  %3581 = vmatpush1.bf16.msra.mxu0 %v2777
  %3582 = vmatprep.subr.bf16.mxu0 %v2782
  %3583 = vmatpush1.bf16.msra.mxu0 %v2781
  %3584 = vmatprep.subr.bf16.mxu0 %v2786
  %3585 = vmatpush1.bf16.msra.mxu0 %v2785
  %3586 = vmatprep.subr.bf16.mxu0 %v2790
  %3587 = vmatpush1.bf16.msra.mxu0 %v2789
  %3588 = vmatprep.subr.bf16.mxu0 %v2794
  %3589 = vmatpush1.bf16.msra.mxu0 %v2793
  %3590 = vmatprep.subr.bf16.mxu0 %v2798
  %3591 = vmatpush1.bf16.msra.mxu0 %v2797
  %3592 = vmatprep.subr.bf16.mxu0 %v2802
  %3593 = vmatpush1.bf16.msra.mxu0 %v2801
  %3594 = vmatprep.subr.bf16.mxu0 %v2806
  %3595 = vmatpush1.bf16.msra.mxu0 %v2805
  %3596 = vmatprep.subr.bf16.mxu0 0
  %3597 = vmatpush1.bf16.msra.mxu0 0
  %3598 = vmatprep.subr.bf16.mxu0 0
  %3599 = vmatpush1.bf16.msra.mxu0 0
  %3600 = vmatprep.subr.bf16.mxu0 0
  %3601 = vmatpush1.bf16.msra.mxu0 0
  %3602 = vmatprep.subr.bf16.mxu0 0
  %3603 = vmatpush1.bf16.msra.mxu0 0
  %3604 = vmatprep.subr.bf16.mxu0 0
  %3605 = vmatpush1.bf16.msra.mxu0 0
  %3606 = vmatprep.subr.bf16.mxu0 0
  %3607 = vmatpush1.bf16.msra.mxu0 0
  %3608 = vmatprep.subr.bf16.mxu0 0
  %3609 = vmatpush1.bf16.msra.mxu0 0
  %3610 = vmatprep.subr.bf16.mxu0 0
  %3611 = vmatpush1.bf16.msra.mxu0 0
  %3612 = vmatprep.mubr.bf16.mxu0 0
  %3613 = vmatmul.mubr.bf16.gmra.mrb[0].mxu0 %v3538
  %v3614 = vpop.f32.mrb[0].mxu0
  %v3615 = vadd.f32 0.0, %v3614
  %v3616 = vpop.f32.mrb[0].mxu0
  %v3617 = vadd.f32 0.0, %v3616
  %v3618 = vpop.f32.mrb[0].mxu0
  %v3619 = vpop.f32.mrb[0].mxu0
  %3620 = vdwg.mxu0
  %v3625 = vcombine.low %v3574, %v3576
  %v3626 = vcombine.low %v3615, %v3617
  %v3628 = vunpack.c.l.s4 1983009808
  %v3629 = vunpack.c.0.s8 %v3628
  %v3630 = vlaneseq
  %v3631 = vshrl.u32 %v3630, 7
  %v3632 = vsub.s32 %v3629, %v3631
  %v3633 = vrot.slane %v3625, %v3632
  %v3635 = vunpack.c.l.s4 1983009808
  %v3636 = vunpack.c.0.s8 %v3635
  %v3637 = vlaneseq
  %v3638 = vshrl.u32 %v3637, 7
  %v3639 = vsub.s32 %v3636, %v3638
  %v3640 = vrot.slane %v3626, %v3639
  %v3641 = vcombine.low %v3633, %v3640
  %v3643 = vadd.f32 %v3537, %v3641
  %v3644 = vxor.u32 %v3643, 2147483648
  %v3645 = vmul.f32 %v3644, 1.442695
  %v3646 = vpow.pop %v3645
  %v3647 = vadd.f32 %v3646, 1.0
  %v3648 = vrcp.pop %v3647
  %v3649 = vmul.f32 1.0, %v3648
  %v3651 = vrot.slane %v3643, 2
  %v3653 = vxor.u32 %v3651, 2147483648
  %v3654 = vmul.f32 %v3653, 1.442695
  %v3655 = vpow.pop %v3654
  %v3656 = vadd.f32 %v3655, 1.0
  %v3657 = vrcp.pop %v3656
  %v3658 = vmul.f32 1.0, %v3657
  %v3659 = vrot.slane %v3643, 4
  %v3661 = vtanh.pop %v3659
  %v3662 = vrot.slane %v3643, 6
  %v3664 = vxor.u32 %v3662, 2147483648
  %v3665 = vmul.f32 %v3664, 1.442695
  %v3666 = vpow.pop %v3665
  %v3667 = vadd.f32 %v3666, 1.0
  %v3668 = vrcp.pop %v3667
  %v3669 = vmul.f32 1.0, %v3668
  %v3670 = vmul.f32 %v3658, %v3532
  %v3671 = vmul.f32 %v3649, %v3661
  %v3672 = vadd.f32 %v3670, %v3671
  %v3673 = vtanh.pop %v3672
  %v3674 = vmul.f32 %v3669, %v3673
  %3675 = vst [vmem:[%s1675] sm:$0x3] %v3674
  %3676 = vst [vmem:[%s1677] sm:$0x3] %v3674
  %v3677 = vld [vmem:[%s1679] sm:$0xff]
  %v3678 = vpack.c.bf16 %v3674, %v3674
  %3679 = vmatprep.subr.bf16.mxu0 %v2776
  %3680 = vmatpush1.bf16.msra.mxu0 %v2775
  %3681 = vmatprep.subr.bf16.mxu0 %v2780
  %3682 = vmatpush1.bf16.msra.mxu0 %v2779
  %3683 = vmatprep.subr.bf16.mxu0 %v2784
  %3684 = vmatpush1.bf16.msra.mxu0 %v2783
  %3685 = vmatprep.subr.bf16.mxu0 %v2788
  %3686 = vmatpush1.bf16.msra.mxu0 %v2787
  %3687 = vmatprep.subr.bf16.mxu0 %v2792
  %3688 = vmatpush1.bf16.msra.mxu0 %v2791
  %3689 = vmatprep.subr.bf16.mxu0 %v2796
  %3690 = vmatpush1.bf16.msra.mxu0 %v2795
  %3691 = vmatprep.subr.bf16.mxu0 %v2800
  %3692 = vmatpush1.bf16.msra.mxu0 %v2799
  %3693 = vmatprep.subr.bf16.mxu0 %v2804
  %3694 = vmatpush1.bf16.msra.mxu0 %v2803
  %3695 = vmatprep.subr.bf16.mxu0 0
  %3696 = vmatpush1.bf16.msra.mxu0 0
  %3697 = vmatprep.subr.bf16.mxu0 0
  %3698 = vmatpush1.bf16.msra.mxu0 0
  %3699 = vmatprep.subr.bf16.mxu0 0
  %3700 = vmatpush1.bf16.msra.mxu0 0
  %3701 = vmatprep.subr.bf16.mxu0 0
  %3702 = vmatpush1.bf16.msra.mxu0 0
  %3703 = vmatprep.subr.bf16.mxu0 0
  %3704 = vmatpush1.bf16.msra.mxu0 0
  %3705 = vmatprep.subr.bf16.mxu0 0
  %3706 = vmatpush1.bf16.msra.mxu0 0
  %3707 = vmatprep.subr.bf16.mxu0 0
  %3708 = vmatpush1.bf16.msra.mxu0 0
  %3709 = vmatprep.subr.bf16.mxu0 0
  %3710 = vmatpush1.bf16.msra.mxu0 0
  %3711 = vmatprep.mubr.bf16.mxu0 0
  %3712 = vmatmul.mubr.bf16.gmra.mrb[0].mxu0 %v3678
  %v3713 = vpop.f32.mrb[0].mxu0
  %v3714 = vadd.f32 0.0, %v3713
  %v3715 = vpop.f32.mrb[0].mxu0
  %v3716 = vadd.f32 0.0, %v3715
  %v3717 = vpop.f32.mrb[0].mxu0
  %v3718 = vpop.f32.mrb[0].mxu0
  %3719 = vdwg.mxu0
  %3720 = vmatprep.subr.bf16.mxu0 %v2778
  %3721 = vmatpush1.bf16.msra.mxu0 %v2777
  %3722 = vmatprep.subr.bf16.mxu0 %v2782
  %3723 = vmatpush1.bf16.msra.mxu0 %v2781
  %3724 = vmatprep.subr.bf16.mxu0 %v2786
  %3725 = vmatpush1.bf16.msra.mxu0 %v2785
  %3726 = vmatprep.subr.bf16.mxu0 %v2790
  %3727 = vmatpush1.bf16.msra.mxu0 %v2789
  %3728 = vmatprep.subr.bf16.mxu0 %v2794
  %3729 = vmatpush1.bf16.msra.mxu0 %v2793
  %3730 = vmatprep.subr.bf16.mxu0 %v2798
  %3731 = vmatpush1.bf16.msra.mxu0 %v2797
  %3732 = vmatprep.subr.bf16.mxu0 %v2802
  %3733 = vmatpush1.bf16.msra.mxu0 %v2801
  %3734 = vmatprep.subr.bf16.mxu0 %v2806
  %3735 = vmatpush1.bf16.msra.mxu0 %v2805
  %3736 = vmatprep.subr.bf16.mxu0 0
  %3737 = vmatpush1.bf16.msra.mxu0 0
  %3738 = vmatprep.subr.bf16.mxu0 0
  %3739 = vmatpush1.bf16.msra.mxu0 0
  %3740 = vmatprep.subr.bf16.mxu0 0
  %3741 = vmatpush1.bf16.msra.mxu0 0
  %3742 = vmatprep.subr.bf16.mxu0 0
  %3743 = vmatpush1.bf16.msra.mxu0 0
  %3744 = vmatprep.subr.bf16.mxu0 0
  %3745 = vmatpush1.bf16.msra.mxu0 0
  %3746 = vmatprep.subr.bf16.mxu0 0
  %3747 = vmatpush1.bf16.msra.mxu0 0
  %3748 = vmatprep.subr.bf16.mxu0 0
  %3749 = vmatpush1.bf16.msra.mxu0 0
  %3750 = vmatprep.subr.bf16.mxu0 0
  %3751 = vmatpush1.bf16.msra.mxu0 0
  %3752 = vmatprep.mubr.bf16.mxu0 0
  %3753 = vmatmul.mubr.bf16.gmra.mrb[0].mxu0 %v3678
  %v3754 = vpop.f32.mrb[0].mxu0
  %v3755 = vadd.f32 0.0, %v3754
  %v3756 = vpop.f32.mrb[0].mxu0
  %v3757 = vadd.f32 0.0, %v3756
  %v3758 = vpop.f32.mrb[0].mxu0
  %v3759 = vpop.f32.mrb[0].mxu0
  %3760 = vdwg.mxu0
  %v3765 = vcombine.low %v3714, %v3716
  %v3766 = vcombine.low %v3755, %v3757
  %v3768 = vunpack.c.l.s4 1983009808
  %v3769 = vunpack.c.0.s8 %v3768
  %v3770 = vlaneseq
  %v3771 = vshrl.u32 %v3770, 7
  %v3772 = vsub.s32 %v3769, %v3771
  %v3773 = vrot.slane %v3765, %v3772
  %v3775 = vunpack.c.l.s4 1983009808
  %v3776 = vunpack.c.0.s8 %v3775
  %v3777 = vlaneseq
  %v3778 = vshrl.u32 %v3777, 7
  %v3779 = vsub.s32 %v3776, %v3778
  %v3780 = vrot.slane %v3766, %v3779
  %v3781 = vcombine.low %v3773, %v3780
  %v3783 = vadd.f32 %v3677, %v3781
  %v3784 = vxor.u32 %v3783, 2147483648
  %v3785 = vmul.f32 %v3784, 1.442695
  %v3786 = vpow.pop %v3785
  %v3787 = vadd.f32 %v3786, 1.0
  %v3788 = vrcp.pop %v3787
  %v3789 = vmul.f32 1.0, %v3788
  %v3791 = vrot.slane %v3783, 2
  %v3793 = vxor.u32 %v3791, 2147483648
  %v3794 = vmul.f32 %v3793, 1.442695
  %v3795 = vpow.pop %v3794
  %v3796 = vadd.f32 %v3795, 1.0
  %v3797 = vrcp.pop %v3796
  %v3798 = vmul.f32 1.0, %v3797
  %v3799 = vrot.slane %v3783, 4
  %v3801 = vtanh.pop %v3799
  %v3802 = vrot.slane %v3783, 6
  %v3804 = vxor.u32 %v3802, 2147483648
  %v3805 = vmul.f32 %v3804, 1.442695
  %v3806 = vpow.pop %v3805
  %v3807 = vadd.f32 %v3806, 1.0
  %v3808 = vrcp.pop %v3807
  %v3809 = vmul.f32 1.0, %v3808
  %v3810 = vmul.f32 %v3798, %v3672
  %v3811 = vmul.f32 %v3789, %v3801
  %v3812 = vadd.f32 %v3810, %v3811
  %v3813 = vtanh.pop %v3812
  %v3814 = vmul.f32 %v3809, %v3813
  %3815 = vst [vmem:[%s1818] sm:$0x3] %v3814
  %3816 = vst [vmem:[%s1820] sm:$0x3] %v3814
  %v3817 = vld [vmem:[%s1822] sm:$0xff]
  %v3818 = vpack.c.bf16 %v3814, %v3814
  %3819 = vmatprep.subr.bf16.mxu0 %v2776
  %3820 = vmatpush1.bf16.msra.mxu0 %v2775
  %3821 = vmatprep.subr.bf16.mxu0 %v2780
  %3822 = vmatpush1.bf16.msra.mxu0 %v2779
  %3823 = vmatprep.subr.bf16.mxu0 %v2784
  %3824 = vmatpush1.bf16.msra.mxu0 %v2783
  %3825 = vmatprep.subr.bf16.mxu0 %v2788
  %3826 = vmatpush1.bf16.msra.mxu0 %v2787
  %3827 = vmatprep.subr.bf16.mxu0 %v2792
  %3828 = vmatpush1.bf16.msra.mxu0 %v2791
  %3829 = vmatprep.subr.bf16.mxu0 %v2796
  %3830 = vmatpush1.bf16.msra.mxu0 %v2795
  %3831 = vmatprep.subr.bf16.mxu0 %v2800
  %3832 = vmatpush1.bf16.msra.mxu0 %v2799
  %3833 = vmatprep.subr.bf16.mxu0 %v2804
  %3834 = vmatpush1.bf16.msra.mxu0 %v2803
  %3835 = vmatprep.subr.bf16.mxu0 0
  %3836 = vmatpush1.bf16.msra.mxu0 0
  %3837 = vmatprep.subr.bf16.mxu0 0
  %3838 = vmatpush1.bf16.msra.mxu0 0
  %3839 = vmatprep.subr.bf16.mxu0 0
  %3840 = vmatpush1.bf16.msra.mxu0 0
  %3841 = vmatprep.subr.bf16.mxu0 0
  %3842 = vmatpush1.bf16.msra.mxu0 0
  %3843 = vmatprep.subr.bf16.mxu0 0
  %3844 = vmatpush1.bf16.msra.mxu0 0
  %3845 = vmatprep.subr.bf16.mxu0 0
  %3846 = vmatpush1.bf16.msra.mxu0 0
  %3847 = vmatprep.subr.bf16.mxu0 0
  %3848 = vmatpush1.bf16.msra.mxu0 0
  %3849 = vmatprep.subr.bf16.mxu0 0
  %3850 = vmatpush1.bf16.msra.mxu0 0
  %3851 = vmatprep.mubr.bf16.mxu0 0
  %3852 = vmatmul.mubr.bf16.gmra.mrb[0].mxu0 %v3818
  %v3853 = vpop.f32.mrb[0].mxu0
  %v3854 = vadd.f32 0.0, %v3853
  %v3855 = vpop.f32.mrb[0].mxu0
  %v3856 = vadd.f32 0.0, %v3855
  %v3857 = vpop.f32.mrb[0].mxu0
  %v3858 = vpop.f32.mrb[0].mxu0
  %3859 = vdwg.mxu0
  %3860 = vmatprep.subr.bf16.mxu0 %v2778
  %3861 = vmatpush1.bf16.msra.mxu0 %v2777
  %3862 = vmatprep.subr.bf16.mxu0 %v2782
  %3863 = vmatpush1.bf16.msra.mxu0 %v2781
  %3864 = vmatprep.subr.bf16.mxu0 %v2786
  %3865 = vmatpush1.bf16.msra.mxu0 %v2785
  %3866 = vmatprep.subr.bf16.mxu0 %v2790
  %3867 = vmatpush1.bf16.msra.mxu0 %v2789
  %3868 = vmatprep.subr.bf16.mxu0 %v2794
  %3869 = vmatpush1.bf16.msra.mxu0 %v2793
  %3870 = vmatprep.subr.bf16.mxu0 %v2798
  %3871 = vmatpush1.bf16.msra.mxu0 %v2797
  %3872 = vmatprep.subr.bf16.mxu0 %v2802
  %3873 = vmatpush1.bf16.msra.mxu0 %v2801
  %3874 = vmatprep.subr.bf16.mxu0 %v2806
  %3875 = vmatpush1.bf16.msra.mxu0 %v2805
  %3876 = vmatprep.subr.bf16.mxu0 0
  %3877 = vmatpush1.bf16.msra.mxu0 0
  %3878 = vmatprep.subr.bf16.mxu0 0
  %3879 = vmatpush1.bf16.msra.mxu0 0
  %3880 = vmatprep.subr.bf16.mxu0 0
  %3881 = vmatpush1.bf16.msra.mxu0 0
  %3882 = vmatprep.subr.bf16.mxu0 0
  %3883 = vmatpush1.bf16.msra.mxu0 0
  %3884 = vmatprep.subr.bf16.mxu0 0
  %3885 = vmatpush1.bf16.msra.mxu0 0
  %3886 = vmatprep.subr.bf16.mxu0 0
  %3887 = vmatpush1.bf16.msra.mxu0 0
  %3888 = vmatprep.subr.bf16.mxu0 0
  %3889 = vmatpush1.bf16.msra.mxu0 0
  %3890 = vmatprep.subr.bf16.mxu0 0
  %3891 = vmatpush1.bf16.msra.mxu0 0
  %3892 = vmatprep.mubr.bf16.mxu0 0
  %3893 = vmatmul.mubr.bf16.gmra.mrb[0].mxu0 %v3818
  %v3894 = vpop.f32.mrb[0].mxu0
  %v3895 = vadd.f32 0.0, %v3894
  %v3896 = vpop.f32.mrb[0].mxu0
  %v3897 = vadd.f32 0.0, %v3896
  %v3898 = vpop.f32.mrb[0].mxu0
  %v3899 = vpop.f32.mrb[0].mxu0
  %3900 = vdwg.mxu0
  %v3905 = vcombine.low %v3854, %v3856
  %v3906 = vcombine.low %v3895, %v3897
  %v3908 = vunpack.c.l.s4 1983009808
  %v3909 = vunpack.c.0.s8 %v3908
  %v3910 = vlaneseq
  %v3911 = vshrl.u32 %v3910, 7
  %v3912 = vsub.s32 %v3909, %v3911
  %v3913 = vrot.slane %v3905, %v3912
  %v3915 = vunpack.c.l.s4 1983009808
  %v3916 = vunpack.c.0.s8 %v3915
  %v3917 = vlaneseq
  %v3918 = vshrl.u32 %v3917, 7
  %v3919 = vsub.s32 %v3916, %v3918
  %v3920 = vrot.slane %v3906, %v3919
  %v3921 = vcombine.low %v3913, %v3920
  %v3923 = vadd.f32 %v3817, %v3921
  %v3924 = vxor.u32 %v3923, 2147483648
  %v3925 = vmul.f32 %v3924, 1.442695
  %v3926 = vpow.pop %v3925
  %v3927 = vadd.f32 %v3926, 1.0
  %v3928 = vrcp.pop %v3927
  %v3929 = vmul.f32 1.0, %v3928
  %v3931 = vrot.slane %v3923, 2
  %v3933 = vxor.u32 %v3931, 2147483648
  %v3934 = vmul.f32 %v3933, 1.442695
  %v3935 = vpow.pop %v3934
  %v3936 = vadd.f32 %v3935, 1.0
  %v3937 = vrcp.pop %v3936
  %v3938 = vmul.f32 1.0, %v3937
  %v3939 = vrot.slane %v3923, 4
  %v3941 = vtanh.pop %v3939
  %v3942 = vrot.slane %v3923, 6
  %v3944 = vxor.u32 %v3942, 2147483648
  %v3945 = vmul.f32 %v3944, 1.442695
  %v3946 = vpow.pop %v3945
  %v3947 = vadd.f32 %v3946, 1.0
  %v3948 = vrcp.pop %v3947
  %v3949 = vmul.f32 1.0, %v3948
  %v3950 = vmul.f32 %v3938, %v3812
  %v3951 = vmul.f32 %v3929, %v3941
  %v3952 = vadd.f32 %v3950, %v3951
  %v3953 = vtanh.pop %v3952
  %v3954 = vmul.f32 %v3949, %v3953
  %3955 = vst [vmem:[%s1961] sm:$0x3] %v3954
  %3956 = vst [vmem:[#allocation4] sm:$0x3] %v3954
  %v3957 = vld [vmem:[#allocation4] sm:$0x3]
  %v3958 = vld [vmem:[#allocation4 + $0x2] sm:$0x3]
  %v3959 = vld [vmem:[#allocation4 + $0x4] sm:$0x3]
  %v3960 = vld [vmem:[#allocation4 + $0x6] sm:$0x3]
  %v3961 = vld [vmem:[#allocation4 + $0x8] sm:$0x3]
  %v3962 = vld [vmem:[#allocation4 + $0xa] sm:$0x3]
  %v3963 = vld [vmem:[#allocation4 + $0xc] sm:$0x3]
  %v3964 = vld [vmem:[#allocation4 + $0xe] sm:$0x3]
  %v3965 = vld [vmem:[#allocation3] sm:$0x3]
  %v3966 = vld [vmem:[#allocation3 + $0x2] sm:$0x3]
  %v3967 = vld [vmem:[#allocation3 + $0x4] sm:$0x3]
  %v3968 = vld [vmem:[#allocation3 + $0x6] sm:$0x3]
  %v3969 = vld [vmem:[#allocation3 + $0x8] sm:$0x3]
  %v3970 = vld [vmem:[#allocation3 + $0xa] sm:$0x3]
  %v3971 = vld [vmem:[#allocation3 + $0xc] sm:$0x3]
  %v3972 = vld [vmem:[#allocation3 + $0xe] sm:$0x3]
  %v3973 = vsel %vm55, %v3957, %v3965
  %v3974 = vsel %vm55, %v3958, %v3966
  %v3975 = vsel %vm55, %v3959, %v3967
  %v3976 = vsel %vm55, %v3960, %v3968
  %v3977 = vsel %vm55, %v3961, %v3969
  %v3978 = vsel %vm55, %v3962, %v3970
  %v3979 = vsel %vm55, %v3963, %v3971
  %v3980 = vsel %vm55, %v3964, %v3972
  %v3981 = vld [vmem:[%s10] sm:$0xff]
  %v3982 = vld [vmem:[%s10 + $0x8] sm:$0xff]
  %v3983 = vld [vmem:[%s10 + $0x10] sm:$0xff]
  %v3984 = vld [vmem:[%s10 + $0x18] sm:$0xff]
  %v3985 = vld [vmem:[%s10 + $0x20] sm:$0xff]
  %v3986 = vld [vmem:[%s10 + $0x28] sm:$0xff]
  %v3987 = vld [vmem:[%s10 + $0x30] sm:$0xff]
  %v3988 = vld [vmem:[%s10 + $0x38] sm:$0xff]
  %v3989 = vld [vmem:[%s10 + $0x40] sm:$0xff]
  %v3990 = vld [vmem:[%s10 + $0x48] sm:$0xff]
  %v3991 = vld [vmem:[%s10 + $0x50] sm:$0xff]
  %v3992 = vld [vmem:[%s10 + $0x58] sm:$0xff]
  %v3993 = vld [vmem:[%s10 + $0x60] sm:$0xff]
  %v3994 = vld [vmem:[%s10 + $0x68] sm:$0xff]
  %v3995 = vld [vmem:[%s10 + $0x70] sm:$0xff]
  %v3996 = vld [vmem:[%s10 + $0x78] sm:$0xff]
  %v3997 = vld [vmem:[%s11] sm:$0x1]
  %v3999 = vlaneseq
  %v4000 = vshrl.u32 %v3999, 7
  %v4001 = vsub.s32 0, %v4000
  %v4002 = vrot.slane %v3997, %v4001
  %v4012 = vcombine.low %v3973, %v3974
  %v4013 = vcombine.low %v3975, %v3976
  %v4015 = vunpack.c.l.s4 1983009808
  %v4016 = vunpack.c.0.s8 %v4015
  %v4017 = vlaneseq
  %v4018 = vshrl.u32 %v4017, 7
  %v4019 = vsub.s32 %v4016, %v4018
  %v4020 = vrot.slane %v4012, %v4019
  %v4022 = vunpack.c.l.s4 1983009808
  %v4023 = vunpack.c.0.s8 %v4022
  %v4024 = vlaneseq
  %v4025 = vshrl.u32 %v4024, 7
  %v4026 = vsub.s32 %v4023, %v4025
  %v4027 = vrot.slane %v4013, %v4026
  %v4028 = vcombine.low %v4020, %v4027
  %v4029 = vcombine.low %v3977, %v3978
  %v4030 = vcombine.low %v3979, %v3980
  %v4032 = vunpack.c.l.s4 1983009808
  %v4033 = vunpack.c.0.s8 %v4032
  %v4034 = vlaneseq
  %v4035 = vshrl.u32 %v4034, 7
  %v4036 = vsub.s32 %v4033, %v4035
  %v4037 = vrot.slane %v4029, %v4036
  %v4039 = vunpack.c.l.s4 1983009808
  %v4040 = vunpack.c.0.s8 %v4039
  %v4041 = vlaneseq
  %v4042 = vshrl.u32 %v4041, 7
  %v4043 = vsub.s32 %v4040, %v4042
  %v4044 = vrot.slane %v4030, %v4043
  %v4045 = vcombine.low %v4037, %v4044
  %4048 = vmatprep.subr.mxu0 0.0
  %4049 = vmatpush1.msra.mxu0 %v3981
  %4050 = vmatprep.subr.mxu0 0.0
  %4051 = vmatpush1.msra.mxu0 %v3982
  %4052 = vmatprep.subr.mxu0 0.0
  %4053 = vmatpush1.msra.mxu0 %v3983
  %4054 = vmatprep.subr.mxu0 0.0
  %4055 = vmatpush1.msra.mxu0 %v3984
  %4056 = vmatprep.subr.mxu0 0.0
  %4057 = vmatpush1.msra.mxu0 %v3985
  %4058 = vmatprep.subr.mxu0 0.0
  %4059 = vmatpush1.msra.mxu0 %v3986
  %4060 = vmatprep.subr.mxu0 0.0
  %4061 = vmatpush1.msra.mxu0 %v3987
  %4062 = vmatprep.subr.mxu0 0.0
  %4063 = vmatpush1.msra.mxu0 %v3988
  %4064 = vmatprep.subr.mxu0 0.0
  %4065 = vmatpush1.msra.mxu0 %v3989
  %4066 = vmatprep.subr.mxu0 0.0
  %4067 = vmatpush1.msra.mxu0 %v3990
  %4068 = vmatprep.subr.mxu0 0.0
  %4069 = vmatpush1.msra.mxu0 %v3991
  %4070 = vmatprep.subr.mxu0 0.0
  %4071 = vmatpush1.msra.mxu0 %v3992
  %4072 = vmatprep.subr.mxu0 0.0
  %4073 = vmatpush1.msra.mxu0 %v3993
  %4074 = vmatprep.subr.mxu0 0.0
  %4075 = vmatpush1.msra.mxu0 %v3994
  %4076 = vmatprep.subr.mxu0 0.0
  %4077 = vmatpush1.msra.mxu0 %v3995
  %4078 = vmatprep.subr.mxu0 0.0
  %4079 = vmatpush1.msra.mxu0 %v3996
  %4080 = vmatprep.subr.mxu0 0.0
  %4081 = vmatpush1.msra.mxu0 0.0
  %4082 = vmatprep.subr.mxu0 0.0
  %4083 = vmatpush1.msra.mxu0 0.0
  %4084 = vmatprep.subr.mxu0 0.0
  %4085 = vmatpush1.msra.mxu0 0.0
  %4086 = vmatprep.subr.mxu0 0.0
  %4087 = vmatpush1.msra.mxu0 0.0
  %4088 = vmatprep.subr.mxu0 0.0
  %4089 = vmatpush1.msra.mxu0 0.0
  %4090 = vmatprep.subr.mxu0 0.0
  %4091 = vmatpush1.msra.mxu0 0.0
  %4092 = vmatprep.subr.mxu0 0.0
  %4093 = vmatpush1.msra.mxu0 0.0
  %4094 = vmatprep.subr.mxu0 0.0
  %4095 = vmatpush1.msra.mxu0 0.0
  %4096 = vmatprep.subr.mxu0 0.0
  %4097 = vmatpush1.msra.mxu0 0.0
  %4098 = vmatprep.subr.mxu0 0.0
  %4099 = vmatpush1.msra.mxu0 0.0
  %4100 = vmatprep.subr.mxu0 0.0
  %4101 = vmatpush1.msra.mxu0 0.0
  %4102 = vmatprep.subr.mxu0 0.0
  %4103 = vmatpush1.msra.mxu0 0.0
  %4104 = vmatprep.subr.mxu0 0.0
  %4105 = vmatpush1.msra.mxu0 0.0
  %4106 = vmatprep.subr.mxu0 0.0
  %4107 = vmatpush1.msra.mxu0 0.0
  %4108 = vmatprep.subr.mxu0 0.0
  %4109 = vmatpush1.msra.mxu0 0.0
  %4110 = vmatprep.subr.mxu0 0.0
  %4111 = vmatpush1.msra.mxu0 0.0
  %4112 = vmatprep.mubr.f32.mxu0 0.0
  %4113 = vmatmul.mubr.f32.gmra.mrb[0].mxu0 %v4028
  %v4114 = vpop.f32.mrb[0].mxu0
  %v4115 = vadd.f32 %v4002, %v4114
  %v4116 = vpop.f32.mrb[0].mxu0
  %4117 = vmatprep.mubr.f32.mxu0 0.0
  %4118 = vmatmul.mubr.f32.gmra.mrb[0].mxu0 %v4045
  %v4119 = vpop.f32.mrb[0].mxu0
  %v4120 = vadd.f32 %v4002, %v4119
  %v4121 = vpop.f32.mrb[0].mxu0
  %4122 = vdwg.mxu0
  %v4123 = vtanh.pop %v4115
  %v4124 = vtanh.pop %v4120
  %v4127 = vcombine.high %v4123, %v4123
  %v4129 = vunpack.c.l.s4 1983009808
  %v4130 = vunpack.c.0.s8 %v4129
  %v4131 = vlaneseq
  %v4132 = vshrl.u32 %v4131, 7
  %v4133 = vsub.s32 %v4130, %v4132
  %v4134 = vrot.slane %v4123, %v4133
  %v4136 = vunpack.c.l.s4 1983009808
  %v4137 = vunpack.c.0.s8 %v4136
  %v4138 = vlaneseq
  %v4139 = vshrl.u32 %v4138, 7
  %v4140 = vsub.s32 %v4137, %v4139
  %v4141 = vrot.slane %v4127, %v4140
  %v4142 = vcombine.high %v4134, %v4134
  %v4143 = vcombine.high %v4141, %v4141
  %v4144 = vcombine.high %v4124, %v4124
  %v4146 = vunpack.c.l.s4 1983009808
  %v4147 = vunpack.c.0.s8 %v4146
  %v4148 = vlaneseq
  %v4149 = vshrl.u32 %v4148, 7
  %v4150 = vsub.s32 %v4147, %v4149
  %v4151 = vrot.slane %v4124, %v4150
  %v4153 = vunpack.c.l.s4 1983009808
  %v4154 = vunpack.c.0.s8 %v4153
  %v4155 = vlaneseq
  %v4156 = vshrl.u32 %v4155, 7
  %v4157 = vsub.s32 %v4154, %v4156
  %v4158 = vrot.slane %v4144, %v4157
  %v4159 = vcombine.high %v4151, %v4151
  %v4160 = vcombine.high %v4158, %v4158
  %v4169 = vld [vmem:[%s12] sm:$0x1]
  %v4171 = vlaneseq
  %v4172 = vshrl.u32 %v4171, 7
  %v4173 = vsub.s32 0, %v4172
  %v4174 = vrot.slane %v4169, %v4173
  %v4176 = vmul.f32 %v4134, %v4174
  %v4177 = vmul.f32 %v4142, %v4174
  %v4178 = vmul.f32 %v4141, %v4174
  %v4179 = vmul.f32 %v4143, %v4174
  %v4180 = vmul.f32 %v4151, %v4174
  %v4181 = vmul.f32 %v4159, %v4174
  %v4182 = vmul.f32 %v4158, %v4174
  %v4183 = vmul.f32 %v4160, %v4174
  %vm4184 = vcmask 517120
  %v4185 = vsel %vm4184, %v4176, 0.0
  %4186 = vadd.xlane.f32.xlu0 %v4185
  %v4187 = vpop.xlane.xlu0 %4186
  %v4188 = vsel %vm4184, %v4177, 0.0
  %4189 = vadd.xlane.f32.xlu0 %v4188
  %v4190 = vpop.xlane.xlu0 %4189
  %v4191 = vsel %vm4184, %v4178, 0.0
  %4192 = vadd.xlane.f32.xlu0 %v4191
  %v4193 = vpop.xlane.xlu0 %4192
  %v4194 = vsel %vm4184, %v4179, 0.0
  %4195 = vadd.xlane.f32.xlu0 %v4194
  %v4196 = vpop.xlane.xlu0 %4195
  %v4197 = vsel %vm4184, %v4180, 0.0
  %4198 = vadd.xlane.f32.xlu0 %v4197
  %v4199 = vpop.xlane.xlu0 %4198
  %v4200 = vsel %vm4184, %v4181, 0.0
  %4201 = vadd.xlane.f32.xlu0 %v4200
  %v4202 = vpop.xlane.xlu0 %4201
  %v4203 = vsel %vm4184, %v4182, 0.0
  %4204 = vadd.xlane.f32.xlu0 %v4203
  %v4205 = vpop.xlane.xlu0 %4204
  %v4206 = vsel %vm4184, %v4183, 0.0
  %4207 = vadd.xlane.f32.xlu0 %v4206
  %v4208 = vpop.xlane.xlu0 %4207
  %vm4209 = vcmask 1041408
  %v4210 = vsel %vm4209, %v4187, -inf
  %v4211 = vsel %vm4209, %v4190, -inf
  %v4212 = vsel %vm4209, %v4193, -inf
  %v4213 = vsel %vm4209, %v4196, -inf
  %v4214 = vsel %vm4209, %v4199, -inf
  %v4215 = vmax.f32 %v4210, %v4214
  %v4216 = vsel %vm4209, %v4202, -inf
  %v4217 = vmax.f32 %v4211, %v4216
  %v4218 = vsel %vm4209, %v4205, -inf
  %v4219 = vmax.f32 %v4212, %v4218
  %v4220 = vsel %vm4209, %v4208, -inf
  %v4221 = vmax.f32 %v4213, %v4220
  %v4222 = vmax.f32 %v4215, %v4217
  %v4223 = vmax.f32 %v4219, %v4221
  %v4224 = vmax.f32 %v4222, %v4223
  %v4225 = vsub.f32 %v4187, %v4224
  %v4226 = vsub.f32 %v4190, %v4224
  %v4227 = vsub.f32 %v4193, %v4224
  %v4228 = vsub.f32 %v4196, %v4224
  %v4229 = vsub.f32 %v4199, %v4224
  %v4230 = vsub.f32 %v4202, %v4224
  %v4231 = vsub.f32 %v4205, %v4224
  %v4232 = vsub.f32 %v4208, %v4224
  %v4233 = vmul.f32 %v4225, 1.442695
  %v4234 = vpow.pop %v4233
  %v4235 = vmul.f32 %v4226, 1.442695
  %v4236 = vpow.pop %v4235
  %v4237 = vmul.f32 %v4227, 1.442695
  %v4238 = vpow.pop %v4237
  %v4239 = vmul.f32 %v4228, 1.442695
  %v4240 = vpow.pop %v4239
  %v4241 = vmul.f32 %v4229, 1.442695
  %v4242 = vpow.pop %v4241
  %v4243 = vmul.f32 %v4230, 1.442695
  %v4244 = vpow.pop %v4243
  %v4245 = vmul.f32 %v4231, 1.442695
  %v4246 = vpow.pop %v4245
  %v4247 = vmul.f32 %v4232, 1.442695
  %v4248 = vpow.pop %v4247
  %v4249 = vsel %vm4209, %v4234, 0.0
  %v4250 = vsel %vm4209, %v4236, 0.0
  %v4251 = vadd.f32 %v4249, %v4250
  %v4252 = vsel %vm4209, %v4238, 0.0
  %v4253 = vadd.f32 %v4251, %v4252
  %v4254 = vsel %vm4209, %v4240, 0.0
  %v4255 = vadd.f32 %v4253, %v4254
  %v4256 = vsel %vm4209, %v4242, 0.0
  %v4257 = vadd.f32 %v4255, %v4256
  %v4258 = vsel %vm4209, %v4244, 0.0
  %v4259 = vadd.f32 %v4257, %v4258
  %v4260 = vsel %vm4209, %v4246, 0.0
  %v4261 = vadd.f32 %v4259, %v4260
  %v4262 = vsel %vm4209, %v4248, 0.0
  %v4263 = vadd.f32 %v4261, %v4262
  %v4264 = vrcp.pop %v4263
  %v4265 = vmul.f32 %v4234, %v4264
  %v4266 = vmul.f32 %v4236, %v4264
  %v4267 = vmul.f32 %v4238, %v4264
  %v4268 = vmul.f32 %v4240, %v4264
  %v4269 = vmul.f32 %v4242, %v4264
  %v4270 = vmul.f32 %v4244, %v4264
  %v4271 = vmul.f32 %v4246, %v4264
  %v4272 = vmul.f32 %v4248, %v4264
  %v4273 = vmul.f32 %v4265, %v3973
  %v4274 = vmul.f32 %v4266, %v3974
  %v4275 = vmul.f32 %v4267, %v3975
  %v4276 = vmul.f32 %v4268, %v3976
  %v4277 = vmul.f32 %v4269, %v3977
  %v4278 = vmul.f32 %v4270, %v3978
  %v4279 = vmul.f32 %v4271, %v3979
  %v4280 = vmul.f32 %v4272, %v3980
  %v4281 = vsel %vm4209, %v4273, 0.0
  %v4282 = vsel %vm4209, %v4274, 0.0
  %v4283 = vadd.f32 %v4281, %v4282
  %v4284 = vsel %vm4209, %v4275, 0.0
  %v4285 = vadd.f32 %v4283, %v4284
  %v4286 = vsel %vm4209, %v4276, 0.0
  %v4287 = vadd.f32 %v4285, %v4286
  %v4288 = vsel %vm4209, %v4277, 0.0
  %v4289 = vadd.f32 %v4287, %v4288
  %v4290 = vsel %vm4209, %v4278, 0.0
  %v4291 = vadd.f32 %v4289, %v4290
  %v4292 = vsel %vm4209, %v4279, 0.0
  %v4293 = vadd.f32 %v4291, %v4292
  %v4294 = vsel %vm4209, %v4280, 0.0
  %v4295 = vadd.f32 %v4293, %v4294
  %v4296 = vld [vmem:[%s13] sm:$0xff]
  %v4297 = vld [vmem:[%s13 + $0x8] sm:$0xff]
  %v4298 = vld [vmem:[%s13 + $0x10] sm:$0xff]
  %v4299 = vld [vmem:[%s13 + $0x18] sm:$0xff]
  %v4300 = vld [vmem:[%s13 + $0x20] sm:$0xff]
  %v4301 = vld [vmem:[%s13 + $0x28] sm:$0xff]
  %v4302 = vld [vmem:[%s13 + $0x30] sm:$0xff]
  %v4303 = vld [vmem:[%s13 + $0x38] sm:$0xff]
  %v4304 = vld [vmem:[%s13 + $0x40] sm:$0xff]
  %v4305 = vld [vmem:[%s13 + $0x48] sm:$0xff]
  %v4306 = vld [vmem:[%s13 + $0x50] sm:$0xff]
  %v4307 = vld [vmem:[%s13 + $0x58] sm:$0xff]
  %v4308 = vld [vmem:[%s13 + $0x60] sm:$0xff]
  %v4309 = vld [vmem:[%s13 + $0x68] sm:$0xff]
  %v4310 = vld [vmem:[%s13 + $0x70] sm:$0xff]
  %v4311 = vld [vmem:[%s13 + $0x78] sm:$0xff]
  %v4312 = vld [vmem:[#allocation5] sm:$0x1]
  %v4314 = vlaneseq
  %v4315 = vshrl.u32 %v4314, 7
  %v4316 = vsub.s32 0, %v4315
  %v4317 = vrot.slane %v4312, %v4316
  %4319 = vmatprep.subr.mxu0 0.0
  %4320 = vmatpush1.msra.mxu0 %v4296
  %4321 = vmatprep.subr.mxu0 0.0
  %4322 = vmatpush1.msra.mxu0 %v4297
  %4323 = vmatprep.subr.mxu0 0.0
  %4324 = vmatpush1.msra.mxu0 %v4298
  %4325 = vmatprep.subr.mxu0 0.0
  %4326 = vmatpush1.msra.mxu0 %v4299
  %4327 = vmatprep.subr.mxu0 0.0
  %4328 = vmatpush1.msra.mxu0 %v4300
  %4329 = vmatprep.subr.mxu0 0.0
  %4330 = vmatpush1.msra.mxu0 %v4301
  %4331 = vmatprep.subr.mxu0 0.0
  %4332 = vmatpush1.msra.mxu0 %v4302
  %4333 = vmatprep.subr.mxu0 0.0
  %4334 = vmatpush1.msra.mxu0 %v4303
  %4335 = vmatprep.subr.mxu0 0.0
  %4336 = vmatpush1.msra.mxu0 %v4304
  %4337 = vmatprep.subr.mxu0 0.0
  %4338 = vmatpush1.msra.mxu0 %v4305
  %4339 = vmatprep.subr.mxu0 0.0
  %4340 = vmatpush1.msra.mxu0 %v4306
  %4341 = vmatprep.subr.mxu0 0.0
  %4342 = vmatpush1.msra.mxu0 %v4307
  %4343 = vmatprep.subr.mxu0 0.0
  %4344 = vmatpush1.msra.mxu0 %v4308
  %4345 = vmatprep.subr.mxu0 0.0
  %4346 = vmatpush1.msra.mxu0 %v4309
  %4347 = vmatprep.subr.mxu0 0.0
  %4348 = vmatpush1.msra.mxu0 %v4310
  %4349 = vmatprep.subr.mxu0 0.0
  %4350 = vmatpush1.msra.mxu0 %v4311
  %4351 = vmatprep.subr.mxu0 0.0
  %4352 = vmatpush1.msra.mxu0 0.0
  %4353 = vmatprep.subr.mxu0 0.0
  %4354 = vmatpush1.msra.mxu0 0.0
  %4355 = vmatprep.subr.mxu0 0.0
  %4356 = vmatpush1.msra.mxu0 0.0
  %4357 = vmatprep.subr.mxu0 0.0
  %4358 = vmatpush1.msra.mxu0 0.0
  %4359 = vmatprep.subr.mxu0 0.0
  %4360 = vmatpush1.msra.mxu0 0.0
  %4361 = vmatprep.subr.mxu0 0.0
  %4362 = vmatpush1.msra.mxu0 0.0
  %4363 = vmatprep.subr.mxu0 0.0
  %4364 = vmatpush1.msra.mxu0 0.0
  %4365 = vmatprep.subr.mxu0 0.0
  %4366 = vmatpush1.msra.mxu0 0.0
  %4367 = vmatprep.subr.mxu0 0.0
  %4368 = vmatpush1.msra.mxu0 0.0
  %4369 = vmatprep.subr.mxu0 0.0
  %4370 = vmatpush1.msra.mxu0 0.0
  %4371 = vmatprep.subr.mxu0 0.0
  %4372 = vmatpush1.msra.mxu0 0.0
  %4373 = vmatprep.subr.mxu0 0.0
  %4374 = vmatpush1.msra.mxu0 0.0
  %4375 = vmatprep.subr.mxu0 0.0
  %4376 = vmatpush1.msra.mxu0 0.0
  %4377 = vmatprep.subr.mxu0 0.0
  %4378 = vmatpush1.msra.mxu0 0.0
  %4379 = vmatprep.subr.mxu0 0.0
  %4380 = vmatpush1.msra.mxu0 0.0
  %4381 = vmatprep.subr.mxu0 0.0
  %4382 = vmatpush1.msra.mxu0 0.0
  %4383 = vmatprep.mubr.f32.mxu0 0.0
  %4384 = vmatmul.mubr.f32.gmra.mrb[0].mxu0 %v4295
  %v4385 = vpop.f32.mrb[0].mxu0
  %v4386 = vadd.f32 %v4317, %v4385
  %v4387 = vpop.f32.mrb[0].mxu0
  %4388 = vdwg.mxu0
  %vm4389 = vcmask 1024
  %4390 = vst.msk [vmem:[%s15] sm:$0x3] %vm4389, %v4386
  // Predicated region
  $region62: #{stock_lstm_attention.1} parent=0 // pred_check
    _
  $region63: #{stock_lstm_attention.1} parent=0 // pred_check_branch
    %4392 = sbr.rel (0) target = $region65
  $region64: #{stock_lstm_attention.1} parent=0 // pred_region
    _
  $region65: #{stock_lstm_attention.1} parent=0 // pred_fallthru
    _
  // Predicated region
  $region66: #{stock_lstm_attention.1} parent=0 // pred_check
    _
  $region67: #{stock_lstm_attention.1} parent=0 // pred_check_branch
    %4394 = sbr.rel (0) target = $region69
  $region68: #{stock_lstm_attention.1} parent=0 // pred_region
    _
  $region69: #{stock_lstm_attention.1} parent=0 // pred_fallthru
    _

</llo_original>
